<compile_context>
chip_gen: v7x
topology: tpu7x:2x2x1
jax: 0.10.0
libtpu: 0.0.40
codegen_flags: <defaults>
</compile_context>

<pallas_src>
import math

import jax
import jax.numpy as jnp
from jax.experimental import pallas as pl
from jax.experimental.pallas import tpu as pltpu

# ---- synthetic small-BERT dims ----
B, S = 2, 8            # batch, sequence
H, NH = 32, 4          # hidden, num heads
DH = H // NH           # head dim
FF = 64                # intermediate (FFN) dim
VOCAB = 100
TYPE_VOCAB = 2
MAX_POS = 16
NUM_LAYERS = 2
NUM_LABELS = 3         # config['num_labels']
NUM_TAR = 5            # config['num_tar']
LN_EPS = 1e-12
HEAD_PAD = 128         # lane-dense padded classifier output width (>= max(NUM_LABELS, NUM_TAR))


def _gelu_tanh(x):
    # TODO(synk): HF BERT uses exact erf-GELU; tanh approximation used in-kernel.
    return 0.5 * x * (1.0 + jnp.tanh(0.7978845608028654 * (x + 0.044715 * x * x * x)))


# ---------------- fused Pallas kernel ----------------

def _bert_fused_kernel(
    task_ref,                        # SMEM [1] int32
    emb_ref, mask_ref,               # [B*S, H] f32, [B, S] f32 additive mask
    emb_g_ref, emb_b_ref,            # [1, H] f32
    w_qkv_ref, b_qkv_ref,            # [L, H, 3H] bf16, [L, 1, 3H] f32
    w_o_ref, b_o_ref,                # [L, H, H] bf16,  [L, 1, H] f32
    ln1_g_ref, ln1_b_ref,            # [L, 1, H] f32
    w1_ref, b1_ref,                  # [L, H, FF] bf16, [L, 1, FF] f32
    w2_ref, b2_ref,                  # [L, FF, H] bf16, [L, 1, H] f32
    ln2_g_ref, ln2_b_ref,            # [L, 1, H] f32
    w_lin_ref, b_lin_ref,            # [2, H, H] bf16,  [2, 1, H] f32
    w_out_ref, b_out_ref,            # [2, H, PAD] bf16,[2, 1, PAD] f32
    o_ref,                           # [B, PAD] f32
):
    f32 = jnp.float32
    bf16 = jnp.bfloat16
    scale = 1.0 / math.sqrt(DH)

    def mm(a, b):
        # bf16 operands on the MXU, f32 accumulation.
        return jnp.dot(a.astype(bf16), b.astype(bf16), preferred_element_type=f32)

    def mm_nt(a, b):
        # a @ b.T without materializing the transpose.
        return jax.lax.dot_general(a.astype(bf16), b.astype(bf16),
                                   (((1,), (1,)), ((), ())),
                                   preferred_element_type=f32)

    def layer_norm(x, g, bias):
        mu = jnp.mean(x, axis=-1, keepdims=True)
        var = jnp.mean(jnp.square(x - mu), axis=-1, keepdims=True)
        return (x - mu) * jax.lax.rsqrt(var + LN_EPS) * g + bias

    # ---- embedding LayerNorm ----
    h = layer_norm(emb_ref[...], emb_g_ref[...], emb_b_ref[...])        # [B*S, H] f32
    mask = mask_ref[...]                                                # [B, S]

    # ---- encoder layers: statically unrolled, hidden state resident in VMEM ----
    for l in range(NUM_LAYERS):
        # fused QKV projection: one [H, 3H] matmul instead of three
        qkv = mm(h, w_qkv_ref[l]) + b_qkv_ref[l]                        # [B*S, 3H]
        w_o = w_o_ref[l]                                                # [H, H] bf16

        attn_blocks = []
        for bi in range(B):
            rows = slice(bi * S, (bi + 1) * S)
            mrow = mask[bi:bi + 1, :]                                   # [1, S] (keys masked)
            acc = jnp.zeros((S, H), f32)
            for hd in range(NH):
                q = qkv[rows, hd * DH:(hd + 1) * DH]                    # [S, DH]
                k = qkv[rows, H + hd * DH:H + (hd + 1) * DH]
                v = qkv[rows, 2 * H + hd * DH:2 * H + (hd + 1) * DH]
                s = mm_nt(q, k) * scale + mrow                          # [S, S]
                s = s - jnp.max(s, axis=-1, keepdims=True)
                p = jnp.exp(s)
                p = p * pl.reciprocal(jnp.sum(p, axis=-1, keepdims=True), approx=True)
                ctx = mm(p, v)                                          # [S, DH]
                # output projection folded per head: sum_h ctx_h @ Wo[h*DH:(h+1)*DH]
                acc = acc + mm(ctx, w_o[hd * DH:(hd + 1) * DH, :])      # [S, H]
            attn_blocks.append(acc)
        attn = jnp.concatenate(attn_blocks, axis=0) + b_o_ref[l]        # [B*S, H]

        h = layer_norm(attn + h, ln1_g_ref[l], ln1_b_ref[l])
        inter = _gelu_tanh(mm(h, w1_ref[l]) + b1_ref[l])                # [B*S, FF]
        ffn = mm(inter, w2_ref[l]) + b2_ref[l]
        h = layer_norm(ffn + h, ln2_g_ref[l], ln2_b_ref[l])

    # ---- CLS rows (token 0 of each sequence): static, sublane-aligned slices ----
    cls = jnp.concatenate([h[bi * S:bi * S + 1, :] for bi in range(B)], axis=0)  # [B, H]

    # ---- task-selected classifier head (dropout p=0.0 == identity) ----
    # Select main/aux weights from the SMEM task-id scalar (jit/trace-safe).
    sel = (task_ref[0] == 0).astype(f32)                                # 1.0 -> main, 0.0 -> aux
    w_lin = sel * w_lin_ref[0].astype(f32) + (1.0 - sel) * w_lin_ref[1].astype(f32)
    b_lin = sel * b_lin_ref[0] + (1.0 - sel) * b_lin_ref[1]
    w_out = sel * w_out_ref[0].astype(f32) + (1.0 - sel) * w_out_ref[1].astype(f32)
    b_out = sel * b_out_ref[0] + (1.0 - sel) * b_out_ref[1]

    hidden = jnp.maximum(mm(cls, w_lin) + b_lin, 0.0)                   # relu(linear(cls))
    o_ref[...] = mm(hidden, w_out) + b_out                              # [B, PAD] lane-dense


# ---------------- parameters (deterministic synthetic init) ----------------

def init_params(key):
    std = 0.02
    f32, bf16 = jnp.float32, jnp.bfloat16

    def dense(k, shape, dtype=f32):
        return (std * jax.random.normal(k, shape, dtype=f32)).astype(dtype)

    keys = jax.random.split(key, 10)

    w_out = jnp.zeros((2, H, HEAD_PAD), f32)
    w_out = w_out.at[0, :, :NUM_LABELS].set(dense(keys[8], (H, NUM_LABELS)))
    w_out = w_out.at[1, :, :NUM_TAR].set(dense(keys[9], (H, NUM_TAR)))

    return {
        "word_emb": dense(keys[0], (VOCAB, H)),
        "pos_emb": dense(keys[1], (MAX_POS, H)),
        "type_emb": dense(keys[2], (TYPE_VOCAB, H)),
        "emb_ln_g": jnp.ones((1, H), f32),
        "emb_ln_b": jnp.zeros((1, H), f32),
        # encoder weights stacked over layers; matmul weights stored in bf16
        "w_qkv": dense(keys[3], (NUM_LAYERS, H, 3 * H), bf16),
        "b_qkv": jnp.zeros((NUM_LAYERS, 1, 3 * H), f32),
        "w_o": dense(keys[4], (NUM_LAYERS, H, H), bf16),
        "b_o": jnp.zeros((NUM_LAYERS, 1, H), f32),
        "ln1_g": jnp.ones((NUM_LAYERS, 1, H), f32),
        "ln1_b": jnp.zeros((NUM_LAYERS, 1, H), f32),
        "w1": dense(keys[5], (NUM_LAYERS, H, FF), bf16),
        "b1": jnp.zeros((NUM_LAYERS, 1, FF), f32),
        "w2": dense(keys[6], (NUM_LAYERS, FF, H), bf16),
        "b2": jnp.zeros((NUM_LAYERS, 1, H), f32),
        "ln2_g": jnp.ones((NUM_LAYERS, 1, H), f32),
        "ln2_b": jnp.zeros((NUM_LAYERS, 1, H), f32),
        # classifier heads stacked over task id (0 = main, 1 = aux); output
        # projection zero-padded to HEAD_PAD columns for lane-dense stores.
        "w_lin": dense(keys[7], (2, H, H), bf16),
        "b_lin": jnp.zeros((2, 1, H), f32),
        "w_out": w_out.astype(bf16),
        "b_out": jnp.zeros((2, 1, HEAD_PAD), f32),
    }


# ---------------- forward ----------------

def bert_classifier_forward(params, x_input_ids, x_seg_ids, x_atten_masks, x_len, task_id):
    """Returns padded CLS logits [B, HEAD_PAD]; valid columns are [:NUM_LABELS]
    for task 0 and [:NUM_TAR] otherwise (head selection happens inside the kernel)."""
    del x_len  # unused by the torch forward as well

    pos_ids = jnp.arange(S, dtype=jnp.int32)
    emb = (params["word_emb"][x_input_ids]
           + params["pos_emb"][pos_ids][None, :, :]
           + params["type_emb"][x_seg_ids]).reshape(B * S, H).astype(jnp.float32)
    # HF-style additive attention mask over key positions, one row per batch.
    mask_add = (1.0 - x_atten_masks.astype(jnp.float32)) * -10000.0      # [B, S]
    task = task_id.astype(jnp.int32).reshape(1)

    smem = pl.BlockSpec(memory_space=pltpu.MemorySpace.SMEM)
    vmem = pl.BlockSpec(memory_space=pltpu.MemorySpace.VMEM)

    return pl.pallas_call(
        _bert_fused_kernel,
        out_shape=jax.ShapeDtypeStruct((B, HEAD_PAD), jnp.float32),
        in_specs=[smem] + [vmem] * 20,
        out_specs=pl.BlockSpec(memory_space=pltpu.MemorySpace.VMEM),
    )(task, emb, mask_add,
      params["emb_ln_g"], params["emb_ln_b"],
      params["w_qkv"], params["b_qkv"], params["w_o"], params["b_o"],
      params["ln1_g"], params["ln1_b"],
      params["w1"], params["b1"], params["w2"], params["b2"],
      params["ln2_g"], params["ln2_b"],
      params["w_lin"], params["b_lin"], params["w_out"], params["b_out"])


if __name__ == "__main__":
    key = jax.random.PRNGKey(0)
    pkey, ikey = jax.random.split(key, 2)
    params = init_params(pkey)

    x_input_ids = jax.random.randint(ikey, (B, S), 0, VOCAB, dtype=jnp.int32)
    x_seg_ids = jnp.zeros((B, S), jnp.int32)
    x_len = jnp.array([S, S - 3], jnp.int32)
    x_atten_masks = (jnp.arange(S)[None, :] < x_len[:, None]).astype(jnp.int32)
    task_id = jnp.array([0], jnp.int32)

    fwd = jax.jit(bert_classifier_forward)   # traces cleanly: head select is in-kernel
    padded = jax.block_until_ready(
        fwd(params, x_input_ids, x_seg_ids, x_atten_masks, x_len, task_id))

    # Static output width chosen outside any trace (task 0 -> num_labels).
    n_out = NUM_LABELS if int(task_id[0]) == 0 else NUM_TAR
    out = padded[:, :n_out]
    assert out.shape == (B, NUM_LABELS), out.shape
    assert bool(jnp.all(jnp.isfinite(out)))
    print("KERNEL_OK")
</pallas_src>

<mosaic_0001>
module attributes {stable_mosaic.version = 11 : i64} {
  func.func @_bert_fused_kernel(%arg0: memref<1xi32, #tpu.memory_space<smem>>, %arg1: memref<16x32xf32, #tpu.memory_space<vmem>>, %arg2: memref<2x8xf32, #tpu.memory_space<vmem>>, %arg3: memref<1x32xf32, #tpu.memory_space<vmem>>, %arg4: memref<1x32xf32, #tpu.memory_space<vmem>>, %arg5: memref<2x32x96xbf16, #tpu.memory_space<vmem>>, %arg6: memref<2x1x96xf32, #tpu.memory_space<vmem>>, %arg7: memref<2x32x32xbf16, #tpu.memory_space<vmem>>, %arg8: memref<2x1x32xf32, #tpu.memory_space<vmem>>, %arg9: memref<2x1x32xf32, #tpu.memory_space<vmem>>, %arg10: memref<2x1x32xf32, #tpu.memory_space<vmem>>, %arg11: memref<2x32x64xbf16, #tpu.memory_space<vmem>>, %arg12: memref<2x1x64xf32, #tpu.memory_space<vmem>>, %arg13: memref<2x64x32xbf16, #tpu.memory_space<vmem>>, %arg14: memref<2x1x32xf32, #tpu.memory_space<vmem>>, %arg15: memref<2x1x32xf32, #tpu.memory_space<vmem>>, %arg16: memref<2x1x32xf32, #tpu.memory_space<vmem>>, %arg17: memref<2x32x32xbf16, #tpu.memory_space<vmem>>, %arg18: memref<2x1x32xf32, #tpu.memory_space<vmem>>, %arg19: memref<2x32x128xbf16, #tpu.memory_space<vmem>>, %arg20: memref<2x1x128xf32, #tpu.memory_space<vmem>>, %arg21: memref<2x128xf32, #tpu.memory_space<vmem>>) attributes {dimension_semantics = [], scalar_prefetch = 0 : i64, scratch_operands = 0 : i64, tpu.core_type = #tpu.core_type<tc>} {
    %c0 = arith.constant 0 : index
    %c0_0 = arith.constant 0 : index
    %0 = vector.load %arg1[%c0, %c0_0] : memref<16x32xf32, #tpu.memory_space<vmem>>, vector<16x32xf32>
    %c0_1 = arith.constant 0 : index
    %c0_2 = arith.constant 0 : index
    %1 = vector.load %arg3[%c0_1, %c0_2] : memref<1x32xf32, #tpu.memory_space<vmem>>, vector<1x32xf32>
    %c0_3 = arith.constant 0 : index
    %c0_4 = arith.constant 0 : index
    %2 = vector.load %arg4[%c0_3, %c0_4] : memref<1x32xf32, #tpu.memory_space<vmem>>, vector<1x32xf32>
    %cst = arith.constant dense<0.000000e+00> : vector<16xf32>
    %3 = vector.multi_reduction <add>, %0, %cst [1] : vector<16x32xf32> to vector<16xf32>
    %4 = vector.shape_cast %3 : vector<16xf32> to vector<16x1xf32>
    %cst_5 = arith.constant 3.200000e+01 : f32
    %5 = vector.broadcast %cst_5 : f32 to vector<16x1xf32>
    %6 = arith.divf %4, %5 : vector<16x1xf32>
    %7 = vector.broadcast %6 : vector<16x1xf32> to vector<16x32xf32>
    %8 = arith.subf %0, %7 : vector<16x32xf32>
    %9 = arith.mulf %8, %8 : vector<16x32xf32>
    %cst_6 = arith.constant dense<0.000000e+00> : vector<16xf32>
    %10 = vector.multi_reduction <add>, %9, %cst_6 [1] : vector<16x32xf32> to vector<16xf32>
    %11 = vector.shape_cast %10 : vector<16xf32> to vector<16x1xf32>
    %cst_7 = arith.constant 3.200000e+01 : f32
    %12 = vector.broadcast %cst_7 : f32 to vector<16x1xf32>
    %13 = arith.divf %11, %12 : vector<16x1xf32>
    %14 = vector.broadcast %6 : vector<16x1xf32> to vector<16x32xf32>
    %15 = arith.subf %0, %14 : vector<16x32xf32>
    %cst_8 = arith.constant 9.99999996E-13 : f32
    %16 = vector.broadcast %cst_8 : f32 to vector<16x1xf32>
    %17 = arith.addf %13, %16 : vector<16x1xf32>
    %18 = math.rsqrt %17 : vector<16x1xf32>
    %19 = vector.broadcast %18 : vector<16x1xf32> to vector<16x32xf32>
    %20 = arith.mulf %15, %19 : vector<16x32xf32>
    %21 = vector.broadcast %1 : vector<1x32xf32> to vector<16x32xf32>
    %22 = arith.mulf %20, %21 : vector<16x32xf32>
    %23 = vector.broadcast %2 : vector<1x32xf32> to vector<16x32xf32>
    %24 = arith.addf %22, %23 : vector<16x32xf32>
    %c0_9 = arith.constant 0 : index
    %c0_10 = arith.constant 0 : index
    %25 = vector.load %arg2[%c0_9, %c0_10] : memref<2x8xf32, #tpu.memory_space<vmem>>, vector<2x8xf32>
    %c0_11 = arith.constant 0 : index
    %c0_12 = arith.constant 0 : index
    %c0_13 = arith.constant 0 : index
    %26 = vector.load %arg5[%c0_11, %c0_12, %c0_13] : memref<2x32x96xbf16, #tpu.memory_space<vmem>>, vector<1x32x96xbf16>
    %27 = vector.shape_cast %26 : vector<1x32x96xbf16> to vector<32x96xbf16>
    %28 = arith.truncf %24 : vector<16x32xf32> to vector<16x32xbf16>
    %cst_14 = arith.constant dense<0.000000e+00> : vector<16x96xf32>
    %29 = tpu.matmul %28, %27, %cst_14 {dimension_numbers = #tpu.dot_dimension_numbers<[1], [0], [0], [1], [0, 0, 1, 1], [], []>} : vector<16x32xbf16>, vector<32x96xbf16>, vector<16x96xf32> -> vector<16x96xf32>
    %c0_15 = arith.constant 0 : index
    %c0_16 = arith.constant 0 : index
    %c0_17 = arith.constant 0 : index
    %30 = vector.load %arg6[%c0_15, %c0_16, %c0_17] : memref<2x1x96xf32, #tpu.memory_space<vmem>>, vector<1x1x96xf32>
    %31 = vector.shape_cast %30 : vector<1x1x96xf32> to vector<1x96xf32>
    %32 = vector.broadcast %31 : vector<1x96xf32> to vector<16x96xf32>
    %33 = arith.addf %29, %32 : vector<16x96xf32>
    %c0_18 = arith.constant 0 : index
    %c0_19 = arith.constant 0 : index
    %c0_20 = arith.constant 0 : index
    %34 = vector.load %arg7[%c0_18, %c0_19, %c0_20] : memref<2x32x32xbf16, #tpu.memory_space<vmem>>, vector<1x32x32xbf16>
    %35 = vector.shape_cast %34 : vector<1x32x32xbf16> to vector<32x32xbf16>
    %36 = vector.extract_strided_slice %25 {offsets = [0, 0], sizes = [1, 8], strides = [1, 1]} : vector<2x8xf32> to vector<1x8xf32>
    %cst_21 = arith.constant 0.000000e+00 : f32
    %37 = vector.broadcast %cst_21 : f32 to vector<8x32xf32>
    %38 = vector.extract_strided_slice %33 {offsets = [0, 0], sizes = [8, 8], strides = [1, 1]} : vector<16x96xf32> to vector<8x8xf32>
    %39 = vector.extract_strided_slice %33 {offsets = [0, 32], sizes = [8, 8], strides = [1, 1]} : vector<16x96xf32> to vector<8x8xf32>
    %40 = vector.extract_strided_slice %33 {offsets = [0, 64], sizes = [8, 8], strides = [1, 1]} : vector<16x96xf32> to vector<8x8xf32>
    %41 = arith.truncf %38 : vector<8x8xf32> to vector<8x8xbf16>
    %42 = arith.truncf %39 : vector<8x8xf32> to vector<8x8xbf16>
    %cst_22 = arith.constant dense<0.000000e+00> : vector<8x8xf32>
    %43 = tpu.matmul %41, %42, %cst_22 {dimension_numbers = #tpu.dot_dimension_numbers<[1], [1], [0], [0], [0, 0, 1, 0], [], []>} : vector<8x8xbf16>, vector<8x8xbf16>, vector<8x8xf32> -> vector<8x8xf32>
    %cst_23 = arith.constant 0.353553385 : f32
    %44 = vector.broadcast %cst_23 : f32 to vector<8x8xf32>
    %45 = arith.mulf %43, %44 : vector<8x8xf32>
    %46 = vector.broadcast %36 : vector<1x8xf32> to vector<8x8xf32>
    %47 = arith.addf %45, %46 : vector<8x8xf32>
    %cst_24 = arith.constant dense<0xFF800000> : vector<8xf32>
    %48 = vector.multi_reduction <maximumf>, %47, %cst_24 [1] : vector<8x8xf32> to vector<8xf32>
    %49 = vector.shape_cast %48 : vector<8xf32> to vector<8x1xf32>
    %50 = vector.broadcast %49 : vector<8x1xf32> to vector<8x8xf32>
    %51 = arith.subf %47, %50 : vector<8x8xf32>
    %52 = math.exp %51 : vector<8x8xf32>
    %cst_25 = arith.constant dense<0.000000e+00> : vector<8xf32>
    %53 = vector.multi_reduction <add>, %52, %cst_25 [1] : vector<8x8xf32> to vector<8xf32>
    %54 = vector.shape_cast %53 : vector<8xf32> to vector<8x1xf32>
    %55 = tpu.reciprocal %54 {approx = true} : vector<8x1xf32> -> vector<8x1xf32>
    %56 = vector.broadcast %55 : vector<8x1xf32> to vector<8x8xf32>
    %57 = arith.mulf %52, %56 : vector<8x8xf32>
    %58 = arith.truncf %57 : vector<8x8xf32> to vector<8x8xbf16>
    %59 = arith.truncf %40 : vector<8x8xf32> to vector<8x8xbf16>
    %cst_26 = arith.constant dense<0.000000e+00> : vector<8x8xf32>
    %60 = tpu.matmul %58, %59, %cst_26 {dimension_numbers = #tpu.dot_dimension_numbers<[1], [0], [0], [1], [0, 0, 1, 1], [], []>} : vector<8x8xbf16>, vector<8x8xbf16>, vector<8x8xf32> -> vector<8x8xf32>
    %61 = vector.extract_strided_slice %35 {offsets = [0, 0], sizes = [8, 32], strides = [1, 1]} : vector<32x32xbf16> to vector<8x32xbf16>
    %62 = arith.truncf %60 : vector<8x8xf32> to vector<8x8xbf16>
    %cst_27 = arith.constant dense<0.000000e+00> : vector<8x32xf32>
    %63 = tpu.matmul %62, %61, %cst_27 {dimension_numbers = #tpu.dot_dimension_numbers<[1], [0], [0], [1], [0, 0, 1, 1], [], []>} : vector<8x8xbf16>, vector<8x32xbf16>, vector<8x32xf32> -> vector<8x32xf32>
    %64 = arith.addf %37, %63 : vector<8x32xf32>
    %65 = vector.extract_strided_slice %33 {offsets = [0, 8], sizes = [8, 8], strides = [1, 1]} : vector<16x96xf32> to vector<8x8xf32>
    %66 = vector.extract_strided_slice %33 {offsets = [0, 40], sizes = [8, 8], strides = [1, 1]} : vector<16x96xf32> to vector<8x8xf32>
    %67 = vector.extract_strided_slice %33 {offsets = [0, 72], sizes = [8, 8], strides = [1, 1]} : vector<16x96xf32> to vector<8x8xf32>
    %68 = arith.truncf %65 : vector<8x8xf32> to vector<8x8xbf16>
    %69 = arith.truncf %66 : vector<8x8xf32> to vector<8x8xbf16>
    %cst_28 = arith.constant dense<0.000000e+00> : vector<8x8xf32>
    %70 = tpu.matmul %68, %69, %cst_28 {dimension_numbers = #tpu.dot_dimension_numbers<[1], [1], [0], [0], [0, 0, 1, 0], [], []>} : vector<8x8xbf16>, vector<8x8xbf16>, vector<8x8xf32> -> vector<8x8xf32>
    %cst_29 = arith.constant 0.353553385 : f32
    %71 = vector.broadcast %cst_29 : f32 to vector<8x8xf32>
    %72 = arith.mulf %70, %71 : vector<8x8xf32>
    %73 = vector.broadcast %36 : vector<1x8xf32> to vector<8x8xf32>
    %74 = arith.addf %72, %73 : vector<8x8xf32>
    %cst_30 = arith.constant dense<0xFF800000> : vector<8xf32>
    %75 = vector.multi_reduction <maximumf>, %74, %cst_30 [1] : vector<8x8xf32> to vector<8xf32>
    %76 = vector.shape_cast %75 : vector<8xf32> to vector<8x1xf32>
    %77 = vector.broadcast %76 : vector<8x1xf32> to vector<8x8xf32>
    %78 = arith.subf %74, %77 : vector<8x8xf32>
    %79 = math.exp %78 : vector<8x8xf32>
    %cst_31 = arith.constant dense<0.000000e+00> : vector<8xf32>
    %80 = vector.multi_reduction <add>, %79, %cst_31 [1] : vector<8x8xf32> to vector<8xf32>
    %81 = vector.shape_cast %80 : vector<8xf32> to vector<8x1xf32>
    %82 = tpu.reciprocal %81 {approx = true} : vector<8x1xf32> -> vector<8x1xf32>
    %83 = vector.broadcast %82 : vector<8x1xf32> to vector<8x8xf32>
    %84 = arith.mulf %79, %83 : vector<8x8xf32>
    %85 = arith.truncf %84 : vector<8x8xf32> to vector<8x8xbf16>
    %86 = arith.truncf %67 : vector<8x8xf32> to vector<8x8xbf16>
    %cst_32 = arith.constant dense<0.000000e+00> : vector<8x8xf32>
    %87 = tpu.matmul %85, %86, %cst_32 {dimension_numbers = #tpu.dot_dimension_numbers<[1], [0], [0], [1], [0, 0, 1, 1], [], []>} : vector<8x8xbf16>, vector<8x8xbf16>, vector<8x8xf32> -> vector<8x8xf32>
    %88 = vector.extract_strided_slice %35 {offsets = [8, 0], sizes = [8, 32], strides = [1, 1]} : vector<32x32xbf16> to vector<8x32xbf16>
    %89 = arith.truncf %87 : vector<8x8xf32> to vector<8x8xbf16>
    %cst_33 = arith.constant dense<0.000000e+00> : vector<8x32xf32>
    %90 = tpu.matmul %89, %88, %cst_33 {dimension_numbers = #tpu.dot_dimension_numbers<[1], [0], [0], [1], [0, 0, 1, 1], [], []>} : vector<8x8xbf16>, vector<8x32xbf16>, vector<8x32xf32> -> vector<8x32xf32>
    %91 = arith.addf %64, %90 : vector<8x32xf32>
    %92 = vector.extract_strided_slice %33 {offsets = [0, 16], sizes = [8, 8], strides = [1, 1]} : vector<16x96xf32> to vector<8x8xf32>
    %93 = vector.extract_strided_slice %33 {offsets = [0, 48], sizes = [8, 8], strides = [1, 1]} : vector<16x96xf32> to vector<8x8xf32>
    %94 = vector.extract_strided_slice %33 {offsets = [0, 80], sizes = [8, 8], strides = [1, 1]} : vector<16x96xf32> to vector<8x8xf32>
    %95 = arith.truncf %92 : vector<8x8xf32> to vector<8x8xbf16>
    %96 = arith.truncf %93 : vector<8x8xf32> to vector<8x8xbf16>
    %cst_34 = arith.constant dense<0.000000e+00> : vector<8x8xf32>
    %97 = tpu.matmul %95, %96, %cst_34 {dimension_numbers = #tpu.dot_dimension_numbers<[1], [1], [0], [0], [0, 0, 1, 0], [], []>} : vector<8x8xbf16>, vector<8x8xbf16>, vector<8x8xf32> -> vector<8x8xf32>
    %cst_35 = arith.constant 0.353553385 : f32
    %98 = vector.broadcast %cst_35 : f32 to vector<8x8xf32>
    %99 = arith.mulf %97, %98 : vector<8x8xf32>
    %100 = vector.broadcast %36 : vector<1x8xf32> to vector<8x8xf32>
    %101 = arith.addf %99, %100 : vector<8x8xf32>
    %cst_36 = arith.constant dense<0xFF800000> : vector<8xf32>
    %102 = vector.multi_reduction <maximumf>, %101, %cst_36 [1] : vector<8x8xf32> to vector<8xf32>
    %103 = vector.shape_cast %102 : vector<8xf32> to vector<8x1xf32>
    %104 = vector.broadcast %103 : vector<8x1xf32> to vector<8x8xf32>
    %105 = arith.subf %101, %104 : vector<8x8xf32>
    %106 = math.exp %105 : vector<8x8xf32>
    %cst_37 = arith.constant dense<0.000000e+00> : vector<8xf32>
    %107 = vector.multi_reduction <add>, %106, %cst_37 [1] : vector<8x8xf32> to vector<8xf32>
    %108 = vector.shape_cast %107 : vector<8xf32> to vector<8x1xf32>
    %109 = tpu.reciprocal %108 {approx = true} : vector<8x1xf32> -> vector<8x1xf32>
    %110 = vector.broadcast %109 : vector<8x1xf32> to vector<8x8xf32>
    %111 = arith.mulf %106, %110 : vector<8x8xf32>
    %112 = arith.truncf %111 : vector<8x8xf32> to vector<8x8xbf16>
    %113 = arith.truncf %94 : vector<8x8xf32> to vector<8x8xbf16>
    %cst_38 = arith.constant dense<0.000000e+00> : vector<8x8xf32>
    %114 = tpu.matmul %112, %113, %cst_38 {dimension_numbers = #tpu.dot_dimension_numbers<[1], [0], [0], [1], [0, 0, 1, 1], [], []>} : vector<8x8xbf16>, vector<8x8xbf16>, vector<8x8xf32> -> vector<8x8xf32>
    %115 = vector.extract_strided_slice %35 {offsets = [16, 0], sizes = [8, 32], strides = [1, 1]} : vector<32x32xbf16> to vector<8x32xbf16>
    %116 = arith.truncf %114 : vector<8x8xf32> to vector<8x8xbf16>
    %cst_39 = arith.constant dense<0.000000e+00> : vector<8x32xf32>
    %117 = tpu.matmul %116, %115, %cst_39 {dimension_numbers = #tpu.dot_dimension_numbers<[1], [0], [0], [1], [0, 0, 1, 1], [], []>} : vector<8x8xbf16>, vector<8x32xbf16>, vector<8x32xf32> -> vector<8x32xf32>
    %118 = arith.addf %91, %117 : vector<8x32xf32>
    %119 = vector.extract_strided_slice %33 {offsets = [0, 24], sizes = [8, 8], strides = [1, 1]} : vector<16x96xf32> to vector<8x8xf32>
    %120 = vector.extract_strided_slice %33 {offsets = [0, 56], sizes = [8, 8], strides = [1, 1]} : vector<16x96xf32> to vector<8x8xf32>
    %121 = vector.extract_strided_slice %33 {offsets = [0, 88], sizes = [8, 8], strides = [1, 1]} : vector<16x96xf32> to vector<8x8xf32>
    %122 = arith.truncf %119 : vector<8x8xf32> to vector<8x8xbf16>
    %123 = arith.truncf %120 : vector<8x8xf32> to vector<8x8xbf16>
    %cst_40 = arith.constant dense<0.000000e+00> : vector<8x8xf32>
    %124 = tpu.matmul %122, %123, %cst_40 {dimension_numbers = #tpu.dot_dimension_numbers<[1], [1], [0], [0], [0, 0, 1, 0], [], []>} : vector<8x8xbf16>, vector<8x8xbf16>, vector<8x8xf32> -> vector<8x8xf32>
    %cst_41 = arith.constant 0.353553385 : f32
    %125 = vector.broadcast %cst_41 : f32 to vector<8x8xf32>
    %126 = arith.mulf %124, %125 : vector<8x8xf32>
    %127 = vector.broadcast %36 : vector<1x8xf32> to vector<8x8xf32>
    %128 = arith.addf %126, %127 : vector<8x8xf32>
    %cst_42 = arith.constant dense<0xFF800000> : vector<8xf32>
    %129 = vector.multi_reduction <maximumf>, %128, %cst_42 [1] : vector<8x8xf32> to vector<8xf32>
    %130 = vector.shape_cast %129 : vector<8xf32> to vector<8x1xf32>
    %131 = vector.broadcast %130 : vector<8x1xf32> to vector<8x8xf32>
    %132 = arith.subf %128, %131 : vector<8x8xf32>
    %133 = math.exp %132 : vector<8x8xf32>
    %cst_43 = arith.constant dense<0.000000e+00> : vector<8xf32>
    %134 = vector.multi_reduction <add>, %133, %cst_43 [1] : vector<8x8xf32> to vector<8xf32>
    %135 = vector.shape_cast %134 : vector<8xf32> to vector<8x1xf32>
    %136 = tpu.reciprocal %135 {approx = true} : vector<8x1xf32> -> vector<8x1xf32>
    %137 = vector.broadcast %136 : vector<8x1xf32> to vector<8x8xf32>
    %138 = arith.mulf %133, %137 : vector<8x8xf32>
    %139 = arith.truncf %138 : vector<8x8xf32> to vector<8x8xbf16>
    %140 = arith.truncf %121 : vector<8x8xf32> to vector<8x8xbf16>
    %cst_44 = arith.constant dense<0.000000e+00> : vector<8x8xf32>
    %141 = tpu.matmul %139, %140, %cst_44 {dimension_numbers = #tpu.dot_dimension_numbers<[1], [0], [0], [1], [0, 0, 1, 1], [], []>} : vector<8x8xbf16>, vector<8x8xbf16>, vector<8x8xf32> -> vector<8x8xf32>
    %142 = vector.extract_strided_slice %35 {offsets = [24, 0], sizes = [8, 32], strides = [1, 1]} : vector<32x32xbf16> to vector<8x32xbf16>
    %143 = arith.truncf %141 : vector<8x8xf32> to vector<8x8xbf16>
    %cst_45 = arith.constant dense<0.000000e+00> : vector<8x32xf32>
    %144 = tpu.matmul %143, %142, %cst_45 {dimension_numbers = #tpu.dot_dimension_numbers<[1], [0], [0], [1], [0, 0, 1, 1], [], []>} : vector<8x8xbf16>, vector<8x32xbf16>, vector<8x32xf32> -> vector<8x32xf32>
    %145 = arith.addf %118, %144 : vector<8x32xf32>
    %146 = vector.extract_strided_slice %25 {offsets = [1, 0], sizes = [1, 8], strides = [1, 1]} : vector<2x8xf32> to vector<1x8xf32>
    %cst_46 = arith.constant 0.000000e+00 : f32
    %147 = vector.broadcast %cst_46 : f32 to vector<8x32xf32>
    %148 = vector.extract_strided_slice %33 {offsets = [8, 0], sizes = [8, 8], strides = [1, 1]} : vector<16x96xf32> to vector<8x8xf32>
    %149 = vector.extract_strided_slice %33 {offsets = [8, 32], sizes = [8, 8], strides = [1, 1]} : vector<16x96xf32> to vector<8x8xf32>
    %150 = vector.extract_strided_slice %33 {offsets = [8, 64], sizes = [8, 8], strides = [1, 1]} : vector<16x96xf32> to vector<8x8xf32>
    %151 = arith.truncf %148 : vector<8x8xf32> to vector<8x8xbf16>
    %152 = arith.truncf %149 : vector<8x8xf32> to vector<8x8xbf16>
    %cst_47 = arith.constant dense<0.000000e+00> : vector<8x8xf32>
    %153 = tpu.matmul %151, %152, %cst_47 {dimension_numbers = #tpu.dot_dimension_numbers<[1], [1], [0], [0], [0, 0, 1, 0], [], []>} : vector<8x8xbf16>, vector<8x8xbf16>, vector<8x8xf32> -> vector<8x8xf32>
    %cst_48 = arith.constant 0.353553385 : f32
    %154 = vector.broadcast %cst_48 : f32 to vector<8x8xf32>
    %155 = arith.mulf %153, %154 : vector<8x8xf32>
    %156 = vector.broadcast %146 : vector<1x8xf32> to vector<8x8xf32>
    %157 = arith.addf %155, %156 : vector<8x8xf32>
    %cst_49 = arith.constant dense<0xFF800000> : vector<8xf32>
    %158 = vector.multi_reduction <maximumf>, %157, %cst_49 [1] : vector<8x8xf32> to vector<8xf32>
    %159 = vector.shape_cast %158 : vector<8xf32> to vector<8x1xf32>
    %160 = vector.broadcast %159 : vector<8x1xf32> to vector<8x8xf32>
    %161 = arith.subf %157, %160 : vector<8x8xf32>
    %162 = math.exp %161 : vector<8x8xf32>
    %cst_50 = arith.constant dense<0.000000e+00> : vector<8xf32>
    %163 = vector.multi_reduction <add>, %162, %cst_50 [1] : vector<8x8xf32> to vector<8xf32>
    %164 = vector.shape_cast %163 : vector<8xf32> to vector<8x1xf32>
    %165 = tpu.reciprocal %164 {approx = true} : vector<8x1xf32> -> vector<8x1xf32>
    %166 = vector.broadcast %165 : vector<8x1xf32> to vector<8x8xf32>
    %167 = arith.mulf %162, %166 : vector<8x8xf32>
    %168 = arith.truncf %167 : vector<8x8xf32> to vector<8x8xbf16>
    %169 = arith.truncf %150 : vector<8x8xf32> to vector<8x8xbf16>
    %cst_51 = arith.constant dense<0.000000e+00> : vector<8x8xf32>
    %170 = tpu.matmul %168, %169, %cst_51 {dimension_numbers = #tpu.dot_dimension_numbers<[1], [0], [0], [1], [0, 0, 1, 1], [], []>} : vector<8x8xbf16>, vector<8x8xbf16>, vector<8x8xf32> -> vector<8x8xf32>
    %171 = vector.extract_strided_slice %35 {offsets = [0, 0], sizes = [8, 32], strides = [1, 1]} : vector<32x32xbf16> to vector<8x32xbf16>
    %172 = arith.truncf %170 : vector<8x8xf32> to vector<8x8xbf16>
    %cst_52 = arith.constant dense<0.000000e+00> : vector<8x32xf32>
    %173 = tpu.matmul %172, %171, %cst_52 {dimension_numbers = #tpu.dot_dimension_numbers<[1], [0], [0], [1], [0, 0, 1, 1], [], []>} : vector<8x8xbf16>, vector<8x32xbf16>, vector<8x32xf32> -> vector<8x32xf32>
    %174 = arith.addf %147, %173 : vector<8x32xf32>
    %175 = vector.extract_strided_slice %33 {offsets = [8, 8], sizes = [8, 8], strides = [1, 1]} : vector<16x96xf32> to vector<8x8xf32>
    %176 = vector.extract_strided_slice %33 {offsets = [8, 40], sizes = [8, 8], strides = [1, 1]} : vector<16x96xf32> to vector<8x8xf32>
    %177 = vector.extract_strided_slice %33 {offsets = [8, 72], sizes = [8, 8], strides = [1, 1]} : vector<16x96xf32> to vector<8x8xf32>
    %178 = arith.truncf %175 : vector<8x8xf32> to vector<8x8xbf16>
    %179 = arith.truncf %176 : vector<8x8xf32> to vector<8x8xbf16>
    %cst_53 = arith.constant dense<0.000000e+00> : vector<8x8xf32>
    %180 = tpu.matmul %178, %179, %cst_53 {dimension_numbers = #tpu.dot_dimension_numbers<[1], [1], [0], [0], [0, 0, 1, 0], [], []>} : vector<8x8xbf16>, vector<8x8xbf16>, vector<8x8xf32> -> vector<8x8xf32>
    %cst_54 = arith.constant 0.353553385 : f32
    %181 = vector.broadcast %cst_54 : f32 to vector<8x8xf32>
    %182 = arith.mulf %180, %181 : vector<8x8xf32>
    %183 = vector.broadcast %146 : vector<1x8xf32> to vector<8x8xf32>
    %184 = arith.addf %182, %183 : vector<8x8xf32>
    %cst_55 = arith.constant dense<0xFF800000> : vector<8xf32>
    %185 = vector.multi_reduction <maximumf>, %184, %cst_55 [1] : vector<8x8xf32> to vector<8xf32>
    %186 = vector.shape_cast %185 : vector<8xf32> to vector<8x1xf32>
    %187 = vector.broadcast %186 : vector<8x1xf32> to vector<8x8xf32>
    %188 = arith.subf %184, %187 : vector<8x8xf32>
    %189 = math.exp %188 : vector<8x8xf32>
    %cst_56 = arith.constant dense<0.000000e+00> : vector<8xf32>
    %190 = vector.multi_reduction <add>, %189, %cst_56 [1] : vector<8x8xf32> to vector<8xf32>
    %191 = vector.shape_cast %190 : vector<8xf32> to vector<8x1xf32>
    %192 = tpu.reciprocal %191 {approx = true} : vector<8x1xf32> -> vector<8x1xf32>
    %193 = vector.broadcast %192 : vector<8x1xf32> to vector<8x8xf32>
    %194 = arith.mulf %189, %193 : vector<8x8xf32>
    %195 = arith.truncf %194 : vector<8x8xf32> to vector<8x8xbf16>
    %196 = arith.truncf %177 : vector<8x8xf32> to vector<8x8xbf16>
    %cst_57 = arith.constant dense<0.000000e+00> : vector<8x8xf32>
    %197 = tpu.matmul %195, %196, %cst_57 {dimension_numbers = #tpu.dot_dimension_numbers<[1], [0], [0], [1], [0, 0, 1, 1], [], []>} : vector<8x8xbf16>, vector<8x8xbf16>, vector<8x8xf32> -> vector<8x8xf32>
    %198 = vector.extract_strided_slice %35 {offsets = [8, 0], sizes = [8, 32], strides = [1, 1]} : vector<32x32xbf16> to vector<8x32xbf16>
    %199 = arith.truncf %197 : vector<8x8xf32> to vector<8x8xbf16>
    %cst_58 = arith.constant dense<0.000000e+00> : vector<8x32xf32>
    %200 = tpu.matmul %199, %198, %cst_58 {dimension_numbers = #tpu.dot_dimension_numbers<[1], [0], [0], [1], [0, 0, 1, 1], [], []>} : vector<8x8xbf16>, vector<8x32xbf16>, vector<8x32xf32> -> vector<8x32xf32>
    %201 = arith.addf %174, %200 : vector<8x32xf32>
    %202 = vector.extract_strided_slice %33 {offsets = [8, 16], sizes = [8, 8], strides = [1, 1]} : vector<16x96xf32> to vector<8x8xf32>
    %203 = vector.extract_strided_slice %33 {offsets = [8, 48], sizes = [8, 8], strides = [1, 1]} : vector<16x96xf32> to vector<8x8xf32>
    %204 = vector.extract_strided_slice %33 {offsets = [8, 80], sizes = [8, 8], strides = [1, 1]} : vector<16x96xf32> to vector<8x8xf32>
    %205 = arith.truncf %202 : vector<8x8xf32> to vector<8x8xbf16>
    %206 = arith.truncf %203 : vector<8x8xf32> to vector<8x8xbf16>
    %cst_59 = arith.constant dense<0.000000e+00> : vector<8x8xf32>
    %207 = tpu.matmul %205, %206, %cst_59 {dimension_numbers = #tpu.dot_dimension_numbers<[1], [1], [0], [0], [0, 0, 1, 0], [], []>} : vector<8x8xbf16>, vector<8x8xbf16>, vector<8x8xf32> -> vector<8x8xf32>
    %cst_60 = arith.constant 0.353553385 : f32
    %208 = vector.broadcast %cst_60 : f32 to vector<8x8xf32>
    %209 = arith.mulf %207, %208 : vector<8x8xf32>
    %210 = vector.broadcast %146 : vector<1x8xf32> to vector<8x8xf32>
    %211 = arith.addf %209, %210 : vector<8x8xf32>
    %cst_61 = arith.constant dense<0xFF800000> : vector<8xf32>
    %212 = vector.multi_reduction <maximumf>, %211, %cst_61 [1] : vector<8x8xf32> to vector<8xf32>
    %213 = vector.shape_cast %212 : vector<8xf32> to vector<8x1xf32>
    %214 = vector.broadcast %213 : vector<8x1xf32> to vector<8x8xf32>
    %215 = arith.subf %211, %214 : vector<8x8xf32>
    %216 = math.exp %215 : vector<8x8xf32>
    %cst_62 = arith.constant dense<0.000000e+00> : vector<8xf32>
    %217 = vector.multi_reduction <add>, %216, %cst_62 [1] : vector<8x8xf32> to vector<8xf32>
    %218 = vector.shape_cast %217 : vector<8xf32> to vector<8x1xf32>
    %219 = tpu.reciprocal %218 {approx = true} : vector<8x1xf32> -> vector<8x1xf32>
    %220 = vector.broadcast %219 : vector<8x1xf32> to vector<8x8xf32>
    %221 = arith.mulf %216, %220 : vector<8x8xf32>
    %222 = arith.truncf %221 : vector<8x8xf32> to vector<8x8xbf16>
    %223 = arith.truncf %204 : vector<8x8xf32> to vector<8x8xbf16>
    %cst_63 = arith.constant dense<0.000000e+00> : vector<8x8xf32>
    %224 = tpu.matmul %222, %223, %cst_63 {dimension_numbers = #tpu.dot_dimension_numbers<[1], [0], [0], [1], [0, 0, 1, 1], [], []>} : vector<8x8xbf16>, vector<8x8xbf16>, vector<8x8xf32> -> vector<8x8xf32>
    %225 = vector.extract_strided_slice %35 {offsets = [16, 0], sizes = [8, 32], strides = [1, 1]} : vector<32x32xbf16> to vector<8x32xbf16>
    %226 = arith.truncf %224 : vector<8x8xf32> to vector<8x8xbf16>
    %cst_64 = arith.constant dense<0.000000e+00> : vector<8x32xf32>
    %227 = tpu.matmul %226, %225, %cst_64 {dimension_numbers = #tpu.dot_dimension_numbers<[1], [0], [0], [1], [0, 0, 1, 1], [], []>} : vector<8x8xbf16>, vector<8x32xbf16>, vector<8x32xf32> -> vector<8x32xf32>
    %228 = arith.addf %201, %227 : vector<8x32xf32>
    %229 = vector.extract_strided_slice %33 {offsets = [8, 24], sizes = [8, 8], strides = [1, 1]} : vector<16x96xf32> to vector<8x8xf32>
    %230 = vector.extract_strided_slice %33 {offsets = [8, 56], sizes = [8, 8], strides = [1, 1]} : vector<16x96xf32> to vector<8x8xf32>
    %231 = vector.extract_strided_slice %33 {offsets = [8, 88], sizes = [8, 8], strides = [1, 1]} : vector<16x96xf32> to vector<8x8xf32>
    %232 = arith.truncf %229 : vector<8x8xf32> to vector<8x8xbf16>
    %233 = arith.truncf %230 : vector<8x8xf32> to vector<8x8xbf16>
    %cst_65 = arith.constant dense<0.000000e+00> : vector<8x8xf32>
    %234 = tpu.matmul %232, %233, %cst_65 {dimension_numbers = #tpu.dot_dimension_numbers<[1], [1], [0], [0], [0, 0, 1, 0], [], []>} : vector<8x8xbf16>, vector<8x8xbf16>, vector<8x8xf32> -> vector<8x8xf32>
    %cst_66 = arith.constant 0.353553385 : f32
    %235 = vector.broadcast %cst_66 : f32 to vector<8x8xf32>
    %236 = arith.mulf %234, %235 : vector<8x8xf32>
    %237 = vector.broadcast %146 : vector<1x8xf32> to vector<8x8xf32>
    %238 = arith.addf %236, %237 : vector<8x8xf32>
    %cst_67 = arith.constant dense<0xFF800000> : vector<8xf32>
    %239 = vector.multi_reduction <maximumf>, %238, %cst_67 [1] : vector<8x8xf32> to vector<8xf32>
    %240 = vector.shape_cast %239 : vector<8xf32> to vector<8x1xf32>
    %241 = vector.broadcast %240 : vector<8x1xf32> to vector<8x8xf32>
    %242 = arith.subf %238, %241 : vector<8x8xf32>
    %243 = math.exp %242 : vector<8x8xf32>
    %cst_68 = arith.constant dense<0.000000e+00> : vector<8xf32>
    %244 = vector.multi_reduction <add>, %243, %cst_68 [1] : vector<8x8xf32> to vector<8xf32>
    %245 = vector.shape_cast %244 : vector<8xf32> to vector<8x1xf32>
    %246 = tpu.reciprocal %245 {approx = true} : vector<8x1xf32> -> vector<8x1xf32>
    %247 = vector.broadcast %246 : vector<8x1xf32> to vector<8x8xf32>
    %248 = arith.mulf %243, %247 : vector<8x8xf32>
    %249 = arith.truncf %248 : vector<8x8xf32> to vector<8x8xbf16>
    %250 = arith.truncf %231 : vector<8x8xf32> to vector<8x8xbf16>
    %cst_69 = arith.constant dense<0.000000e+00> : vector<8x8xf32>
    %251 = tpu.matmul %249, %250, %cst_69 {dimension_numbers = #tpu.dot_dimension_numbers<[1], [0], [0], [1], [0, 0, 1, 1], [], []>} : vector<8x8xbf16>, vector<8x8xbf16>, vector<8x8xf32> -> vector<8x8xf32>
    %252 = vector.extract_strided_slice %35 {offsets = [24, 0], sizes = [8, 32], strides = [1, 1]} : vector<32x32xbf16> to vector<8x32xbf16>
    %253 = arith.truncf %251 : vector<8x8xf32> to vector<8x8xbf16>
    %cst_70 = arith.constant dense<0.000000e+00> : vector<8x32xf32>
    %254 = tpu.matmul %253, %252, %cst_70 {dimension_numbers = #tpu.dot_dimension_numbers<[1], [0], [0], [1], [0, 0, 1, 1], [], []>} : vector<8x8xbf16>, vector<8x32xbf16>, vector<8x32xf32> -> vector<8x32xf32>
    %255 = arith.addf %228, %254 : vector<8x32xf32>
    %256 = tpu.concatenate %145, %255 in 0 : vector<8x32xf32>, vector<8x32xf32> -> vector<16x32xf32>
    %c0_71 = arith.constant 0 : index
    %c0_72 = arith.constant 0 : index
    %c0_73 = arith.constant 0 : index
    %257 = vector.load %arg8[%c0_71, %c0_72, %c0_73] : memref<2x1x32xf32, #tpu.memory_space<vmem>>, vector<1x1x32xf32>
    %258 = vector.shape_cast %257 : vector<1x1x32xf32> to vector<1x32xf32>
    %259 = vector.broadcast %258 : vector<1x32xf32> to vector<16x32xf32>
    %260 = arith.addf %256, %259 : vector<16x32xf32>
    %261 = arith.addf %260, %24 : vector<16x32xf32>
    %c0_74 = arith.constant 0 : index
    %c0_75 = arith.constant 0 : index
    %c0_76 = arith.constant 0 : index
    %262 = vector.load %arg9[%c0_74, %c0_75, %c0_76] : memref<2x1x32xf32, #tpu.memory_space<vmem>>, vector<1x1x32xf32>
    %263 = vector.shape_cast %262 : vector<1x1x32xf32> to vector<1x32xf32>
    %c0_77 = arith.constant 0 : index
    %c0_78 = arith.constant 0 : index
    %c0_79 = arith.constant 0 : index
    %264 = vector.load %arg10[%c0_77, %c0_78, %c0_79] : memref<2x1x32xf32, #tpu.memory_space<vmem>>, vector<1x1x32xf32>
    %265 = vector.shape_cast %264 : vector<1x1x32xf32> to vector<1x32xf32>
    %cst_80 = arith.constant dense<0.000000e+00> : vector<16xf32>
    %266 = vector.multi_reduction <add>, %261, %cst_80 [1] : vector<16x32xf32> to vector<16xf32>
    %267 = vector.shape_cast %266 : vector<16xf32> to vector<16x1xf32>
    %cst_81 = arith.constant 3.200000e+01 : f32
    %268 = vector.broadcast %cst_81 : f32 to vector<16x1xf32>
    %269 = arith.divf %267, %268 : vector<16x1xf32>
    %270 = vector.broadcast %269 : vector<16x1xf32> to vector<16x32xf32>
    %271 = arith.subf %261, %270 : vector<16x32xf32>
    %272 = arith.mulf %271, %271 : vector<16x32xf32>
    %cst_82 = arith.constant dense<0.000000e+00> : vector<16xf32>
    %273 = vector.multi_reduction <add>, %272, %cst_82 [1] : vector<16x32xf32> to vector<16xf32>
    %274 = vector.shape_cast %273 : vector<16xf32> to vector<16x1xf32>
    %cst_83 = arith.constant 3.200000e+01 : f32
    %275 = vector.broadcast %cst_83 : f32 to vector<16x1xf32>
    %276 = arith.divf %274, %275 : vector<16x1xf32>
    %277 = vector.broadcast %269 : vector<16x1xf32> to vector<16x32xf32>
    %278 = arith.subf %261, %277 : vector<16x32xf32>
    %cst_84 = arith.constant 9.99999996E-13 : f32
    %279 = vector.broadcast %cst_84 : f32 to vector<16x1xf32>
    %280 = arith.addf %276, %279 : vector<16x1xf32>
    %281 = math.rsqrt %280 : vector<16x1xf32>
    %282 = vector.broadcast %281 : vector<16x1xf32> to vector<16x32xf32>
    %283 = arith.mulf %278, %282 : vector<16x32xf32>
    %284 = vector.broadcast %263 : vector<1x32xf32> to vector<16x32xf32>
    %285 = arith.mulf %283, %284 : vector<16x32xf32>
    %286 = vector.broadcast %265 : vector<1x32xf32> to vector<16x32xf32>
    %287 = arith.addf %285, %286 : vector<16x32xf32>
    %c0_85 = arith.constant 0 : index
    %c0_86 = arith.constant 0 : index
    %c0_87 = arith.constant 0 : index
    %288 = vector.load %arg11[%c0_85, %c0_86, %c0_87] : memref<2x32x64xbf16, #tpu.memory_space<vmem>>, vector<1x32x64xbf16>
    %289 = vector.shape_cast %288 : vector<1x32x64xbf16> to vector<32x64xbf16>
    %290 = arith.truncf %287 : vector<16x32xf32> to vector<16x32xbf16>
    %cst_88 = arith.constant dense<0.000000e+00> : vector<16x64xf32>
    %291 = tpu.matmul %290, %289, %cst_88 {dimension_numbers = #tpu.dot_dimension_numbers<[1], [0], [0], [1], [0, 0, 1, 1], [], []>} : vector<16x32xbf16>, vector<32x64xbf16>, vector<16x64xf32> -> vector<16x64xf32>
    %c0_89 = arith.constant 0 : index
    %c0_90 = arith.constant 0 : index
    %c0_91 = arith.constant 0 : index
    %292 = vector.load %arg12[%c0_89, %c0_90, %c0_91] : memref<2x1x64xf32, #tpu.memory_space<vmem>>, vector<1x1x64xf32>
    %293 = vector.shape_cast %292 : vector<1x1x64xf32> to vector<1x64xf32>
    %294 = vector.broadcast %293 : vector<1x64xf32> to vector<16x64xf32>
    %295 = arith.addf %291, %294 : vector<16x64xf32>
    %cst_92 = arith.constant 5.000000e-01 : f32
    %296 = vector.broadcast %cst_92 : f32 to vector<16x64xf32>
    %297 = arith.mulf %296, %295 : vector<16x64xf32>
    %cst_93 = arith.constant 4.471500e-02 : f32
    %298 = vector.broadcast %cst_93 : f32 to vector<16x64xf32>
    %299 = arith.mulf %298, %295 : vector<16x64xf32>
    %300 = arith.mulf %299, %295 : vector<16x64xf32>
    %301 = arith.mulf %300, %295 : vector<16x64xf32>
    %302 = arith.addf %295, %301 : vector<16x64xf32>
    %cst_94 = arith.constant 0.797884583 : f32
    %303 = vector.broadcast %cst_94 : f32 to vector<16x64xf32>
    %304 = arith.mulf %303, %302 : vector<16x64xf32>
    %305 = math.tanh %304 : vector<16x64xf32>
    %cst_95 = arith.constant 1.000000e+00 : f32
    %306 = vector.broadcast %cst_95 : f32 to vector<16x64xf32>
    %307 = arith.addf %306, %305 : vector<16x64xf32>
    %308 = arith.mulf %297, %307 : vector<16x64xf32>
    %c0_96 = arith.constant 0 : index
    %c0_97 = arith.constant 0 : index
    %c0_98 = arith.constant 0 : index
    %309 = vector.load %arg13[%c0_96, %c0_97, %c0_98] : memref<2x64x32xbf16, #tpu.memory_space<vmem>>, vector<1x64x32xbf16>
    %310 = vector.shape_cast %309 : vector<1x64x32xbf16> to vector<64x32xbf16>
    %311 = arith.truncf %308 : vector<16x64xf32> to vector<16x64xbf16>
    %cst_99 = arith.constant dense<0.000000e+00> : vector<16x32xf32>
    %312 = tpu.matmul %311, %310, %cst_99 {dimension_numbers = #tpu.dot_dimension_numbers<[1], [0], [0], [1], [0, 0, 1, 1], [], []>} : vector<16x64xbf16>, vector<64x32xbf16>, vector<16x32xf32> -> vector<16x32xf32>
    %c0_100 = arith.constant 0 : index
    %c0_101 = arith.constant 0 : index
    %c0_102 = arith.constant 0 : index
    %313 = vector.load %arg14[%c0_100, %c0_101, %c0_102] : memref<2x1x32xf32, #tpu.memory_space<vmem>>, vector<1x1x32xf32>
    %314 = vector.shape_cast %313 : vector<1x1x32xf32> to vector<1x32xf32>
    %315 = vector.broadcast %314 : vector<1x32xf32> to vector<16x32xf32>
    %316 = arith.addf %312, %315 : vector<16x32xf32>
    %317 = arith.addf %316, %287 : vector<16x32xf32>
    %c0_103 = arith.constant 0 : index
    %c0_104 = arith.constant 0 : index
    %c0_105 = arith.constant 0 : index
    %318 = vector.load %arg15[%c0_103, %c0_104, %c0_105] : memref<2x1x32xf32, #tpu.memory_space<vmem>>, vector<1x1x32xf32>
    %319 = vector.shape_cast %318 : vector<1x1x32xf32> to vector<1x32xf32>
    %c0_106 = arith.constant 0 : index
    %c0_107 = arith.constant 0 : index
    %c0_108 = arith.constant 0 : index
    %320 = vector.load %arg16[%c0_106, %c0_107, %c0_108] : memref<2x1x32xf32, #tpu.memory_space<vmem>>, vector<1x1x32xf32>
    %321 = vector.shape_cast %320 : vector<1x1x32xf32> to vector<1x32xf32>
    %cst_109 = arith.constant dense<0.000000e+00> : vector<16xf32>
    %322 = vector.multi_reduction <add>, %317, %cst_109 [1] : vector<16x32xf32> to vector<16xf32>
    %323 = vector.shape_cast %322 : vector<16xf32> to vector<16x1xf32>
    %cst_110 = arith.constant 3.200000e+01 : f32
    %324 = vector.broadcast %cst_110 : f32 to vector<16x1xf32>
    %325 = arith.divf %323, %324 : vector<16x1xf32>
    %326 = vector.broadcast %325 : vector<16x1xf32> to vector<16x32xf32>
    %327 = arith.subf %317, %326 : vector<16x32xf32>
    %328 = arith.mulf %327, %327 : vector<16x32xf32>
    %cst_111 = arith.constant dense<0.000000e+00> : vector<16xf32>
    %329 = vector.multi_reduction <add>, %328, %cst_111 [1] : vector<16x32xf32> to vector<16xf32>
    %330 = vector.shape_cast %329 : vector<16xf32> to vector<16x1xf32>
    %cst_112 = arith.constant 3.200000e+01 : f32
    %331 = vector.broadcast %cst_112 : f32 to vector<16x1xf32>
    %332 = arith.divf %330, %331 : vector<16x1xf32>
    %333 = vector.broadcast %325 : vector<16x1xf32> to vector<16x32xf32>
    %334 = arith.subf %317, %333 : vector<16x32xf32>
    %cst_113 = arith.constant 9.99999996E-13 : f32
    %335 = vector.broadcast %cst_113 : f32 to vector<16x1xf32>
    %336 = arith.addf %332, %335 : vector<16x1xf32>
    %337 = math.rsqrt %336 : vector<16x1xf32>
    %338 = vector.broadcast %337 : vector<16x1xf32> to vector<16x32xf32>
    %339 = arith.mulf %334, %338 : vector<16x32xf32>
    %340 = vector.broadcast %319 : vector<1x32xf32> to vector<16x32xf32>
    %341 = arith.mulf %339, %340 : vector<16x32xf32>
    %342 = vector.broadcast %321 : vector<1x32xf32> to vector<16x32xf32>
    %343 = arith.addf %341, %342 : vector<16x32xf32>
    %c1 = arith.constant 1 : index
    %c0_114 = arith.constant 0 : index
    %c0_115 = arith.constant 0 : index
    %344 = vector.load %arg5[%c1, %c0_114, %c0_115] : memref<2x32x96xbf16, #tpu.memory_space<vmem>>, vector<1x32x96xbf16>
    %345 = vector.shape_cast %344 : vector<1x32x96xbf16> to vector<32x96xbf16>
    %346 = arith.truncf %343 : vector<16x32xf32> to vector<16x32xbf16>
    %cst_116 = arith.constant dense<0.000000e+00> : vector<16x96xf32>
    %347 = tpu.matmul %346, %345, %cst_116 {dimension_numbers = #tpu.dot_dimension_numbers<[1], [0], [0], [1], [0, 0, 1, 1], [], []>} : vector<16x32xbf16>, vector<32x96xbf16>, vector<16x96xf32> -> vector<16x96xf32>
    %c1_117 = arith.constant 1 : index
    %c0_118 = arith.constant 0 : index
    %c0_119 = arith.constant 0 : index
    %348 = vector.load %arg6[%c1_117, %c0_118, %c0_119] : memref<2x1x96xf32, #tpu.memory_space<vmem>>, vector<1x1x96xf32>
    %349 = vector.shape_cast %348 : vector<1x1x96xf32> to vector<1x96xf32>
    %350 = vector.broadcast %349 : vector<1x96xf32> to vector<16x96xf32>
    %351 = arith.addf %347, %350 : vector<16x96xf32>
    %c1_120 = arith.constant 1 : index
    %c0_121 = arith.constant 0 : index
    %c0_122 = arith.constant 0 : index
    %352 = vector.load %arg7[%c1_120, %c0_121, %c0_122] : memref<2x32x32xbf16, #tpu.memory_space<vmem>>, vector<1x32x32xbf16>
    %353 = vector.shape_cast %352 : vector<1x32x32xbf16> to vector<32x32xbf16>
    %354 = vector.extract_strided_slice %25 {offsets = [0, 0], sizes = [1, 8], strides = [1, 1]} : vector<2x8xf32> to vector<1x8xf32>
    %cst_123 = arith.constant 0.000000e+00 : f32
    %355 = vector.broadcast %cst_123 : f32 to vector<8x32xf32>
    %356 = vector.extract_strided_slice %351 {offsets = [0, 0], sizes = [8, 8], strides = [1, 1]} : vector<16x96xf32> to vector<8x8xf32>
    %357 = vector.extract_strided_slice %351 {offsets = [0, 32], sizes = [8, 8], strides = [1, 1]} : vector<16x96xf32> to vector<8x8xf32>
    %358 = vector.extract_strided_slice %351 {offsets = [0, 64], sizes = [8, 8], strides = [1, 1]} : vector<16x96xf32> to vector<8x8xf32>
    %359 = arith.truncf %356 : vector<8x8xf32> to vector<8x8xbf16>
    %360 = arith.truncf %357 : vector<8x8xf32> to vector<8x8xbf16>
    %cst_124 = arith.constant dense<0.000000e+00> : vector<8x8xf32>
    %361 = tpu.matmul %359, %360, %cst_124 {dimension_numbers = #tpu.dot_dimension_numbers<[1], [1], [0], [0], [0, 0, 1, 0], [], []>} : vector<8x8xbf16>, vector<8x8xbf16>, vector<8x8xf32> -> vector<8x8xf32>
    %cst_125 = arith.constant 0.353553385 : f32
    %362 = vector.broadcast %cst_125 : f32 to vector<8x8xf32>
    %363 = arith.mulf %361, %362 : vector<8x8xf32>
    %364 = vector.broadcast %354 : vector<1x8xf32> to vector<8x8xf32>
    %365 = arith.addf %363, %364 : vector<8x8xf32>
    %cst_126 = arith.constant dense<0xFF800000> : vector<8xf32>
    %366 = vector.multi_reduction <maximumf>, %365, %cst_126 [1] : vector<8x8xf32> to vector<8xf32>
    %367 = vector.shape_cast %366 : vector<8xf32> to vector<8x1xf32>
    %368 = vector.broadcast %367 : vector<8x1xf32> to vector<8x8xf32>
    %369 = arith.subf %365, %368 : vector<8x8xf32>
    %370 = math.exp %369 : vector<8x8xf32>
    %cst_127 = arith.constant dense<0.000000e+00> : vector<8xf32>
    %371 = vector.multi_reduction <add>, %370, %cst_127 [1] : vector<8x8xf32> to vector<8xf32>
    %372 = vector.shape_cast %371 : vector<8xf32> to vector<8x1xf32>
    %373 = tpu.reciprocal %372 {approx = true} : vector<8x1xf32> -> vector<8x1xf32>
    %374 = vector.broadcast %373 : vector<8x1xf32> to vector<8x8xf32>
    %375 = arith.mulf %370, %374 : vector<8x8xf32>
    %376 = arith.truncf %375 : vector<8x8xf32> to vector<8x8xbf16>
    %377 = arith.truncf %358 : vector<8x8xf32> to vector<8x8xbf16>
    %cst_128 = arith.constant dense<0.000000e+00> : vector<8x8xf32>
    %378 = tpu.matmul %376, %377, %cst_128 {dimension_numbers = #tpu.dot_dimension_numbers<[1], [0], [0], [1], [0, 0, 1, 1], [], []>} : vector<8x8xbf16>, vector<8x8xbf16>, vector<8x8xf32> -> vector<8x8xf32>
    %379 = vector.extract_strided_slice %353 {offsets = [0, 0], sizes = [8, 32], strides = [1, 1]} : vector<32x32xbf16> to vector<8x32xbf16>
    %380 = arith.truncf %378 : vector<8x8xf32> to vector<8x8xbf16>
    %cst_129 = arith.constant dense<0.000000e+00> : vector<8x32xf32>
    %381 = tpu.matmul %380, %379, %cst_129 {dimension_numbers = #tpu.dot_dimension_numbers<[1], [0], [0], [1], [0, 0, 1, 1], [], []>} : vector<8x8xbf16>, vector<8x32xbf16>, vector<8x32xf32> -> vector<8x32xf32>
    %382 = arith.addf %355, %381 : vector<8x32xf32>
    %383 = vector.extract_strided_slice %351 {offsets = [0, 8], sizes = [8, 8], strides = [1, 1]} : vector<16x96xf32> to vector<8x8xf32>
    %384 = vector.extract_strided_slice %351 {offsets = [0, 40], sizes = [8, 8], strides = [1, 1]} : vector<16x96xf32> to vector<8x8xf32>
    %385 = vector.extract_strided_slice %351 {offsets = [0, 72], sizes = [8, 8], strides = [1, 1]} : vector<16x96xf32> to vector<8x8xf32>
    %386 = arith.truncf %383 : vector<8x8xf32> to vector<8x8xbf16>
    %387 = arith.truncf %384 : vector<8x8xf32> to vector<8x8xbf16>
    %cst_130 = arith.constant dense<0.000000e+00> : vector<8x8xf32>
    %388 = tpu.matmul %386, %387, %cst_130 {dimension_numbers = #tpu.dot_dimension_numbers<[1], [1], [0], [0], [0, 0, 1, 0], [], []>} : vector<8x8xbf16>, vector<8x8xbf16>, vector<8x8xf32> -> vector<8x8xf32>
    %cst_131 = arith.constant 0.353553385 : f32
    %389 = vector.broadcast %cst_131 : f32 to vector<8x8xf32>
    %390 = arith.mulf %388, %389 : vector<8x8xf32>
    %391 = vector.broadcast %354 : vector<1x8xf32> to vector<8x8xf32>
    %392 = arith.addf %390, %391 : vector<8x8xf32>
    %cst_132 = arith.constant dense<0xFF800000> : vector<8xf32>
    %393 = vector.multi_reduction <maximumf>, %392, %cst_132 [1] : vector<8x8xf32> to vector<8xf32>
    %394 = vector.shape_cast %393 : vector<8xf32> to vector<8x1xf32>
    %395 = vector.broadcast %394 : vector<8x1xf32> to vector<8x8xf32>
    %396 = arith.subf %392, %395 : vector<8x8xf32>
    %397 = math.exp %396 : vector<8x8xf32>
    %cst_133 = arith.constant dense<0.000000e+00> : vector<8xf32>
    %398 = vector.multi_reduction <add>, %397, %cst_133 [1] : vector<8x8xf32> to vector<8xf32>
    %399 = vector.shape_cast %398 : vector<8xf32> to vector<8x1xf32>
    %400 = tpu.reciprocal %399 {approx = true} : vector<8x1xf32> -> vector<8x1xf32>
    %401 = vector.broadcast %400 : vector<8x1xf32> to vector<8x8xf32>
    %402 = arith.mulf %397, %401 : vector<8x8xf32>
    %403 = arith.truncf %402 : vector<8x8xf32> to vector<8x8xbf16>
    %404 = arith.truncf %385 : vector<8x8xf32> to vector<8x8xbf16>
    %cst_134 = arith.constant dense<0.000000e+00> : vector<8x8xf32>
    %405 = tpu.matmul %403, %404, %cst_134 {dimension_numbers = #tpu.dot_dimension_numbers<[1], [0], [0], [1], [0, 0, 1, 1], [], []>} : vector<8x8xbf16>, vector<8x8xbf16>, vector<8x8xf32> -> vector<8x8xf32>
    %406 = vector.extract_strided_slice %353 {offsets = [8, 0], sizes = [8, 32], strides = [1, 1]} : vector<32x32xbf16> to vector<8x32xbf16>
    %407 = arith.truncf %405 : vector<8x8xf32> to vector<8x8xbf16>
    %cst_135 = arith.constant dense<0.000000e+00> : vector<8x32xf32>
    %408 = tpu.matmul %407, %406, %cst_135 {dimension_numbers = #tpu.dot_dimension_numbers<[1], [0], [0], [1], [0, 0, 1, 1], [], []>} : vector<8x8xbf16>, vector<8x32xbf16>, vector<8x32xf32> -> vector<8x32xf32>
    %409 = arith.addf %382, %408 : vector<8x32xf32>
    %410 = vector.extract_strided_slice %351 {offsets = [0, 16], sizes = [8, 8], strides = [1, 1]} : vector<16x96xf32> to vector<8x8xf32>
    %411 = vector.extract_strided_slice %351 {offsets = [0, 48], sizes = [8, 8], strides = [1, 1]} : vector<16x96xf32> to vector<8x8xf32>
    %412 = vector.extract_strided_slice %351 {offsets = [0, 80], sizes = [8, 8], strides = [1, 1]} : vector<16x96xf32> to vector<8x8xf32>
    %413 = arith.truncf %410 : vector<8x8xf32> to vector<8x8xbf16>
    %414 = arith.truncf %411 : vector<8x8xf32> to vector<8x8xbf16>
    %cst_136 = arith.constant dense<0.000000e+00> : vector<8x8xf32>
    %415 = tpu.matmul %413, %414, %cst_136 {dimension_numbers = #tpu.dot_dimension_numbers<[1], [1], [0], [0], [0, 0, 1, 0], [], []>} : vector<8x8xbf16>, vector<8x8xbf16>, vector<8x8xf32> -> vector<8x8xf32>
    %cst_137 = arith.constant 0.353553385 : f32
    %416 = vector.broadcast %cst_137 : f32 to vector<8x8xf32>
    %417 = arith.mulf %415, %416 : vector<8x8xf32>
    %418 = vector.broadcast %354 : vector<1x8xf32> to vector<8x8xf32>
    %419 = arith.addf %417, %418 : vector<8x8xf32>
    %cst_138 = arith.constant dense<0xFF800000> : vector<8xf32>
    %420 = vector.multi_reduction <maximumf>, %419, %cst_138 [1] : vector<8x8xf32> to vector<8xf32>
    %421 = vector.shape_cast %420 : vector<8xf32> to vector<8x1xf32>
    %422 = vector.broadcast %421 : vector<8x1xf32> to vector<8x8xf32>
    %423 = arith.subf %419, %422 : vector<8x8xf32>
    %424 = math.exp %423 : vector<8x8xf32>
    %cst_139 = arith.constant dense<0.000000e+00> : vector<8xf32>
    %425 = vector.multi_reduction <add>, %424, %cst_139 [1] : vector<8x8xf32> to vector<8xf32>
    %426 = vector.shape_cast %425 : vector<8xf32> to vector<8x1xf32>
    %427 = tpu.reciprocal %426 {approx = true} : vector<8x1xf32> -> vector<8x1xf32>
    %428 = vector.broadcast %427 : vector<8x1xf32> to vector<8x8xf32>
    %429 = arith.mulf %424, %428 : vector<8x8xf32>
    %430 = arith.truncf %429 : vector<8x8xf32> to vector<8x8xbf16>
    %431 = arith.truncf %412 : vector<8x8xf32> to vector<8x8xbf16>
    %cst_140 = arith.constant dense<0.000000e+00> : vector<8x8xf32>
    %432 = tpu.matmul %430, %431, %cst_140 {dimension_numbers = #tpu.dot_dimension_numbers<[1], [0], [0], [1], [0, 0, 1, 1], [], []>} : vector<8x8xbf16>, vector<8x8xbf16>, vector<8x8xf32> -> vector<8x8xf32>
    %433 = vector.extract_strided_slice %353 {offsets = [16, 0], sizes = [8, 32], strides = [1, 1]} : vector<32x32xbf16> to vector<8x32xbf16>
    %434 = arith.truncf %432 : vector<8x8xf32> to vector<8x8xbf16>
    %cst_141 = arith.constant dense<0.000000e+00> : vector<8x32xf32>
    %435 = tpu.matmul %434, %433, %cst_141 {dimension_numbers = #tpu.dot_dimension_numbers<[1], [0], [0], [1], [0, 0, 1, 1], [], []>} : vector<8x8xbf16>, vector<8x32xbf16>, vector<8x32xf32> -> vector<8x32xf32>
    %436 = arith.addf %409, %435 : vector<8x32xf32>
    %437 = vector.extract_strided_slice %351 {offsets = [0, 24], sizes = [8, 8], strides = [1, 1]} : vector<16x96xf32> to vector<8x8xf32>
    %438 = vector.extract_strided_slice %351 {offsets = [0, 56], sizes = [8, 8], strides = [1, 1]} : vector<16x96xf32> to vector<8x8xf32>
    %439 = vector.extract_strided_slice %351 {offsets = [0, 88], sizes = [8, 8], strides = [1, 1]} : vector<16x96xf32> to vector<8x8xf32>
    %440 = arith.truncf %437 : vector<8x8xf32> to vector<8x8xbf16>
    %441 = arith.truncf %438 : vector<8x8xf32> to vector<8x8xbf16>
    %cst_142 = arith.constant dense<0.000000e+00> : vector<8x8xf32>
    %442 = tpu.matmul %440, %441, %cst_142 {dimension_numbers = #tpu.dot_dimension_numbers<[1], [1], [0], [0], [0, 0, 1, 0], [], []>} : vector<8x8xbf16>, vector<8x8xbf16>, vector<8x8xf32> -> vector<8x8xf32>
    %cst_143 = arith.constant 0.353553385 : f32
    %443 = vector.broadcast %cst_143 : f32 to vector<8x8xf32>
    %444 = arith.mulf %442, %443 : vector<8x8xf32>
    %445 = vector.broadcast %354 : vector<1x8xf32> to vector<8x8xf32>
    %446 = arith.addf %444, %445 : vector<8x8xf32>
    %cst_144 = arith.constant dense<0xFF800000> : vector<8xf32>
    %447 = vector.multi_reduction <maximumf>, %446, %cst_144 [1] : vector<8x8xf32> to vector<8xf32>
    %448 = vector.shape_cast %447 : vector<8xf32> to vector<8x1xf32>
    %449 = vector.broadcast %448 : vector<8x1xf32> to vector<8x8xf32>
    %450 = arith.subf %446, %449 : vector<8x8xf32>
    %451 = math.exp %450 : vector<8x8xf32>
    %cst_145 = arith.constant dense<0.000000e+00> : vector<8xf32>
    %452 = vector.multi_reduction <add>, %451, %cst_145 [1] : vector<8x8xf32> to vector<8xf32>
    %453 = vector.shape_cast %452 : vector<8xf32> to vector<8x1xf32>
    %454 = tpu.reciprocal %453 {approx = true} : vector<8x1xf32> -> vector<8x1xf32>
    %455 = vector.broadcast %454 : vector<8x1xf32> to vector<8x8xf32>
    %456 = arith.mulf %451, %455 : vector<8x8xf32>
    %457 = arith.truncf %456 : vector<8x8xf32> to vector<8x8xbf16>
    %458 = arith.truncf %439 : vector<8x8xf32> to vector<8x8xbf16>
    %cst_146 = arith.constant dense<0.000000e+00> : vector<8x8xf32>
    %459 = tpu.matmul %457, %458, %cst_146 {dimension_numbers = #tpu.dot_dimension_numbers<[1], [0], [0], [1], [0, 0, 1, 1], [], []>} : vector<8x8xbf16>, vector<8x8xbf16>, vector<8x8xf32> -> vector<8x8xf32>
    %460 = vector.extract_strided_slice %353 {offsets = [24, 0], sizes = [8, 32], strides = [1, 1]} : vector<32x32xbf16> to vector<8x32xbf16>
    %461 = arith.truncf %459 : vector<8x8xf32> to vector<8x8xbf16>
    %cst_147 = arith.constant dense<0.000000e+00> : vector<8x32xf32>
    %462 = tpu.matmul %461, %460, %cst_147 {dimension_numbers = #tpu.dot_dimension_numbers<[1], [0], [0], [1], [0, 0, 1, 1], [], []>} : vector<8x8xbf16>, vector<8x32xbf16>, vector<8x32xf32> -> vector<8x32xf32>
    %463 = arith.addf %436, %462 : vector<8x32xf32>
    %464 = vector.extract_strided_slice %25 {offsets = [1, 0], sizes = [1, 8], strides = [1, 1]} : vector<2x8xf32> to vector<1x8xf32>
    %cst_148 = arith.constant 0.000000e+00 : f32
    %465 = vector.broadcast %cst_148 : f32 to vector<8x32xf32>
    %466 = vector.extract_strided_slice %351 {offsets = [8, 0], sizes = [8, 8], strides = [1, 1]} : vector<16x96xf32> to vector<8x8xf32>
    %467 = vector.extract_strided_slice %351 {offsets = [8, 32], sizes = [8, 8], strides = [1, 1]} : vector<16x96xf32> to vector<8x8xf32>
    %468 = vector.extract_strided_slice %351 {offsets = [8, 64], sizes = [8, 8], strides = [1, 1]} : vector<16x96xf32> to vector<8x8xf32>
    %469 = arith.truncf %466 : vector<8x8xf32> to vector<8x8xbf16>
    %470 = arith.truncf %467 : vector<8x8xf32> to vector<8x8xbf16>
    %cst_149 = arith.constant dense<0.000000e+00> : vector<8x8xf32>
    %471 = tpu.matmul %469, %470, %cst_149 {dimension_numbers = #tpu.dot_dimension_numbers<[1], [1], [0], [0], [0, 0, 1, 0], [], []>} : vector<8x8xbf16>, vector<8x8xbf16>, vector<8x8xf32> -> vector<8x8xf32>
    %cst_150 = arith.constant 0.353553385 : f32
    %472 = vector.broadcast %cst_150 : f32 to vector<8x8xf32>
    %473 = arith.mulf %471, %472 : vector<8x8xf32>
    %474 = vector.broadcast %464 : vector<1x8xf32> to vector<8x8xf32>
    %475 = arith.addf %473, %474 : vector<8x8xf32>
    %cst_151 = arith.constant dense<0xFF800000> : vector<8xf32>
    %476 = vector.multi_reduction <maximumf>, %475, %cst_151 [1] : vector<8x8xf32> to vector<8xf32>
    %477 = vector.shape_cast %476 : vector<8xf32> to vector<8x1xf32>
    %478 = vector.broadcast %477 : vector<8x1xf32> to vector<8x8xf32>
    %479 = arith.subf %475, %478 : vector<8x8xf32>
    %480 = math.exp %479 : vector<8x8xf32>
    %cst_152 = arith.constant dense<0.000000e+00> : vector<8xf32>
    %481 = vector.multi_reduction <add>, %480, %cst_152 [1] : vector<8x8xf32> to vector<8xf32>
    %482 = vector.shape_cast %481 : vector<8xf32> to vector<8x1xf32>
    %483 = tpu.reciprocal %482 {approx = true} : vector<8x1xf32> -> vector<8x1xf32>
    %484 = vector.broadcast %483 : vector<8x1xf32> to vector<8x8xf32>
    %485 = arith.mulf %480, %484 : vector<8x8xf32>
    %486 = arith.truncf %485 : vector<8x8xf32> to vector<8x8xbf16>
    %487 = arith.truncf %468 : vector<8x8xf32> to vector<8x8xbf16>
    %cst_153 = arith.constant dense<0.000000e+00> : vector<8x8xf32>
    %488 = tpu.matmul %486, %487, %cst_153 {dimension_numbers = #tpu.dot_dimension_numbers<[1], [0], [0], [1], [0, 0, 1, 1], [], []>} : vector<8x8xbf16>, vector<8x8xbf16>, vector<8x8xf32> -> vector<8x8xf32>
    %489 = vector.extract_strided_slice %353 {offsets = [0, 0], sizes = [8, 32], strides = [1, 1]} : vector<32x32xbf16> to vector<8x32xbf16>
    %490 = arith.truncf %488 : vector<8x8xf32> to vector<8x8xbf16>
    %cst_154 = arith.constant dense<0.000000e+00> : vector<8x32xf32>
    %491 = tpu.matmul %490, %489, %cst_154 {dimension_numbers = #tpu.dot_dimension_numbers<[1], [0], [0], [1], [0, 0, 1, 1], [], []>} : vector<8x8xbf16>, vector<8x32xbf16>, vector<8x32xf32> -> vector<8x32xf32>
    %492 = arith.addf %465, %491 : vector<8x32xf32>
    %493 = vector.extract_strided_slice %351 {offsets = [8, 8], sizes = [8, 8], strides = [1, 1]} : vector<16x96xf32> to vector<8x8xf32>
    %494 = vector.extract_strided_slice %351 {offsets = [8, 40], sizes = [8, 8], strides = [1, 1]} : vector<16x96xf32> to vector<8x8xf32>
    %495 = vector.extract_strided_slice %351 {offsets = [8, 72], sizes = [8, 8], strides = [1, 1]} : vector<16x96xf32> to vector<8x8xf32>
    %496 = arith.truncf %493 : vector<8x8xf32> to vector<8x8xbf16>
    %497 = arith.truncf %494 : vector<8x8xf32> to vector<8x8xbf16>
    %cst_155 = arith.constant dense<0.000000e+00> : vector<8x8xf32>
    %498 = tpu.matmul %496, %497, %cst_155 {dimension_numbers = #tpu.dot_dimension_numbers<[1], [1], [0], [0], [0, 0, 1, 0], [], []>} : vector<8x8xbf16>, vector<8x8xbf16>, vector<8x8xf32> -> vector<8x8xf32>
    %cst_156 = arith.constant 0.353553385 : f32
    %499 = vector.broadcast %cst_156 : f32 to vector<8x8xf32>
    %500 = arith.mulf %498, %499 : vector<8x8xf32>
    %501 = vector.broadcast %464 : vector<1x8xf32> to vector<8x8xf32>
    %502 = arith.addf %500, %501 : vector<8x8xf32>
    %cst_157 = arith.constant dense<0xFF800000> : vector<8xf32>
    %503 = vector.multi_reduction <maximumf>, %502, %cst_157 [1] : vector<8x8xf32> to vector<8xf32>
    %504 = vector.shape_cast %503 : vector<8xf32> to vector<8x1xf32>
    %505 = vector.broadcast %504 : vector<8x1xf32> to vector<8x8xf32>
    %506 = arith.subf %502, %505 : vector<8x8xf32>
    %507 = math.exp %506 : vector<8x8xf32>
    %cst_158 = arith.constant dense<0.000000e+00> : vector<8xf32>
    %508 = vector.multi_reduction <add>, %507, %cst_158 [1] : vector<8x8xf32> to vector<8xf32>
    %509 = vector.shape_cast %508 : vector<8xf32> to vector<8x1xf32>
    %510 = tpu.reciprocal %509 {approx = true} : vector<8x1xf32> -> vector<8x1xf32>
    %511 = vector.broadcast %510 : vector<8x1xf32> to vector<8x8xf32>
    %512 = arith.mulf %507, %511 : vector<8x8xf32>
    %513 = arith.truncf %512 : vector<8x8xf32> to vector<8x8xbf16>
    %514 = arith.truncf %495 : vector<8x8xf32> to vector<8x8xbf16>
    %cst_159 = arith.constant dense<0.000000e+00> : vector<8x8xf32>
    %515 = tpu.matmul %513, %514, %cst_159 {dimension_numbers = #tpu.dot_dimension_numbers<[1], [0], [0], [1], [0, 0, 1, 1], [], []>} : vector<8x8xbf16>, vector<8x8xbf16>, vector<8x8xf32> -> vector<8x8xf32>
    %516 = vector.extract_strided_slice %353 {offsets = [8, 0], sizes = [8, 32], strides = [1, 1]} : vector<32x32xbf16> to vector<8x32xbf16>
    %517 = arith.truncf %515 : vector<8x8xf32> to vector<8x8xbf16>
    %cst_160 = arith.constant dense<0.000000e+00> : vector<8x32xf32>
    %518 = tpu.matmul %517, %516, %cst_160 {dimension_numbers = #tpu.dot_dimension_numbers<[1], [0], [0], [1], [0, 0, 1, 1], [], []>} : vector<8x8xbf16>, vector<8x32xbf16>, vector<8x32xf32> -> vector<8x32xf32>
    %519 = arith.addf %492, %518 : vector<8x32xf32>
    %520 = vector.extract_strided_slice %351 {offsets = [8, 16], sizes = [8, 8], strides = [1, 1]} : vector<16x96xf32> to vector<8x8xf32>
    %521 = vector.extract_strided_slice %351 {offsets = [8, 48], sizes = [8, 8], strides = [1, 1]} : vector<16x96xf32> to vector<8x8xf32>
    %522 = vector.extract_strided_slice %351 {offsets = [8, 80], sizes = [8, 8], strides = [1, 1]} : vector<16x96xf32> to vector<8x8xf32>
    %523 = arith.truncf %520 : vector<8x8xf32> to vector<8x8xbf16>
    %524 = arith.truncf %521 : vector<8x8xf32> to vector<8x8xbf16>
    %cst_161 = arith.constant dense<0.000000e+00> : vector<8x8xf32>
    %525 = tpu.matmul %523, %524, %cst_161 {dimension_numbers = #tpu.dot_dimension_numbers<[1], [1], [0], [0], [0, 0, 1, 0], [], []>} : vector<8x8xbf16>, vector<8x8xbf16>, vector<8x8xf32> -> vector<8x8xf32>
    %cst_162 = arith.constant 0.353553385 : f32
    %526 = vector.broadcast %cst_162 : f32 to vector<8x8xf32>
    %527 = arith.mulf %525, %526 : vector<8x8xf32>
    %528 = vector.broadcast %464 : vector<1x8xf32> to vector<8x8xf32>
    %529 = arith.addf %527, %528 : vector<8x8xf32>
    %cst_163 = arith.constant dense<0xFF800000> : vector<8xf32>
    %530 = vector.multi_reduction <maximumf>, %529, %cst_163 [1] : vector<8x8xf32> to vector<8xf32>
    %531 = vector.shape_cast %530 : vector<8xf32> to vector<8x1xf32>
    %532 = vector.broadcast %531 : vector<8x1xf32> to vector<8x8xf32>
    %533 = arith.subf %529, %532 : vector<8x8xf32>
    %534 = math.exp %533 : vector<8x8xf32>
    %cst_164 = arith.constant dense<0.000000e+00> : vector<8xf32>
    %535 = vector.multi_reduction <add>, %534, %cst_164 [1] : vector<8x8xf32> to vector<8xf32>
    %536 = vector.shape_cast %535 : vector<8xf32> to vector<8x1xf32>
    %537 = tpu.reciprocal %536 {approx = true} : vector<8x1xf32> -> vector<8x1xf32>
    %538 = vector.broadcast %537 : vector<8x1xf32> to vector<8x8xf32>
    %539 = arith.mulf %534, %538 : vector<8x8xf32>
    %540 = arith.truncf %539 : vector<8x8xf32> to vector<8x8xbf16>
    %541 = arith.truncf %522 : vector<8x8xf32> to vector<8x8xbf16>
    %cst_165 = arith.constant dense<0.000000e+00> : vector<8x8xf32>
    %542 = tpu.matmul %540, %541, %cst_165 {dimension_numbers = #tpu.dot_dimension_numbers<[1], [0], [0], [1], [0, 0, 1, 1], [], []>} : vector<8x8xbf16>, vector<8x8xbf16>, vector<8x8xf32> -> vector<8x8xf32>
    %543 = vector.extract_strided_slice %353 {offsets = [16, 0], sizes = [8, 32], strides = [1, 1]} : vector<32x32xbf16> to vector<8x32xbf16>
    %544 = arith.truncf %542 : vector<8x8xf32> to vector<8x8xbf16>
    %cst_166 = arith.constant dense<0.000000e+00> : vector<8x32xf32>
    %545 = tpu.matmul %544, %543, %cst_166 {dimension_numbers = #tpu.dot_dimension_numbers<[1], [0], [0], [1], [0, 0, 1, 1], [], []>} : vector<8x8xbf16>, vector<8x32xbf16>, vector<8x32xf32> -> vector<8x32xf32>
    %546 = arith.addf %519, %545 : vector<8x32xf32>
    %547 = vector.extract_strided_slice %351 {offsets = [8, 24], sizes = [8, 8], strides = [1, 1]} : vector<16x96xf32> to vector<8x8xf32>
    %548 = vector.extract_strided_slice %351 {offsets = [8, 56], sizes = [8, 8], strides = [1, 1]} : vector<16x96xf32> to vector<8x8xf32>
    %549 = vector.extract_strided_slice %351 {offsets = [8, 88], sizes = [8, 8], strides = [1, 1]} : vector<16x96xf32> to vector<8x8xf32>
    %550 = arith.truncf %547 : vector<8x8xf32> to vector<8x8xbf16>
    %551 = arith.truncf %548 : vector<8x8xf32> to vector<8x8xbf16>
    %cst_167 = arith.constant dense<0.000000e+00> : vector<8x8xf32>
    %552 = tpu.matmul %550, %551, %cst_167 {dimension_numbers = #tpu.dot_dimension_numbers<[1], [1], [0], [0], [0, 0, 1, 0], [], []>} : vector<8x8xbf16>, vector<8x8xbf16>, vector<8x8xf32> -> vector<8x8xf32>
    %cst_168 = arith.constant 0.353553385 : f32
    %553 = vector.broadcast %cst_168 : f32 to vector<8x8xf32>
    %554 = arith.mulf %552, %553 : vector<8x8xf32>
    %555 = vector.broadcast %464 : vector<1x8xf32> to vector<8x8xf32>
    %556 = arith.addf %554, %555 : vector<8x8xf32>
    %cst_169 = arith.constant dense<0xFF800000> : vector<8xf32>
    %557 = vector.multi_reduction <maximumf>, %556, %cst_169 [1] : vector<8x8xf32> to vector<8xf32>
    %558 = vector.shape_cast %557 : vector<8xf32> to vector<8x1xf32>
    %559 = vector.broadcast %558 : vector<8x1xf32> to vector<8x8xf32>
    %560 = arith.subf %556, %559 : vector<8x8xf32>
    %561 = math.exp %560 : vector<8x8xf32>
    %cst_170 = arith.constant dense<0.000000e+00> : vector<8xf32>
    %562 = vector.multi_reduction <add>, %561, %cst_170 [1] : vector<8x8xf32> to vector<8xf32>
    %563 = vector.shape_cast %562 : vector<8xf32> to vector<8x1xf32>
    %564 = tpu.reciprocal %563 {approx = true} : vector<8x1xf32> -> vector<8x1xf32>
    %565 = vector.broadcast %564 : vector<8x1xf32> to vector<8x8xf32>
    %566 = arith.mulf %561, %565 : vector<8x8xf32>
    %567 = arith.truncf %566 : vector<8x8xf32> to vector<8x8xbf16>
    %568 = arith.truncf %549 : vector<8x8xf32> to vector<8x8xbf16>
    %cst_171 = arith.constant dense<0.000000e+00> : vector<8x8xf32>
    %569 = tpu.matmul %567, %568, %cst_171 {dimension_numbers = #tpu.dot_dimension_numbers<[1], [0], [0], [1], [0, 0, 1, 1], [], []>} : vector<8x8xbf16>, vector<8x8xbf16>, vector<8x8xf32> -> vector<8x8xf32>
    %570 = vector.extract_strided_slice %353 {offsets = [24, 0], sizes = [8, 32], strides = [1, 1]} : vector<32x32xbf16> to vector<8x32xbf16>
    %571 = arith.truncf %569 : vector<8x8xf32> to vector<8x8xbf16>
    %cst_172 = arith.constant dense<0.000000e+00> : vector<8x32xf32>
    %572 = tpu.matmul %571, %570, %cst_172 {dimension_numbers = #tpu.dot_dimension_numbers<[1], [0], [0], [1], [0, 0, 1, 1], [], []>} : vector<8x8xbf16>, vector<8x32xbf16>, vector<8x32xf32> -> vector<8x32xf32>
    %573 = arith.addf %546, %572 : vector<8x32xf32>
    %574 = tpu.concatenate %463, %573 in 0 : vector<8x32xf32>, vector<8x32xf32> -> vector<16x32xf32>
    %c1_173 = arith.constant 1 : index
    %c0_174 = arith.constant 0 : index
    %c0_175 = arith.constant 0 : index
    %575 = vector.load %arg8[%c1_173, %c0_174, %c0_175] : memref<2x1x32xf32, #tpu.memory_space<vmem>>, vector<1x1x32xf32>
    %576 = vector.shape_cast %575 : vector<1x1x32xf32> to vector<1x32xf32>
    %577 = vector.broadcast %576 : vector<1x32xf32> to vector<16x32xf32>
    %578 = arith.addf %574, %577 : vector<16x32xf32>
    %579 = arith.addf %578, %343 : vector<16x32xf32>
    %c1_176 = arith.constant 1 : index
    %c0_177 = arith.constant 0 : index
    %c0_178 = arith.constant 0 : index
    %580 = vector.load %arg9[%c1_176, %c0_177, %c0_178] : memref<2x1x32xf32, #tpu.memory_space<vmem>>, vector<1x1x32xf32>
    %581 = vector.shape_cast %580 : vector<1x1x32xf32> to vector<1x32xf32>
    %c1_179 = arith.constant 1 : index
    %c0_180 = arith.constant 0 : index
    %c0_181 = arith.constant 0 : index
    %582 = vector.load %arg10[%c1_179, %c0_180, %c0_181] : memref<2x1x32xf32, #tpu.memory_space<vmem>>, vector<1x1x32xf32>
    %583 = vector.shape_cast %582 : vector<1x1x32xf32> to vector<1x32xf32>
    %cst_182 = arith.constant dense<0.000000e+00> : vector<16xf32>
    %584 = vector.multi_reduction <add>, %579, %cst_182 [1] : vector<16x32xf32> to vector<16xf32>
    %585 = vector.shape_cast %584 : vector<16xf32> to vector<16x1xf32>
    %cst_183 = arith.constant 3.200000e+01 : f32
    %586 = vector.broadcast %cst_183 : f32 to vector<16x1xf32>
    %587 = arith.divf %585, %586 : vector<16x1xf32>
    %588 = vector.broadcast %587 : vector<16x1xf32> to vector<16x32xf32>
    %589 = arith.subf %579, %588 : vector<16x32xf32>
    %590 = arith.mulf %589, %589 : vector<16x32xf32>
    %cst_184 = arith.constant dense<0.000000e+00> : vector<16xf32>
    %591 = vector.multi_reduction <add>, %590, %cst_184 [1] : vector<16x32xf32> to vector<16xf32>
    %592 = vector.shape_cast %591 : vector<16xf32> to vector<16x1xf32>
    %cst_185 = arith.constant 3.200000e+01 : f32
    %593 = vector.broadcast %cst_185 : f32 to vector<16x1xf32>
    %594 = arith.divf %592, %593 : vector<16x1xf32>
    %595 = vector.broadcast %587 : vector<16x1xf32> to vector<16x32xf32>
    %596 = arith.subf %579, %595 : vector<16x32xf32>
    %cst_186 = arith.constant 9.99999996E-13 : f32
    %597 = vector.broadcast %cst_186 : f32 to vector<16x1xf32>
    %598 = arith.addf %594, %597 : vector<16x1xf32>
    %599 = math.rsqrt %598 : vector<16x1xf32>
    %600 = vector.broadcast %599 : vector<16x1xf32> to vector<16x32xf32>
    %601 = arith.mulf %596, %600 : vector<16x32xf32>
    %602 = vector.broadcast %581 : vector<1x32xf32> to vector<16x32xf32>
    %603 = arith.mulf %601, %602 : vector<16x32xf32>
    %604 = vector.broadcast %583 : vector<1x32xf32> to vector<16x32xf32>
    %605 = arith.addf %603, %604 : vector<16x32xf32>
    %c1_187 = arith.constant 1 : index
    %c0_188 = arith.constant 0 : index
    %c0_189 = arith.constant 0 : index
    %606 = vector.load %arg11[%c1_187, %c0_188, %c0_189] : memref<2x32x64xbf16, #tpu.memory_space<vmem>>, vector<1x32x64xbf16>
    %607 = vector.shape_cast %606 : vector<1x32x64xbf16> to vector<32x64xbf16>
    %608 = arith.truncf %605 : vector<16x32xf32> to vector<16x32xbf16>
    %cst_190 = arith.constant dense<0.000000e+00> : vector<16x64xf32>
    %609 = tpu.matmul %608, %607, %cst_190 {dimension_numbers = #tpu.dot_dimension_numbers<[1], [0], [0], [1], [0, 0, 1, 1], [], []>} : vector<16x32xbf16>, vector<32x64xbf16>, vector<16x64xf32> -> vector<16x64xf32>
    %c1_191 = arith.constant 1 : index
    %c0_192 = arith.constant 0 : index
    %c0_193 = arith.constant 0 : index
    %610 = vector.load %arg12[%c1_191, %c0_192, %c0_193] : memref<2x1x64xf32, #tpu.memory_space<vmem>>, vector<1x1x64xf32>
    %611 = vector.shape_cast %610 : vector<1x1x64xf32> to vector<1x64xf32>
    %612 = vector.broadcast %611 : vector<1x64xf32> to vector<16x64xf32>
    %613 = arith.addf %609, %612 : vector<16x64xf32>
    %cst_194 = arith.constant 5.000000e-01 : f32
    %614 = vector.broadcast %cst_194 : f32 to vector<16x64xf32>
    %615 = arith.mulf %614, %613 : vector<16x64xf32>
    %cst_195 = arith.constant 4.471500e-02 : f32
    %616 = vector.broadcast %cst_195 : f32 to vector<16x64xf32>
    %617 = arith.mulf %616, %613 : vector<16x64xf32>
    %618 = arith.mulf %617, %613 : vector<16x64xf32>
    %619 = arith.mulf %618, %613 : vector<16x64xf32>
    %620 = arith.addf %613, %619 : vector<16x64xf32>
    %cst_196 = arith.constant 0.797884583 : f32
    %621 = vector.broadcast %cst_196 : f32 to vector<16x64xf32>
    %622 = arith.mulf %621, %620 : vector<16x64xf32>
    %623 = math.tanh %622 : vector<16x64xf32>
    %cst_197 = arith.constant 1.000000e+00 : f32
    %624 = vector.broadcast %cst_197 : f32 to vector<16x64xf32>
    %625 = arith.addf %624, %623 : vector<16x64xf32>
    %626 = arith.mulf %615, %625 : vector<16x64xf32>
    %c1_198 = arith.constant 1 : index
    %c0_199 = arith.constant 0 : index
    %c0_200 = arith.constant 0 : index
    %627 = vector.load %arg13[%c1_198, %c0_199, %c0_200] : memref<2x64x32xbf16, #tpu.memory_space<vmem>>, vector<1x64x32xbf16>
    %628 = vector.shape_cast %627 : vector<1x64x32xbf16> to vector<64x32xbf16>
    %629 = arith.truncf %626 : vector<16x64xf32> to vector<16x64xbf16>
    %cst_201 = arith.constant dense<0.000000e+00> : vector<16x32xf32>
    %630 = tpu.matmul %629, %628, %cst_201 {dimension_numbers = #tpu.dot_dimension_numbers<[1], [0], [0], [1], [0, 0, 1, 1], [], []>} : vector<16x64xbf16>, vector<64x32xbf16>, vector<16x32xf32> -> vector<16x32xf32>
    %c1_202 = arith.constant 1 : index
    %c0_203 = arith.constant 0 : index
    %c0_204 = arith.constant 0 : index
    %631 = vector.load %arg14[%c1_202, %c0_203, %c0_204] : memref<2x1x32xf32, #tpu.memory_space<vmem>>, vector<1x1x32xf32>
    %632 = vector.shape_cast %631 : vector<1x1x32xf32> to vector<1x32xf32>
    %633 = vector.broadcast %632 : vector<1x32xf32> to vector<16x32xf32>
    %634 = arith.addf %630, %633 : vector<16x32xf32>
    %635 = arith.addf %634, %605 : vector<16x32xf32>
    %c1_205 = arith.constant 1 : index
    %c0_206 = arith.constant 0 : index
    %c0_207 = arith.constant 0 : index
    %636 = vector.load %arg15[%c1_205, %c0_206, %c0_207] : memref<2x1x32xf32, #tpu.memory_space<vmem>>, vector<1x1x32xf32>
    %637 = vector.shape_cast %636 : vector<1x1x32xf32> to vector<1x32xf32>
    %c1_208 = arith.constant 1 : index
    %c0_209 = arith.constant 0 : index
    %c0_210 = arith.constant 0 : index
    %638 = vector.load %arg16[%c1_208, %c0_209, %c0_210] : memref<2x1x32xf32, #tpu.memory_space<vmem>>, vector<1x1x32xf32>
    %639 = vector.shape_cast %638 : vector<1x1x32xf32> to vector<1x32xf32>
    %cst_211 = arith.constant dense<0.000000e+00> : vector<16xf32>
    %640 = vector.multi_reduction <add>, %635, %cst_211 [1] : vector<16x32xf32> to vector<16xf32>
    %641 = vector.shape_cast %640 : vector<16xf32> to vector<16x1xf32>
    %cst_212 = arith.constant 3.200000e+01 : f32
    %642 = vector.broadcast %cst_212 : f32 to vector<16x1xf32>
    %643 = arith.divf %641, %642 : vector<16x1xf32>
    %644 = vector.broadcast %643 : vector<16x1xf32> to vector<16x32xf32>
    %645 = arith.subf %635, %644 : vector<16x32xf32>
    %646 = arith.mulf %645, %645 : vector<16x32xf32>
    %cst_213 = arith.constant dense<0.000000e+00> : vector<16xf32>
    %647 = vector.multi_reduction <add>, %646, %cst_213 [1] : vector<16x32xf32> to vector<16xf32>
    %648 = vector.shape_cast %647 : vector<16xf32> to vector<16x1xf32>
    %cst_214 = arith.constant 3.200000e+01 : f32
    %649 = vector.broadcast %cst_214 : f32 to vector<16x1xf32>
    %650 = arith.divf %648, %649 : vector<16x1xf32>
    %651 = vector.broadcast %643 : vector<16x1xf32> to vector<16x32xf32>
    %652 = arith.subf %635, %651 : vector<16x32xf32>
    %cst_215 = arith.constant 9.99999996E-13 : f32
    %653 = vector.broadcast %cst_215 : f32 to vector<16x1xf32>
    %654 = arith.addf %650, %653 : vector<16x1xf32>
    %655 = math.rsqrt %654 : vector<16x1xf32>
    %656 = vector.broadcast %655 : vector<16x1xf32> to vector<16x32xf32>
    %657 = arith.mulf %652, %656 : vector<16x32xf32>
    %658 = vector.broadcast %637 : vector<1x32xf32> to vector<16x32xf32>
    %659 = arith.mulf %657, %658 : vector<16x32xf32>
    %660 = vector.broadcast %639 : vector<1x32xf32> to vector<16x32xf32>
    %661 = arith.addf %659, %660 : vector<16x32xf32>
    %662 = vector.extract_strided_slice %661 {offsets = [0, 0], sizes = [1, 32], strides = [1, 1]} : vector<16x32xf32> to vector<1x32xf32>
    %663 = vector.extract_strided_slice %661 {offsets = [8, 0], sizes = [1, 32], strides = [1, 1]} : vector<16x32xf32> to vector<1x32xf32>
    %664 = tpu.concatenate %662, %663 in 0 : vector<1x32xf32>, vector<1x32xf32> -> vector<2x32xf32>
    %c0_216 = arith.constant 0 : index
    %665 = memref.load %arg0[%c0_216] : memref<1xi32, #tpu.memory_space<smem>>
    %c0_i32 = arith.constant 0 : i32
    %666 = arith.cmpi eq, %665, %c0_i32 : i32
    %667 = arith.extui %666 : i1 to i32
    %668 = arith.sitofp %667 : i32 to f32
    %c0_217 = arith.constant 0 : index
    %c0_218 = arith.constant 0 : index
    %c0_219 = arith.constant 0 : index
    %669 = vector.load %arg17[%c0_217, %c0_218, %c0_219] : memref<2x32x32xbf16, #tpu.memory_space<vmem>>, vector<1x32x32xbf16>
    %670 = vector.shape_cast %669 : vector<1x32x32xbf16> to vector<32x32xbf16>
    %671 = arith.extf %670 : vector<32x32xbf16> to vector<32x32xf32>
    %672 = vector.broadcast %668 : f32 to vector<32x32xf32>
    %673 = arith.mulf %672, %671 : vector<32x32xf32>
    %cst_220 = arith.constant 1.000000e+00 : f32
    %674 = arith.subf %cst_220, %668 : f32
    %c1_221 = arith.constant 1 : index
    %c0_222 = arith.constant 0 : index
    %c0_223 = arith.constant 0 : index
    %675 = vector.load %arg17[%c1_221, %c0_222, %c0_223] : memref<2x32x32xbf16, #tpu.memory_space<vmem>>, vector<1x32x32xbf16>
    %676 = vector.shape_cast %675 : vector<1x32x32xbf16> to vector<32x32xbf16>
    %677 = arith.extf %676 : vector<32x32xbf16> to vector<32x32xf32>
    %678 = vector.broadcast %674 : f32 to vector<32x32xf32>
    %679 = arith.mulf %678, %677 : vector<32x32xf32>
    %680 = arith.addf %673, %679 : vector<32x32xf32>
    %c0_224 = arith.constant 0 : index
    %c0_225 = arith.constant 0 : index
    %c0_226 = arith.constant 0 : index
    %681 = vector.load %arg18[%c0_224, %c0_225, %c0_226] : memref<2x1x32xf32, #tpu.memory_space<vmem>>, vector<1x1x32xf32>
    %682 = vector.shape_cast %681 : vector<1x1x32xf32> to vector<1x32xf32>
    %683 = vector.broadcast %668 : f32 to vector<1x32xf32>
    %684 = arith.mulf %683, %682 : vector<1x32xf32>
    %cst_227 = arith.constant 1.000000e+00 : f32
    %685 = arith.subf %cst_227, %668 : f32
    %c1_228 = arith.constant 1 : index
    %c0_229 = arith.constant 0 : index
    %c0_230 = arith.constant 0 : index
    %686 = vector.load %arg18[%c1_228, %c0_229, %c0_230] : memref<2x1x32xf32, #tpu.memory_space<vmem>>, vector<1x1x32xf32>
    %687 = vector.shape_cast %686 : vector<1x1x32xf32> to vector<1x32xf32>
    %688 = vector.broadcast %685 : f32 to vector<1x32xf32>
    %689 = arith.mulf %688, %687 : vector<1x32xf32>
    %690 = arith.addf %684, %689 : vector<1x32xf32>
    %c0_231 = arith.constant 0 : index
    %c0_232 = arith.constant 0 : index
    %c0_233 = arith.constant 0 : index
    %691 = vector.load %arg19[%c0_231, %c0_232, %c0_233] : memref<2x32x128xbf16, #tpu.memory_space<vmem>>, vector<1x32x128xbf16>
    %692 = vector.shape_cast %691 : vector<1x32x128xbf16> to vector<32x128xbf16>
    %693 = arith.extf %692 : vector<32x128xbf16> to vector<32x128xf32>
    %694 = vector.broadcast %668 : f32 to vector<32x128xf32>
    %695 = arith.mulf %694, %693 : vector<32x128xf32>
    %cst_234 = arith.constant 1.000000e+00 : f32
    %696 = arith.subf %cst_234, %668 : f32
    %c1_235 = arith.constant 1 : index
    %c0_236 = arith.constant 0 : index
    %c0_237 = arith.constant 0 : index
    %697 = vector.load %arg19[%c1_235, %c0_236, %c0_237] : memref<2x32x128xbf16, #tpu.memory_space<vmem>>, vector<1x32x128xbf16>
    %698 = vector.shape_cast %697 : vector<1x32x128xbf16> to vector<32x128xbf16>
    %699 = arith.extf %698 : vector<32x128xbf16> to vector<32x128xf32>
    %700 = vector.broadcast %696 : f32 to vector<32x128xf32>
    %701 = arith.mulf %700, %699 : vector<32x128xf32>
    %702 = arith.addf %695, %701 : vector<32x128xf32>
    %c0_238 = arith.constant 0 : index
    %c0_239 = arith.constant 0 : index
    %c0_240 = arith.constant 0 : index
    %703 = vector.load %arg20[%c0_238, %c0_239, %c0_240] : memref<2x1x128xf32, #tpu.memory_space<vmem>>, vector<1x1x128xf32>
    %704 = vector.shape_cast %703 : vector<1x1x128xf32> to vector<1x128xf32>
    %705 = vector.broadcast %668 : f32 to vector<1x128xf32>
    %706 = arith.mulf %705, %704 : vector<1x128xf32>
    %cst_241 = arith.constant 1.000000e+00 : f32
    %707 = arith.subf %cst_241, %668 : f32
    %c1_242 = arith.constant 1 : index
    %c0_243 = arith.constant 0 : index
    %c0_244 = arith.constant 0 : index
    %708 = vector.load %arg20[%c1_242, %c0_243, %c0_244] : memref<2x1x128xf32, #tpu.memory_space<vmem>>, vector<1x1x128xf32>
    %709 = vector.shape_cast %708 : vector<1x1x128xf32> to vector<1x128xf32>
    %710 = vector.broadcast %707 : f32 to vector<1x128xf32>
    %711 = arith.mulf %710, %709 : vector<1x128xf32>
    %712 = arith.addf %706, %711 : vector<1x128xf32>
    %713 = arith.truncf %664 : vector<2x32xf32> to vector<2x32xbf16>
    %714 = arith.truncf %680 : vector<32x32xf32> to vector<32x32xbf16>
    %cst_245 = arith.constant dense<0.000000e+00> : vector<2x32xf32>
    %715 = tpu.matmul %713, %714, %cst_245 {dimension_numbers = #tpu.dot_dimension_numbers<[1], [0], [0], [1], [0, 0, 1, 1], [], []>} : vector<2x32xbf16>, vector<32x32xbf16>, vector<2x32xf32> -> vector<2x32xf32>
    %716 = vector.broadcast %690 : vector<1x32xf32> to vector<2x32xf32>
    %717 = arith.addf %715, %716 : vector<2x32xf32>
    %cst_246 = arith.constant 0.000000e+00 : f32
    %718 = vector.broadcast %cst_246 : f32 to vector<2x32xf32>
    %719 = arith.maximumf %717, %718 : vector<2x32xf32>
    %720 = arith.truncf %719 : vector<2x32xf32> to vector<2x32xbf16>
    %721 = arith.truncf %702 : vector<32x128xf32> to vector<32x128xbf16>
    %cst_247 = arith.constant dense<0.000000e+00> : vector<2x128xf32>
    %722 = tpu.matmul %720, %721, %cst_247 {dimension_numbers = #tpu.dot_dimension_numbers<[1], [0], [0], [1], [0, 0, 1, 1], [], []>} : vector<2x32xbf16>, vector<32x128xbf16>, vector<2x128xf32> -> vector<2x128xf32>
    %723 = vector.broadcast %712 : vector<1x128xf32> to vector<2x128xf32>
    %724 = arith.addf %722, %723 : vector<2x128xf32>
    %c0_248 = arith.constant 0 : index
    %c0_249 = arith.constant 0 : index
    %725 = vector.load %arg21[%c0_248, %c0_249] : memref<2x128xf32, #tpu.memory_space<vmem>>, vector<2x128xf32>
    tpu.vector_store %arg21[%c0_248, %c0_249], %724 {strides = array<i32>} : memref<2x128xf32, #tpu.memory_space<vmem>>, vector<2x128xf32>,
    return
  }
}

</mosaic_0001>

<llo_original>
// kernel: bert_classifier_forward.1
$region0: #{bert_classifier_forward.1}
  #allocation0 [shape = 'u32[]', space=smem, size = 0x4, offset = 0x4, fixed_abs, tag = 'smem constant byte address 0x4 - core index']
  #allocation1 [shape = 'u32[144,128]{1,0:T(1,128)}', space=vmem, size = 0x12000, scoped, tag = 'internal scratch']
  #allocation2 [shape = 's32[1]{0:T(128)S(6)}', space=smem, size = 0x200, scoped, tag = 'scoped memory for bert_classifier_forward.1']
  %s0 = inlined_call_operand.<no memory space> [shape: s32[1], index: 0, kind: input, shape index: {}]
  %s1 = inlined_call_operand.vmem [shape: f32[16,32], index: 1, kind: input, shape index: {}]
  %s2 = inlined_call_operand.vmem [shape: f32[2,8], index: 2, kind: input, shape index: {}]
  %s3 = inlined_call_operand.vmem [shape: f32[1,32], index: 3, kind: input, shape index: {}]
  %s4 = inlined_call_operand.vmem [shape: f32[1,32], index: 4, kind: input, shape index: {}]
  %s5 = inlined_call_operand.vmem [shape: bf16[2,32,96], index: 5, kind: input, shape index: {}]
  %s6 = inlined_call_operand.vmem [shape: f32[2,1,96], index: 6, kind: input, shape index: {}]
  %s7 = inlined_call_operand.vmem [shape: bf16[2,32,32], index: 7, kind: input, shape index: {}]
  %s8 = inlined_call_operand.vmem [shape: f32[2,1,32], index: 8, kind: input, shape index: {}]
  %s9 = inlined_call_operand.vmem [shape: f32[2,1,32], index: 9, kind: input, shape index: {}]
  %s10 = inlined_call_operand.vmem [shape: f32[2,1,32], index: 10, kind: input, shape index: {}]
  %s11 = inlined_call_operand.vmem [shape: bf16[2,32,64], index: 11, kind: input, shape index: {}]
  %s12 = inlined_call_operand.vmem [shape: f32[2,1,64], index: 12, kind: input, shape index: {}]
  %s13 = inlined_call_operand.vmem [shape: bf16[2,64,32], index: 13, kind: input, shape index: {}]
  %s14 = inlined_call_operand.vmem [shape: f32[2,1,32], index: 14, kind: input, shape index: {}]
  %s15 = inlined_call_operand.vmem [shape: f32[2,1,32], index: 15, kind: input, shape index: {}]
  %s16 = inlined_call_operand.vmem [shape: f32[2,1,32], index: 16, kind: input, shape index: {}]
  %s17 = inlined_call_operand.vmem [shape: bf16[2,32,32], index: 17, kind: input, shape index: {}]
  %s18 = inlined_call_operand.vmem [shape: f32[2,1,32], index: 18, kind: input, shape index: {}]
  %s19 = inlined_call_operand.vmem [shape: bf16[2,32,128], index: 19, kind: input, shape index: {}]
  %s20 = inlined_call_operand.vmem [shape: f32[2,1,128], index: 20, kind: input, shape index: {}]
  %s21 = inlined_call_operand.hbm [shape: f32[2,128], index: 21, kind: output, shape index: {}]
  %s22 = sld [smem:[#allocation0]]
  $region94: #{bert_classifier_forward.1} parent=0
    _
  %s24 = ssub.s32 1, %s22
  %s25 = scalar_select 0, %s24, %s22
  %26 = sst [smem:[#allocation2]] %s0
  $region1: #{bert_classifier_forward.1} parent=0
    #allocation3 [shape = 'u8[1024]{0}', space=vmem, size = 0x400, scoped, tag = 'output window, operand 0, single buffered']
    #allocation4 [shape = 's32[1]{0}', space=sflag, size = 0x4, scoped, tag = 'scoped memory for bert_classifier_forward.1']
    %27 = vsyncpa [#allocation4], 0
    // Predicated region
    $region2: #{bert_classifier_forward.1} parent=1 // pred_check
      _
    $region3: #{bert_classifier_forward.1} parent=1 // pred_check_branch
      %29 = sbr.rel (0) target = $region5
    $region4: #{bert_classifier_forward.1} parent=1 // pred_region
      _
    $region5: #{bert_classifier_forward.1} parent=1 // pred_fallthru
      _
    // Predicated region
    $region6: #{bert_classifier_forward.1} parent=1 // pred_check
      _
    $region7: #{bert_classifier_forward.1} parent=1 // pred_check_branch
      %31 = sbr.rel (0) target = $region9
    $region8: #{bert_classifier_forward.1} parent=1 // pred_region
      _
    $region9: #{bert_classifier_forward.1} parent=1 // pred_fallthru
      _
    // Predicated region
    $region10: #{bert_classifier_forward.1} parent=1 // pred_check
      _
    $region11: #{bert_classifier_forward.1} parent=1 // pred_check_branch
      %33 = sbr.rel (0) target = $region13
    $region12: #{bert_classifier_forward.1} parent=1 // pred_region
      _
    $region13: #{bert_classifier_forward.1} parent=1 // pred_fallthru
      _
    // Predicated region
    $region14: #{bert_classifier_forward.1} parent=1 // pred_check
      _
    $region15: #{bert_classifier_forward.1} parent=1 // pred_check_branch
      %35 = sbr.rel (0) target = $region17
    $region16: #{bert_classifier_forward.1} parent=1 // pred_region
      _
    $region17: #{bert_classifier_forward.1} parent=1 // pred_fallthru
      _
    // Predicated region
    $region18: #{bert_classifier_forward.1} parent=1 // pred_check
      _
    $region19: #{bert_classifier_forward.1} parent=1 // pred_check_branch
      %37 = sbr.rel (0) target = $region21
    $region20: #{bert_classifier_forward.1} parent=1 // pred_region
      _
    $region21: #{bert_classifier_forward.1} parent=1 // pred_fallthru
      _
    // Predicated region
    $region22: #{bert_classifier_forward.1} parent=1 // pred_check
      _
    $region23: #{bert_classifier_forward.1} parent=1 // pred_check_branch
      %39 = sbr.rel (0) target = $region25
    $region24: #{bert_classifier_forward.1} parent=1 // pred_region
      _
    $region25: #{bert_classifier_forward.1} parent=1 // pred_fallthru
      _
    // Predicated region
    $region26: #{bert_classifier_forward.1} parent=1 // pred_check
      _
    $region27: #{bert_classifier_forward.1} parent=1 // pred_check_branch
      %41 = sbr.rel (0) target = $region29
    $region28: #{bert_classifier_forward.1} parent=1 // pred_region
      _
    $region29: #{bert_classifier_forward.1} parent=1 // pred_fallthru
      _
    // Predicated region
    $region30: #{bert_classifier_forward.1} parent=1 // pred_check
      _
    $region31: #{bert_classifier_forward.1} parent=1 // pred_check_branch
      %43 = sbr.rel (0) target = $region33
    $region32: #{bert_classifier_forward.1} parent=1 // pred_region
      _
    $region33: #{bert_classifier_forward.1} parent=1 // pred_fallthru
      _
    // Predicated region
    $region34: #{bert_classifier_forward.1} parent=1 // pred_check
      _
    $region35: #{bert_classifier_forward.1} parent=1 // pred_check_branch
      %45 = sbr.rel (0) target = $region37
    $region36: #{bert_classifier_forward.1} parent=1 // pred_region
      _
    $region37: #{bert_classifier_forward.1} parent=1 // pred_fallthru
      _
    // Predicated region
    $region38: #{bert_classifier_forward.1} parent=1 // pred_check
      _
    $region39: #{bert_classifier_forward.1} parent=1 // pred_check_branch
      %47 = sbr.rel (0) target = $region41
    $region40: #{bert_classifier_forward.1} parent=1 // pred_region
      _
    $region41: #{bert_classifier_forward.1} parent=1 // pred_fallthru
      _
    // Predicated region
    $region42: #{bert_classifier_forward.1} parent=1 // pred_check
      _
    $region43: #{bert_classifier_forward.1} parent=1 // pred_check_branch
      %49 = sbr.rel (0) target = $region45
    $region44: #{bert_classifier_forward.1} parent=1 // pred_region
      _
    $region45: #{bert_classifier_forward.1} parent=1 // pred_fallthru
      _
    // Predicated region
    $region46: #{bert_classifier_forward.1} parent=1 // pred_check
      _
    $region47: #{bert_classifier_forward.1} parent=1 // pred_check_branch
      %51 = sbr.rel (0) target = $region49
    $region48: #{bert_classifier_forward.1} parent=1 // pred_region
      _
    $region49: #{bert_classifier_forward.1} parent=1 // pred_fallthru
      _
    // Predicated region
    $region50: #{bert_classifier_forward.1} parent=1 // pred_check
      _
    $region51: #{bert_classifier_forward.1} parent=1 // pred_check_branch
      %53 = sbr.rel (0) target = $region53
    $region52: #{bert_classifier_forward.1} parent=1 // pred_region
      _
    $region53: #{bert_classifier_forward.1} parent=1 // pred_fallthru
      _
    // Predicated region
    $region54: #{bert_classifier_forward.1} parent=1 // pred_check
      _
    $region55: #{bert_classifier_forward.1} parent=1 // pred_check_branch
      %55 = sbr.rel (0) target = $region57
    $region56: #{bert_classifier_forward.1} parent=1 // pred_region
      _
    $region57: #{bert_classifier_forward.1} parent=1 // pred_fallthru
      _
    // Predicated region
    $region58: #{bert_classifier_forward.1} parent=1 // pred_check
      _
    $region59: #{bert_classifier_forward.1} parent=1 // pred_check_branch
      %57 = sbr.rel (0) target = $region61
    $region60: #{bert_classifier_forward.1} parent=1 // pred_region
      _
    $region61: #{bert_classifier_forward.1} parent=1 // pred_fallthru
      _
    // Predicated region
    $region62: #{bert_classifier_forward.1} parent=1 // pred_check
      _
    $region63: #{bert_classifier_forward.1} parent=1 // pred_check_branch
      %59 = sbr.rel (0) target = $region65
    $region64: #{bert_classifier_forward.1} parent=1 // pred_region
      _
    $region65: #{bert_classifier_forward.1} parent=1 // pred_fallthru
      _
    // Predicated region
    $region66: #{bert_classifier_forward.1} parent=1 // pred_check
      _
    $region67: #{bert_classifier_forward.1} parent=1 // pred_check_branch
      %61 = sbr.rel (0) target = $region69
    $region68: #{bert_classifier_forward.1} parent=1 // pred_region
      _
    $region69: #{bert_classifier_forward.1} parent=1 // pred_fallthru
      _
    // Predicated region
    $region70: #{bert_classifier_forward.1} parent=1 // pred_check
      _
    $region71: #{bert_classifier_forward.1} parent=1 // pred_check_branch
      %63 = sbr.rel (0) target = $region73
    $region72: #{bert_classifier_forward.1} parent=1 // pred_region
      _
    $region73: #{bert_classifier_forward.1} parent=1 // pred_fallthru
      _
    // Predicated region
    $region74: #{bert_classifier_forward.1} parent=1 // pred_check
      _
    $region75: #{bert_classifier_forward.1} parent=1 // pred_check_branch
      %65 = sbr.rel (0) target = $region77
    $region76: #{bert_classifier_forward.1} parent=1 // pred_region
      _
    $region77: #{bert_classifier_forward.1} parent=1 // pred_fallthru
      _
    // Predicated region
    $region78: #{bert_classifier_forward.1} parent=1 // pred_check
      _
    $region79: #{bert_classifier_forward.1} parent=1 // pred_check_branch
      %67 = sbr.rel (0) target = $region81
    $region80: #{bert_classifier_forward.1} parent=1 // pred_region
      _
    $region81: #{bert_classifier_forward.1} parent=1 // pred_fallthru
      _
    // Predicated region
    $region82: #{bert_classifier_forward.1} parent=1 // pred_check
      _
    $region83: #{bert_classifier_forward.1} parent=1 // pred_check_branch
      %69 = sbr.rel (0) target = $region85
    $region84: #{bert_classifier_forward.1} parent=1 // pred_region
      _
    $region85: #{bert_classifier_forward.1} parent=1 // pred_fallthru
      _
    %v71 = vld [vmem:[%s1] sm:$0xff]
    %v72 = vld [vmem:[%s1 + $0x8] sm:$0xff]
    %v73 = vld [vmem:[%s3] sm:$0x1]
    %v74 = vld [vmem:[%s4] sm:$0x1]
    %vm75 = vcmask 261120
    %v76 = vsel %vm75, %v71, 0.0
    %77 = vadd.xlane.f32.xlu0 %v76
    %v78 = vpop.xlane.xlu0 %77
    %v79 = vsel %vm75, %v72, 0.0
    %80 = vadd.xlane.f32.xlu0 %v79
    %v81 = vpop.xlane.xlu0 %80
    %v82 = vrcp.pop 32.0
    %v83 = vmul.f32 %v78, %v82
    %v84 = vmul.f32 %v81, %v82
    %v85 = vsub.f32 %v71, %v83
    %v86 = vsub.f32 %v72, %v84
    %v87 = vmul.f32 %v85, %v85
    %v88 = vmul.f32 %v86, %v86
    %v89 = vsel %vm75, %v87, 0.0
    %90 = vadd.xlane.f32.xlu0 %v89
    %v91 = vpop.xlane.xlu0 %90
    %v92 = vsel %vm75, %v88, 0.0
    %93 = vadd.xlane.f32.xlu0 %v92
    %v94 = vpop.xlane.xlu0 %93
    %v95 = vmul.f32 %v91, %v82
    %v96 = vmul.f32 %v94, %v82
    %v97 = vadd.f32 %v95, 1e-12
    %v98 = vadd.f32 %v96, 1e-12
    %v99 = vrsqrt.pop %v97
    %v100 = vrsqrt.pop %v98
    %v101 = vmul.f32 %v85, %v99
    %v102 = vmul.f32 %v86, %v100
    %v104 = vlaneseq
    %v105 = vshrl.u32 %v104, 7
    %v106 = vsub.s32 0, %v105
    %v107 = vrot.slane %v73, %v106
    %v109 = vmul.f32 %v101, %v107
    %v110 = vmul.f32 %v102, %v107
    %v112 = vlaneseq
    %v113 = vshrl.u32 %v112, 7
    %v114 = vsub.s32 0, %v113
    %v115 = vrot.slane %v74, %v114
    %v117 = vadd.f32 %v109, %v115
    %v118 = vadd.f32 %v110, %v115
    %v119 = vld [vmem:[%s2] sm:$0x3]
    %v120 = vld [vmem:[%s5] sm:$0xf]
    %v121 = vld [vmem:[%s5 + $0x4] sm:$0xf]
    %v122 = vld [vmem:[%s5 + $0x8] sm:$0xf]
    %v123 = vld [vmem:[%s5 + $0xc] sm:$0xf]
    %v124 = vpack.c.bf16 %v118, %v117
    %v125 = vld [vmem:[%s6] sm:$0x1]
    %v127 = vlaneseq
    %v128 = vshrl.u32 %v127, 7
    %v129 = vsub.s32 0, %v128
    %v130 = vrot.slane %v125, %v129
    %v136 = vunpack.c.l.b16 %v120
    %v137 = vunpack.c.l.b16 %v121
    %v138 = vunpack.c.l.b16 %v122
    %v139 = vunpack.c.l.b16 %v123
    %v140 = vpack.c.b16 %v137, %v136
    %v141 = vpack.c.b16 %v139, %v138
    %v145 = vsel %vm75, %v124, 0
    %147 = vmatprep.subr.bf16.mxu0 0
    %148 = vmatpush1.bf16.msra.mxu0 %v140
    %149 = vmatprep.subr.bf16.mxu0 0
    %150 = vmatpush1.bf16.msra.mxu0 %v141
    %151 = vmatprep.subr.bf16.mxu0 0
    %152 = vmatpush1.bf16.msra.mxu0 0
    %153 = vmatprep.subr.bf16.mxu0 0
    %154 = vmatpush1.bf16.msra.mxu0 0
    %155 = vmatprep.subr.bf16.mxu0 0
    %156 = vmatpush1.bf16.msra.mxu0 0
    %157 = vmatprep.subr.bf16.mxu0 0
    %158 = vmatpush1.bf16.msra.mxu0 0
    %159 = vmatprep.subr.bf16.mxu0 0
    %160 = vmatpush1.bf16.msra.mxu0 0
    %161 = vmatprep.subr.bf16.mxu0 0
    %162 = vmatpush1.bf16.msra.mxu0 0
    %163 = vmatprep.subr.bf16.mxu0 0
    %164 = vmatpush1.bf16.msra.mxu0 0
    %165 = vmatprep.subr.bf16.mxu0 0
    %166 = vmatpush1.bf16.msra.mxu0 0
    %167 = vmatprep.subr.bf16.mxu0 0
    %168 = vmatpush1.bf16.msra.mxu0 0
    %169 = vmatprep.subr.bf16.mxu0 0
    %170 = vmatpush1.bf16.msra.mxu0 0
    %171 = vmatprep.subr.bf16.mxu0 0
    %172 = vmatpush1.bf16.msra.mxu0 0
    %173 = vmatprep.subr.bf16.mxu0 0
    %174 = vmatpush1.bf16.msra.mxu0 0
    %175 = vmatprep.subr.bf16.mxu0 0
    %176 = vmatpush1.bf16.msra.mxu0 0
    %177 = vmatprep.subr.bf16.mxu0 0
    %178 = vmatpush1.bf16.msra.mxu0 0
    %179 = vmatprep.mubr.bf16.mxu0 0
    %180 = vmatmul.mubr.bf16.gmra.mrb[0].mxu0 %v145
    %v181 = vpop.f32.mrb[0].mxu0
    %v182 = vadd.f32 %v130, %v181
    %v183 = vpop.f32.mrb[0].mxu0
    %v184 = vpop.f32.mrb[0].mxu0
    %v185 = vadd.f32 %v130, %v184
    %v186 = vpop.f32.mrb[0].mxu0
    %187 = vdwg.mxu0
    %v188 = vld [vmem:[%s7] sm:$0xf]
    %v189 = vld [vmem:[%s7 + $0x4] sm:$0xf]
    %v190 = vld [vmem:[%s7 + $0x8] sm:$0xf]
    %v191 = vld [vmem:[%s7 + $0xc] sm:$0xf]
    %v192 = vpack.c.bf16 %v182, %v182
    %194 = vrot.lane.b32.xlu0 %v192, 96
    %v195 = vpop.permute.xlu0 %194
    %vm196 = vcmask 64512
    %v198 = vsel %vm196, %v192, 0
    %v201 = vsel %vm196, %v195, 0
    %203 = vmatprep.subr.bf16.mxu0 0
    %204 = vmatpush1.bf16.xpose.msra.mxu0 %v201
    %205 = vmatprep.subr.bf16.mxu0 0
    %206 = vmatpush1.bf16.xpose.msra.mxu0 0
    %207 = vmatprep.subr.bf16.mxu0 0
    %208 = vmatpush1.bf16.xpose.msra.mxu0 0
    %209 = vmatprep.subr.bf16.mxu0 0
    %210 = vmatpush1.bf16.xpose.msra.mxu0 0
    %211 = vmatprep.subr.bf16.mxu0 0
    %212 = vmatpush1.bf16.xpose.msra.mxu0 0
    %213 = vmatprep.subr.bf16.mxu0 0
    %214 = vmatpush1.bf16.xpose.msra.mxu0 0
    %215 = vmatprep.subr.bf16.mxu0 0
    %216 = vmatpush1.bf16.xpose.msra.mxu0 0
    %217 = vmatprep.subr.bf16.mxu0 0
    %218 = vmatpush1.bf16.xpose.msra.mxu0 0
    %219 = vmatprep.subr.bf16.mxu0 0
    %220 = vmatpush1.bf16.xpose.msra.mxu0 0
    %221 = vmatprep.subr.bf16.mxu0 0
    %222 = vmatpush1.bf16.xpose.msra.mxu0 0
    %223 = vmatprep.subr.bf16.mxu0 0
    %224 = vmatpush1.bf16.xpose.msra.mxu0 0
    %225 = vmatprep.subr.bf16.mxu0 0
    %226 = vmatpush1.bf16.xpose.msra.mxu0 0
    %227 = vmatprep.subr.bf16.mxu0 0
    %228 = vmatpush1.bf16.xpose.msra.mxu0 0
    %229 = vmatprep.subr.bf16.mxu0 0
    %230 = vmatpush1.bf16.xpose.msra.mxu0 0
    %231 = vmatprep.subr.bf16.mxu0 0
    %232 = vmatpush1.bf16.xpose.msra.mxu0 0
    %233 = vmatprep.subr.bf16.mxu0 0
    %234 = vmatpush1.bf16.xpose.msra.mxu0 0
    %235 = vmatprep.mubr.bf16.mxu0 0
    %236 = vmatmul.mubr.bf16.gmra.mrb[0].mxu0 %v198
    %v237 = vpop.f32.mrb[0].mxu0
    %v238 = vadd.f32 0.0, %v237
    %v239 = vpop.f32.mrb[0].mxu0
    %v240 = vpop.f32.mrb[0].mxu0
    %v241 = vpop.f32.mrb[0].mxu0
    %242 = vdwg.mxu0
    %v243 = vmul.f32 %v238, 0.35355338
    %v244 = vlaneseq
    %v245 = vshrl.u32 %v244, 7
    %v246 = vsub.s32 0, %v245
    %v247 = vrot.slane %v119, %v246
    %v248 = vadd.f32 %v243, %v247
    %v249 = vsel %vm196, %v248, -inf
    %250 = vmax.xlane.f32.xlu0 %v249
    %v251 = vpop.xlane.xlu0 %250
    %v252 = vsub.f32 %v248, %v251
    %v253 = vmul.f32 %v252, 1.442695
    %v254 = vpow.pop %v253
    %v255 = vsel %vm196, %v254, 0.0
    %256 = vadd.xlane.f32.xlu0 %v255
    %v257 = vpop.xlane.xlu0 %256
    %v258 = vrcp.pop %v257
    %v259 = vmul.f32 %v254, %v258
    %v260 = vpack.c.bf16 %v259, %v259
    %261 = vrot.lane.b32.xlu0 %v192, 64
    %v262 = vpop.permute.xlu0 %261
    %v264 = vsel %vm196, %v260, 0
    %vm266 = vcmask 1043456
    %v268 = vsel %vm266, %v262, 0
    %270 = vmatprep.subr.bf16.mxu0 0
    %271 = vmatpush1.bf16.msra.mxu0 %v268
    %272 = vmatprep.subr.bf16.mxu0 0
    %273 = vmatpush1.bf16.msra.mxu0 0
    %274 = vmatprep.subr.bf16.mxu0 0
    %275 = vmatpush1.bf16.msra.mxu0 0
    %276 = vmatprep.subr.bf16.mxu0 0
    %277 = vmatpush1.bf16.msra.mxu0 0
    %278 = vmatprep.subr.bf16.mxu0 0
    %279 = vmatpush1.bf16.msra.mxu0 0
    %280 = vmatprep.subr.bf16.mxu0 0
    %281 = vmatpush1.bf16.msra.mxu0 0
    %282 = vmatprep.subr.bf16.mxu0 0
    %283 = vmatpush1.bf16.msra.mxu0 0
    %284 = vmatprep.subr.bf16.mxu0 0
    %285 = vmatpush1.bf16.msra.mxu0 0
    %286 = vmatprep.subr.bf16.mxu0 0
    %287 = vmatpush1.bf16.msra.mxu0 0
    %288 = vmatprep.subr.bf16.mxu0 0
    %289 = vmatpush1.bf16.msra.mxu0 0
    %290 = vmatprep.subr.bf16.mxu0 0
    %291 = vmatpush1.bf16.msra.mxu0 0
    %292 = vmatprep.subr.bf16.mxu0 0
    %293 = vmatpush1.bf16.msra.mxu0 0
    %294 = vmatprep.subr.bf16.mxu0 0
    %295 = vmatpush1.bf16.msra.mxu0 0
    %296 = vmatprep.subr.bf16.mxu0 0
    %297 = vmatpush1.bf16.msra.mxu0 0
    %298 = vmatprep.subr.bf16.mxu0 0
    %299 = vmatpush1.bf16.msra.mxu0 0
    %300 = vmatprep.subr.bf16.mxu0 0
    %301 = vmatpush1.bf16.msra.mxu0 0
    %302 = vmatprep.mubr.bf16.mxu0 0
    %303 = vmatmul.mubr.bf16.gmra.mrb[0].mxu0 %v264
    %v304 = vpop.f32.mrb[0].mxu0
    %v305 = vadd.f32 0.0, %v304
    %v306 = vpop.f32.mrb[0].mxu0
    %v307 = vpop.f32.mrb[0].mxu0
    %v308 = vpop.f32.mrb[0].mxu0
    %309 = vdwg.mxu0
    %v310 = vpack.c.bf16 %v305, %v305
    %311 = vrot.lane.b32.xlu0 %v192, 120
    %v312 = vpop.permute.xlu0 %311
    %313 = vrot.lane.b32.xlu0 %v192, 88
    %v314 = vpop.permute.xlu0 %313
    %v316 = vsel %vm196, %v312, 0
    %v319 = vsel %vm196, %v314, 0
    %321 = vmatprep.subr.bf16.mxu0 0
    %322 = vmatpush1.bf16.xpose.msra.mxu0 %v319
    %323 = vmatprep.subr.bf16.mxu0 0
    %324 = vmatpush1.bf16.xpose.msra.mxu0 0
    %325 = vmatprep.subr.bf16.mxu0 0
    %326 = vmatpush1.bf16.xpose.msra.mxu0 0
    %327 = vmatprep.subr.bf16.mxu0 0
    %328 = vmatpush1.bf16.xpose.msra.mxu0 0
    %329 = vmatprep.subr.bf16.mxu0 0
    %330 = vmatpush1.bf16.xpose.msra.mxu0 0
    %331 = vmatprep.subr.bf16.mxu0 0
    %332 = vmatpush1.bf16.xpose.msra.mxu0 0
    %333 = vmatprep.subr.bf16.mxu0 0
    %334 = vmatpush1.bf16.xpose.msra.mxu0 0
    %335 = vmatprep.subr.bf16.mxu0 0
    %336 = vmatpush1.bf16.xpose.msra.mxu0 0
    %337 = vmatprep.subr.bf16.mxu0 0
    %338 = vmatpush1.bf16.xpose.msra.mxu0 0
    %339 = vmatprep.subr.bf16.mxu0 0
    %340 = vmatpush1.bf16.xpose.msra.mxu0 0
    %341 = vmatprep.subr.bf16.mxu0 0
    %342 = vmatpush1.bf16.xpose.msra.mxu0 0
    %343 = vmatprep.subr.bf16.mxu0 0
    %344 = vmatpush1.bf16.xpose.msra.mxu0 0
    %345 = vmatprep.subr.bf16.mxu0 0
    %346 = vmatpush1.bf16.xpose.msra.mxu0 0
    %347 = vmatprep.subr.bf16.mxu0 0
    %348 = vmatpush1.bf16.xpose.msra.mxu0 0
    %349 = vmatprep.subr.bf16.mxu0 0
    %350 = vmatpush1.bf16.xpose.msra.mxu0 0
    %351 = vmatprep.subr.bf16.mxu0 0
    %352 = vmatpush1.bf16.xpose.msra.mxu0 0
    %353 = vmatprep.mubr.bf16.mxu0 0
    %354 = vmatmul.mubr.bf16.gmra.mrb[0].mxu0 %v316
    %v355 = vpop.f32.mrb[0].mxu0
    %v356 = vadd.f32 0.0, %v355
    %v357 = vpop.f32.mrb[0].mxu0
    %v358 = vpop.f32.mrb[0].mxu0
    %v359 = vpop.f32.mrb[0].mxu0
    %360 = vdwg.mxu0
    %v361 = vmul.f32 %v356, 0.35355338
    %v362 = vadd.f32 %v361, %v247
    %v363 = vsel %vm196, %v362, -inf
    %364 = vmax.xlane.f32.xlu0 %v363
    %v365 = vpop.xlane.xlu0 %364
    %v366 = vsub.f32 %v362, %v365
    %v367 = vmul.f32 %v366, 1.442695
    %v368 = vpow.pop %v367
    %v369 = vsel %vm196, %v368, 0.0
    %370 = vadd.xlane.f32.xlu0 %v369
    %v371 = vpop.xlane.xlu0 %370
    %v372 = vrcp.pop %v371
    %v373 = vmul.f32 %v368, %v372
    %v374 = vpack.c.bf16 %v373, %v373
    %375 = vrot.lane.b32.xlu0 %v192, 56
    %v376 = vpop.permute.xlu0 %375
    %v378 = vsel %vm196, %v374, 0
    %v381 = vsel %vm266, %v376, 0
    %383 = vmatprep.subr.bf16.mxu0 0
    %384 = vmatpush1.bf16.msra.mxu0 %v381
    %385 = vmatprep.subr.bf16.mxu0 0
    %386 = vmatpush1.bf16.msra.mxu0 0
    %387 = vmatprep.subr.bf16.mxu0 0
    %388 = vmatpush1.bf16.msra.mxu0 0
    %389 = vmatprep.subr.bf16.mxu0 0
    %390 = vmatpush1.bf16.msra.mxu0 0
    %391 = vmatprep.subr.bf16.mxu0 0
    %392 = vmatpush1.bf16.msra.mxu0 0
    %393 = vmatprep.subr.bf16.mxu0 0
    %394 = vmatpush1.bf16.msra.mxu0 0
    %395 = vmatprep.subr.bf16.mxu0 0
    %396 = vmatpush1.bf16.msra.mxu0 0
    %397 = vmatprep.subr.bf16.mxu0 0
    %398 = vmatpush1.bf16.msra.mxu0 0
    %399 = vmatprep.subr.bf16.mxu0 0
    %400 = vmatpush1.bf16.msra.mxu0 0
    %401 = vmatprep.subr.bf16.mxu0 0
    %402 = vmatpush1.bf16.msra.mxu0 0
    %403 = vmatprep.subr.bf16.mxu0 0
    %404 = vmatpush1.bf16.msra.mxu0 0
    %405 = vmatprep.subr.bf16.mxu0 0
    %406 = vmatpush1.bf16.msra.mxu0 0
    %407 = vmatprep.subr.bf16.mxu0 0
    %408 = vmatpush1.bf16.msra.mxu0 0
    %409 = vmatprep.subr.bf16.mxu0 0
    %410 = vmatpush1.bf16.msra.mxu0 0
    %411 = vmatprep.subr.bf16.mxu0 0
    %412 = vmatpush1.bf16.msra.mxu0 0
    %413 = vmatprep.subr.bf16.mxu0 0
    %414 = vmatpush1.bf16.msra.mxu0 0
    %415 = vmatprep.mubr.bf16.mxu0 0
    %416 = vmatmul.mubr.bf16.gmra.mrb[0].mxu0 %v378
    %v417 = vpop.f32.mrb[0].mxu0
    %v418 = vadd.f32 0.0, %v417
    %v419 = vpop.f32.mrb[0].mxu0
    %v420 = vpop.f32.mrb[0].mxu0
    %v421 = vpop.f32.mrb[0].mxu0
    %422 = vdwg.mxu0
    %v423 = vpack.c.bf16 %v418, %v418
    %v425 = vsel %vm196, %v423, 0
    %v428 = vsel %vm266, %v189, 0
    %430 = vmatprep.subr.bf16.mxu0 0
    %431 = vmatpush1.bf16.msra.mxu0 %v428
    %432 = vmatprep.subr.bf16.mxu0 0
    %433 = vmatpush1.bf16.msra.mxu0 0
    %434 = vmatprep.subr.bf16.mxu0 0
    %435 = vmatpush1.bf16.msra.mxu0 0
    %436 = vmatprep.subr.bf16.mxu0 0
    %437 = vmatpush1.bf16.msra.mxu0 0
    %438 = vmatprep.subr.bf16.mxu0 0
    %439 = vmatpush1.bf16.msra.mxu0 0
    %440 = vmatprep.subr.bf16.mxu0 0
    %441 = vmatpush1.bf16.msra.mxu0 0
    %442 = vmatprep.subr.bf16.mxu0 0
    %443 = vmatpush1.bf16.msra.mxu0 0
    %444 = vmatprep.subr.bf16.mxu0 0
    %445 = vmatpush1.bf16.msra.mxu0 0
    %446 = vmatprep.subr.bf16.mxu0 0
    %447 = vmatpush1.bf16.msra.mxu0 0
    %448 = vmatprep.subr.bf16.mxu0 0
    %449 = vmatpush1.bf16.msra.mxu0 0
    %450 = vmatprep.subr.bf16.mxu0 0
    %451 = vmatpush1.bf16.msra.mxu0 0
    %452 = vmatprep.subr.bf16.mxu0 0
    %453 = vmatpush1.bf16.msra.mxu0 0
    %454 = vmatprep.subr.bf16.mxu0 0
    %455 = vmatpush1.bf16.msra.mxu0 0
    %456 = vmatprep.subr.bf16.mxu0 0
    %457 = vmatpush1.bf16.msra.mxu0 0
    %458 = vmatprep.subr.bf16.mxu0 0
    %459 = vmatpush1.bf16.msra.mxu0 0
    %460 = vmatprep.subr.bf16.mxu0 0
    %461 = vmatpush1.bf16.msra.mxu0 0
    %462 = vmatprep.mubr.bf16.mxu0 0
    %463 = vmatmul.mubr.bf16.gmra.mrb[0].mxu0 %v425
    %v464 = vpop.f32.mrb[0].mxu0
    %v465 = vadd.f32 0.0, %v464
    %v466 = vpop.f32.mrb[0].mxu0
    %v467 = vpop.f32.mrb[0].mxu0
    %v468 = vpop.f32.mrb[0].mxu0
    %469 = vdwg.mxu0
    %v471 = vsel %vm196, %v310, 0
    %v474 = vsel %vm266, %v188, 0
    %476 = vmatprep.subr.bf16.mxu0 0
    %477 = vmatpush1.bf16.msra.mxu0 %v474
    %478 = vmatprep.subr.bf16.mxu0 0
    %479 = vmatpush1.bf16.msra.mxu0 0
    %480 = vmatprep.subr.bf16.mxu0 0
    %481 = vmatpush1.bf16.msra.mxu0 0
    %482 = vmatprep.subr.bf16.mxu0 0
    %483 = vmatpush1.bf16.msra.mxu0 0
    %484 = vmatprep.subr.bf16.mxu0 0
    %485 = vmatpush1.bf16.msra.mxu0 0
    %486 = vmatprep.subr.bf16.mxu0 0
    %487 = vmatpush1.bf16.msra.mxu0 0
    %488 = vmatprep.subr.bf16.mxu0 0
    %489 = vmatpush1.bf16.msra.mxu0 0
    %490 = vmatprep.subr.bf16.mxu0 0
    %491 = vmatpush1.bf16.msra.mxu0 0
    %492 = vmatprep.subr.bf16.mxu0 0
    %493 = vmatpush1.bf16.msra.mxu0 0
    %494 = vmatprep.subr.bf16.mxu0 0
    %495 = vmatpush1.bf16.msra.mxu0 0
    %496 = vmatprep.subr.bf16.mxu0 0
    %497 = vmatpush1.bf16.msra.mxu0 0
    %498 = vmatprep.subr.bf16.mxu0 0
    %499 = vmatpush1.bf16.msra.mxu0 0
    %500 = vmatprep.subr.bf16.mxu0 0
    %501 = vmatpush1.bf16.msra.mxu0 0
    %502 = vmatprep.subr.bf16.mxu0 0
    %503 = vmatpush1.bf16.msra.mxu0 0
    %504 = vmatprep.subr.bf16.mxu0 0
    %505 = vmatpush1.bf16.msra.mxu0 0
    %506 = vmatprep.subr.bf16.mxu0 0
    %507 = vmatpush1.bf16.msra.mxu0 0
    %508 = vmatprep.mubr.bf16.mxu0 0
    %509 = vmatmul.mubr.bf16.gmra.mrb[0].mxu0 %v471
    %v510 = vpop.f32.mrb[0].mxu0
    %v511 = vadd.f32 %v465, %v510
    %v512 = vpop.f32.mrb[0].mxu0
    %v513 = vpop.f32.mrb[0].mxu0
    %v514 = vpop.f32.mrb[0].mxu0
    %515 = vdwg.mxu0
    %516 = vrot.lane.b32.xlu0 %v192, 112
    %v517 = vpop.permute.xlu0 %516
    %518 = vrot.lane.b32.xlu0 %v192, 80
    %v519 = vpop.permute.xlu0 %518
    %v521 = vsel %vm196, %v517, 0
    %v524 = vsel %vm196, %v519, 0
    %526 = vmatprep.subr.bf16.mxu0 0
    %527 = vmatpush1.bf16.xpose.msra.mxu0 %v524
    %528 = vmatprep.subr.bf16.mxu0 0
    %529 = vmatpush1.bf16.xpose.msra.mxu0 0
    %530 = vmatprep.subr.bf16.mxu0 0
    %531 = vmatpush1.bf16.xpose.msra.mxu0 0
    %532 = vmatprep.subr.bf16.mxu0 0
    %533 = vmatpush1.bf16.xpose.msra.mxu0 0
    %534 = vmatprep.subr.bf16.mxu0 0
    %535 = vmatpush1.bf16.xpose.msra.mxu0 0
    %536 = vmatprep.subr.bf16.mxu0 0
    %537 = vmatpush1.bf16.xpose.msra.mxu0 0
    %538 = vmatprep.subr.bf16.mxu0 0
    %539 = vmatpush1.bf16.xpose.msra.mxu0 0
    %540 = vmatprep.subr.bf16.mxu0 0
    %541 = vmatpush1.bf16.xpose.msra.mxu0 0
    %542 = vmatprep.subr.bf16.mxu0 0
    %543 = vmatpush1.bf16.xpose.msra.mxu0 0
    %544 = vmatprep.subr.bf16.mxu0 0
    %545 = vmatpush1.bf16.xpose.msra.mxu0 0
    %546 = vmatprep.subr.bf16.mxu0 0
    %547 = vmatpush1.bf16.xpose.msra.mxu0 0
    %548 = vmatprep.subr.bf16.mxu0 0
    %549 = vmatpush1.bf16.xpose.msra.mxu0 0
    %550 = vmatprep.subr.bf16.mxu0 0
    %551 = vmatpush1.bf16.xpose.msra.mxu0 0
    %552 = vmatprep.subr.bf16.mxu0 0
    %553 = vmatpush1.bf16.xpose.msra.mxu0 0
    %554 = vmatprep.subr.bf16.mxu0 0
    %555 = vmatpush1.bf16.xpose.msra.mxu0 0
    %556 = vmatprep.subr.bf16.mxu0 0
    %557 = vmatpush1.bf16.xpose.msra.mxu0 0
    %558 = vmatprep.mubr.bf16.mxu0 0
    %559 = vmatmul.mubr.bf16.gmra.mrb[0].mxu0 %v521
    %v560 = vpop.f32.mrb[0].mxu0
    %v561 = vadd.f32 0.0, %v560
    %v562 = vpop.f32.mrb[0].mxu0
    %v563 = vpop.f32.mrb[0].mxu0
    %v564 = vpop.f32.mrb[0].mxu0
    %565 = vdwg.mxu0
    %v566 = vmul.f32 %v561, 0.35355338
    %v567 = vadd.f32 %v566, %v247
    %v568 = vsel %vm196, %v567, -inf
    %569 = vmax.xlane.f32.xlu0 %v568
    %v570 = vpop.xlane.xlu0 %569
    %v571 = vsub.f32 %v567, %v570
    %v572 = vmul.f32 %v571, 1.442695
    %v573 = vpow.pop %v572
    %v574 = vsel %vm196, %v573, 0.0
    %575 = vadd.xlane.f32.xlu0 %v574
    %v576 = vpop.xlane.xlu0 %575
    %v577 = vrcp.pop %v576
    %v578 = vmul.f32 %v573, %v577
    %v579 = vpack.c.bf16 %v578, %v578
    %580 = vrot.lane.b32.xlu0 %v192, 48
    %v581 = vpop.permute.xlu0 %580
    %v583 = vsel %vm196, %v579, 0
    %v586 = vsel %vm266, %v581, 0
    %588 = vmatprep.subr.bf16.mxu0 0
    %589 = vmatpush1.bf16.msra.mxu0 %v586
    %590 = vmatprep.subr.bf16.mxu0 0
    %591 = vmatpush1.bf16.msra.mxu0 0
    %592 = vmatprep.subr.bf16.mxu0 0
    %593 = vmatpush1.bf16.msra.mxu0 0
    %594 = vmatprep.subr.bf16.mxu0 0
    %595 = vmatpush1.bf16.msra.mxu0 0
    %596 = vmatprep.subr.bf16.mxu0 0
    %597 = vmatpush1.bf16.msra.mxu0 0
    %598 = vmatprep.subr.bf16.mxu0 0
    %599 = vmatpush1.bf16.msra.mxu0 0
    %600 = vmatprep.subr.bf16.mxu0 0
    %601 = vmatpush1.bf16.msra.mxu0 0
    %602 = vmatprep.subr.bf16.mxu0 0
    %603 = vmatpush1.bf16.msra.mxu0 0
    %604 = vmatprep.subr.bf16.mxu0 0
    %605 = vmatpush1.bf16.msra.mxu0 0
    %606 = vmatprep.subr.bf16.mxu0 0
    %607 = vmatpush1.bf16.msra.mxu0 0
    %608 = vmatprep.subr.bf16.mxu0 0
    %609 = vmatpush1.bf16.msra.mxu0 0
    %610 = vmatprep.subr.bf16.mxu0 0
    %611 = vmatpush1.bf16.msra.mxu0 0
    %612 = vmatprep.subr.bf16.mxu0 0
    %613 = vmatpush1.bf16.msra.mxu0 0
    %614 = vmatprep.subr.bf16.mxu0 0
    %615 = vmatpush1.bf16.msra.mxu0 0
    %616 = vmatprep.subr.bf16.mxu0 0
    %617 = vmatpush1.bf16.msra.mxu0 0
    %618 = vmatprep.subr.bf16.mxu0 0
    %619 = vmatpush1.bf16.msra.mxu0 0
    %620 = vmatprep.mubr.bf16.mxu0 0
    %621 = vmatmul.mubr.bf16.gmra.mrb[0].mxu0 %v583
    %v622 = vpop.f32.mrb[0].mxu0
    %v623 = vadd.f32 0.0, %v622
    %v624 = vpop.f32.mrb[0].mxu0
    %v625 = vpop.f32.mrb[0].mxu0
    %v626 = vpop.f32.mrb[0].mxu0
    %627 = vdwg.mxu0
    %v628 = vpack.c.bf16 %v623, %v623
    %v630 = vsel %vm196, %v628, 0
    %v633 = vsel %vm266, %v190, 0
    %635 = vmatprep.subr.bf16.mxu0 0
    %636 = vmatpush1.bf16.msra.mxu0 %v633
    %637 = vmatprep.subr.bf16.mxu0 0
    %638 = vmatpush1.bf16.msra.mxu0 0
    %639 = vmatprep.subr.bf16.mxu0 0
    %640 = vmatpush1.bf16.msra.mxu0 0
    %641 = vmatprep.subr.bf16.mxu0 0
    %642 = vmatpush1.bf16.msra.mxu0 0
    %643 = vmatprep.subr.bf16.mxu0 0
    %644 = vmatpush1.bf16.msra.mxu0 0
    %645 = vmatprep.subr.bf16.mxu0 0
    %646 = vmatpush1.bf16.msra.mxu0 0
    %647 = vmatprep.subr.bf16.mxu0 0
    %648 = vmatpush1.bf16.msra.mxu0 0
    %649 = vmatprep.subr.bf16.mxu0 0
    %650 = vmatpush1.bf16.msra.mxu0 0
    %651 = vmatprep.subr.bf16.mxu0 0
    %652 = vmatpush1.bf16.msra.mxu0 0
    %653 = vmatprep.subr.bf16.mxu0 0
    %654 = vmatpush1.bf16.msra.mxu0 0
    %655 = vmatprep.subr.bf16.mxu0 0
    %656 = vmatpush1.bf16.msra.mxu0 0
    %657 = vmatprep.subr.bf16.mxu0 0
    %658 = vmatpush1.bf16.msra.mxu0 0
    %659 = vmatprep.subr.bf16.mxu0 0
    %660 = vmatpush1.bf16.msra.mxu0 0
    %661 = vmatprep.subr.bf16.mxu0 0
    %662 = vmatpush1.bf16.msra.mxu0 0
    %663 = vmatprep.subr.bf16.mxu0 0
    %664 = vmatpush1.bf16.msra.mxu0 0
    %665 = vmatprep.subr.bf16.mxu0 0
    %666 = vmatpush1.bf16.msra.mxu0 0
    %667 = vmatprep.mubr.bf16.mxu0 0
    %668 = vmatmul.mubr.bf16.gmra.mrb[0].mxu0 %v630
    %v669 = vpop.f32.mrb[0].mxu0
    %v670 = vadd.f32 0.0, %v669
    %v671 = vpop.f32.mrb[0].mxu0
    %v672 = vpop.f32.mrb[0].mxu0
    %v673 = vpop.f32.mrb[0].mxu0
    %674 = vdwg.mxu0
    %v675 = vadd.f32 %v511, %v670
    %676 = vrot.lane.b32.xlu0 %v192, 104
    %v677 = vpop.permute.xlu0 %676
    %678 = vrot.lane.b32.xlu0 %v192, 72
    %v679 = vpop.permute.xlu0 %678
    %v681 = vsel %vm196, %v677, 0
    %v684 = vsel %vm196, %v679, 0
    %686 = vmatprep.subr.bf16.mxu0 0
    %687 = vmatpush1.bf16.xpose.msra.mxu0 %v684
    %688 = vmatprep.subr.bf16.mxu0 0
    %689 = vmatpush1.bf16.xpose.msra.mxu0 0
    %690 = vmatprep.subr.bf16.mxu0 0
    %691 = vmatpush1.bf16.xpose.msra.mxu0 0
    %692 = vmatprep.subr.bf16.mxu0 0
    %693 = vmatpush1.bf16.xpose.msra.mxu0 0
    %694 = vmatprep.subr.bf16.mxu0 0
    %695 = vmatpush1.bf16.xpose.msra.mxu0 0
    %696 = vmatprep.subr.bf16.mxu0 0
    %697 = vmatpush1.bf16.xpose.msra.mxu0 0
    %698 = vmatprep.subr.bf16.mxu0 0
    %699 = vmatpush1.bf16.xpose.msra.mxu0 0
    %700 = vmatprep.subr.bf16.mxu0 0
    %701 = vmatpush1.bf16.xpose.msra.mxu0 0
    %702 = vmatprep.subr.bf16.mxu0 0
    %703 = vmatpush1.bf16.xpose.msra.mxu0 0
    %704 = vmatprep.subr.bf16.mxu0 0
    %705 = vmatpush1.bf16.xpose.msra.mxu0 0
    %706 = vmatprep.subr.bf16.mxu0 0
    %707 = vmatpush1.bf16.xpose.msra.mxu0 0
    %708 = vmatprep.subr.bf16.mxu0 0
    %709 = vmatpush1.bf16.xpose.msra.mxu0 0
    %710 = vmatprep.subr.bf16.mxu0 0
    %711 = vmatpush1.bf16.xpose.msra.mxu0 0
    %712 = vmatprep.subr.bf16.mxu0 0
    %713 = vmatpush1.bf16.xpose.msra.mxu0 0
    %714 = vmatprep.subr.bf16.mxu0 0
    %715 = vmatpush1.bf16.xpose.msra.mxu0 0
    %716 = vmatprep.subr.bf16.mxu0 0
    %717 = vmatpush1.bf16.xpose.msra.mxu0 0
    %718 = vmatprep.mubr.bf16.mxu0 0
    %719 = vmatmul.mubr.bf16.gmra.mrb[0].mxu0 %v681
    %v720 = vpop.f32.mrb[0].mxu0
    %v721 = vadd.f32 0.0, %v720
    %v722 = vpop.f32.mrb[0].mxu0
    %v723 = vpop.f32.mrb[0].mxu0
    %v724 = vpop.f32.mrb[0].mxu0
    %725 = vdwg.mxu0
    %v726 = vmul.f32 %v721, 0.35355338
    %v727 = vadd.f32 %v726, %v247
    %v728 = vsel %vm196, %v727, -inf
    %729 = vmax.xlane.f32.xlu0 %v728
    %v730 = vpop.xlane.xlu0 %729
    %v731 = vsub.f32 %v727, %v730
    %v732 = vmul.f32 %v731, 1.442695
    %v733 = vpow.pop %v732
    %v734 = vsel %vm196, %v733, 0.0
    %735 = vadd.xlane.f32.xlu0 %v734
    %v736 = vpop.xlane.xlu0 %735
    %v737 = vrcp.pop %v736
    %v738 = vmul.f32 %v733, %v737
    %v739 = vpack.c.bf16 %v738, %v738
    %740 = vrot.lane.b32.xlu0 %v192, 40
    %v741 = vpop.permute.xlu0 %740
    %v743 = vsel %vm196, %v739, 0
    %v746 = vsel %vm266, %v741, 0
    %748 = vmatprep.subr.bf16.mxu0 0
    %749 = vmatpush1.bf16.msra.mxu0 %v746
    %750 = vmatprep.subr.bf16.mxu0 0
    %751 = vmatpush1.bf16.msra.mxu0 0
    %752 = vmatprep.subr.bf16.mxu0 0
    %753 = vmatpush1.bf16.msra.mxu0 0
    %754 = vmatprep.subr.bf16.mxu0 0
    %755 = vmatpush1.bf16.msra.mxu0 0
    %756 = vmatprep.subr.bf16.mxu0 0
    %757 = vmatpush1.bf16.msra.mxu0 0
    %758 = vmatprep.subr.bf16.mxu0 0
    %759 = vmatpush1.bf16.msra.mxu0 0
    %760 = vmatprep.subr.bf16.mxu0 0
    %761 = vmatpush1.bf16.msra.mxu0 0
    %762 = vmatprep.subr.bf16.mxu0 0
    %763 = vmatpush1.bf16.msra.mxu0 0
    %764 = vmatprep.subr.bf16.mxu0 0
    %765 = vmatpush1.bf16.msra.mxu0 0
    %766 = vmatprep.subr.bf16.mxu0 0
    %767 = vmatpush1.bf16.msra.mxu0 0
    %768 = vmatprep.subr.bf16.mxu0 0
    %769 = vmatpush1.bf16.msra.mxu0 0
    %770 = vmatprep.subr.bf16.mxu0 0
    %771 = vmatpush1.bf16.msra.mxu0 0
    %772 = vmatprep.subr.bf16.mxu0 0
    %773 = vmatpush1.bf16.msra.mxu0 0
    %774 = vmatprep.subr.bf16.mxu0 0
    %775 = vmatpush1.bf16.msra.mxu0 0
    %776 = vmatprep.subr.bf16.mxu0 0
    %777 = vmatpush1.bf16.msra.mxu0 0
    %778 = vmatprep.subr.bf16.mxu0 0
    %779 = vmatpush1.bf16.msra.mxu0 0
    %780 = vmatprep.mubr.bf16.mxu0 0
    %781 = vmatmul.mubr.bf16.gmra.mrb[0].mxu0 %v743
    %v782 = vpop.f32.mrb[0].mxu0
    %v783 = vadd.f32 0.0, %v782
    %v784 = vpop.f32.mrb[0].mxu0
    %v785 = vpop.f32.mrb[0].mxu0
    %v786 = vpop.f32.mrb[0].mxu0
    %787 = vdwg.mxu0
    %v788 = vpack.c.bf16 %v783, %v783
    %v790 = vsel %vm196, %v788, 0
    %v793 = vsel %vm266, %v191, 0
    %795 = vmatprep.subr.bf16.mxu0 0
    %796 = vmatpush1.bf16.msra.mxu0 %v793
    %797 = vmatprep.subr.bf16.mxu0 0
    %798 = vmatpush1.bf16.msra.mxu0 0
    %799 = vmatprep.subr.bf16.mxu0 0
    %800 = vmatpush1.bf16.msra.mxu0 0
    %801 = vmatprep.subr.bf16.mxu0 0
    %802 = vmatpush1.bf16.msra.mxu0 0
    %803 = vmatprep.subr.bf16.mxu0 0
    %804 = vmatpush1.bf16.msra.mxu0 0
    %805 = vmatprep.subr.bf16.mxu0 0
    %806 = vmatpush1.bf16.msra.mxu0 0
    %807 = vmatprep.subr.bf16.mxu0 0
    %808 = vmatpush1.bf16.msra.mxu0 0
    %809 = vmatprep.subr.bf16.mxu0 0
    %810 = vmatpush1.bf16.msra.mxu0 0
    %811 = vmatprep.subr.bf16.mxu0 0
    %812 = vmatpush1.bf16.msra.mxu0 0
    %813 = vmatprep.subr.bf16.mxu0 0
    %814 = vmatpush1.bf16.msra.mxu0 0
    %815 = vmatprep.subr.bf16.mxu0 0
    %816 = vmatpush1.bf16.msra.mxu0 0
    %817 = vmatprep.subr.bf16.mxu0 0
    %818 = vmatpush1.bf16.msra.mxu0 0
    %819 = vmatprep.subr.bf16.mxu0 0
    %820 = vmatpush1.bf16.msra.mxu0 0
    %821 = vmatprep.subr.bf16.mxu0 0
    %822 = vmatpush1.bf16.msra.mxu0 0
    %823 = vmatprep.subr.bf16.mxu0 0
    %824 = vmatpush1.bf16.msra.mxu0 0
    %825 = vmatprep.subr.bf16.mxu0 0
    %826 = vmatpush1.bf16.msra.mxu0 0
    %827 = vmatprep.mubr.bf16.mxu0 0
    %828 = vmatmul.mubr.bf16.gmra.mrb[0].mxu0 %v790
    %v829 = vpop.f32.mrb[0].mxu0
    %v830 = vadd.f32 0.0, %v829
    %v831 = vpop.f32.mrb[0].mxu0
    %v832 = vpop.f32.mrb[0].mxu0
    %v833 = vpop.f32.mrb[0].mxu0
    %834 = vdwg.mxu0
    %v835 = vadd.f32 %v675, %v830
    %v836 = vpack.c.bf16 %v185, %v185
    %838 = vrot.lane.b32.xlu0 %v836, 96
    %v839 = vpop.permute.xlu0 %838
    %v841 = vsel %vm196, %v836, 0
    %v844 = vsel %vm196, %v839, 0
    %846 = vmatprep.subr.bf16.mxu0 0
    %847 = vmatpush1.bf16.xpose.msra.mxu0 %v844
    %848 = vmatprep.subr.bf16.mxu0 0
    %849 = vmatpush1.bf16.xpose.msra.mxu0 0
    %850 = vmatprep.subr.bf16.mxu0 0
    %851 = vmatpush1.bf16.xpose.msra.mxu0 0
    %852 = vmatprep.subr.bf16.mxu0 0
    %853 = vmatpush1.bf16.xpose.msra.mxu0 0
    %854 = vmatprep.subr.bf16.mxu0 0
    %855 = vmatpush1.bf16.xpose.msra.mxu0 0
    %856 = vmatprep.subr.bf16.mxu0 0
    %857 = vmatpush1.bf16.xpose.msra.mxu0 0
    %858 = vmatprep.subr.bf16.mxu0 0
    %859 = vmatpush1.bf16.xpose.msra.mxu0 0
    %860 = vmatprep.subr.bf16.mxu0 0
    %861 = vmatpush1.bf16.xpose.msra.mxu0 0
    %862 = vmatprep.subr.bf16.mxu0 0
    %863 = vmatpush1.bf16.xpose.msra.mxu0 0
    %864 = vmatprep.subr.bf16.mxu0 0
    %865 = vmatpush1.bf16.xpose.msra.mxu0 0
    %866 = vmatprep.subr.bf16.mxu0 0
    %867 = vmatpush1.bf16.xpose.msra.mxu0 0
    %868 = vmatprep.subr.bf16.mxu0 0
    %869 = vmatpush1.bf16.xpose.msra.mxu0 0
    %870 = vmatprep.subr.bf16.mxu0 0
    %871 = vmatpush1.bf16.xpose.msra.mxu0 0
    %872 = vmatprep.subr.bf16.mxu0 0
    %873 = vmatpush1.bf16.xpose.msra.mxu0 0
    %874 = vmatprep.subr.bf16.mxu0 0
    %875 = vmatpush1.bf16.xpose.msra.mxu0 0
    %876 = vmatprep.subr.bf16.mxu0 0
    %877 = vmatpush1.bf16.xpose.msra.mxu0 0
    %878 = vmatprep.mubr.bf16.mxu0 0
    %879 = vmatmul.mubr.bf16.gmra.mrb[0].mxu0 %v841
    %v880 = vpop.f32.mrb[0].mxu0
    %v881 = vadd.f32 0.0, %v880
    %v882 = vpop.f32.mrb[0].mxu0
    %v883 = vpop.f32.mrb[0].mxu0
    %v884 = vpop.f32.mrb[0].mxu0
    %885 = vdwg.mxu0
    %v886 = vmul.f32 %v881, 0.35355338
    %v887 = vlaneseq
    %v888 = vshrl.u32 %v887, 7
    %v889 = vsub.s32 1, %v888
    %v890 = vrot.slane %v119, %v889
    %v891 = vadd.f32 %v886, %v890
    %v892 = vsel %vm196, %v891, -inf
    %893 = vmax.xlane.f32.xlu0 %v892
    %v894 = vpop.xlane.xlu0 %893
    %v895 = vsub.f32 %v891, %v894
    %v896 = vmul.f32 %v895, 1.442695
    %v897 = vpow.pop %v896
    %v898 = vsel %vm196, %v897, 0.0
    %899 = vadd.xlane.f32.xlu0 %v898
    %v900 = vpop.xlane.xlu0 %899
    %v901 = vrcp.pop %v900
    %v902 = vmul.f32 %v897, %v901
    %v903 = vpack.c.bf16 %v902, %v902
    %904 = vrot.lane.b32.xlu0 %v836, 64
    %v905 = vpop.permute.xlu0 %904
    %v907 = vsel %vm196, %v903, 0
    %v910 = vsel %vm266, %v905, 0
    %912 = vmatprep.subr.bf16.mxu0 0
    %913 = vmatpush1.bf16.msra.mxu0 %v910
    %914 = vmatprep.subr.bf16.mxu0 0
    %915 = vmatpush1.bf16.msra.mxu0 0
    %916 = vmatprep.subr.bf16.mxu0 0
    %917 = vmatpush1.bf16.msra.mxu0 0
    %918 = vmatprep.subr.bf16.mxu0 0
    %919 = vmatpush1.bf16.msra.mxu0 0
    %920 = vmatprep.subr.bf16.mxu0 0
    %921 = vmatpush1.bf16.msra.mxu0 0
    %922 = vmatprep.subr.bf16.mxu0 0
    %923 = vmatpush1.bf16.msra.mxu0 0
    %924 = vmatprep.subr.bf16.mxu0 0
    %925 = vmatpush1.bf16.msra.mxu0 0
    %926 = vmatprep.subr.bf16.mxu0 0
    %927 = vmatpush1.bf16.msra.mxu0 0
    %928 = vmatprep.subr.bf16.mxu0 0
    %929 = vmatpush1.bf16.msra.mxu0 0
    %930 = vmatprep.subr.bf16.mxu0 0
    %931 = vmatpush1.bf16.msra.mxu0 0
    %932 = vmatprep.subr.bf16.mxu0 0
    %933 = vmatpush1.bf16.msra.mxu0 0
    %934 = vmatprep.subr.bf16.mxu0 0
    %935 = vmatpush1.bf16.msra.mxu0 0
    %936 = vmatprep.subr.bf16.mxu0 0
    %937 = vmatpush1.bf16.msra.mxu0 0
    %938 = vmatprep.subr.bf16.mxu0 0
    %939 = vmatpush1.bf16.msra.mxu0 0
    %940 = vmatprep.subr.bf16.mxu0 0
    %941 = vmatpush1.bf16.msra.mxu0 0
    %942 = vmatprep.subr.bf16.mxu0 0
    %943 = vmatpush1.bf16.msra.mxu0 0
    %944 = vmatprep.mubr.bf16.mxu0 0
    %945 = vmatmul.mubr.bf16.gmra.mrb[0].mxu0 %v907
    %v946 = vpop.f32.mrb[0].mxu0
    %v947 = vadd.f32 0.0, %v946
    %v948 = vpop.f32.mrb[0].mxu0
    %v949 = vpop.f32.mrb[0].mxu0
    %v950 = vpop.f32.mrb[0].mxu0
    %951 = vdwg.mxu0
    %v952 = vpack.c.bf16 %v947, %v947
    %953 = vrot.lane.b32.xlu0 %v836, 120
    %v954 = vpop.permute.xlu0 %953
    %955 = vrot.lane.b32.xlu0 %v836, 88
    %v956 = vpop.permute.xlu0 %955
    %v958 = vsel %vm196, %v954, 0
    %v961 = vsel %vm196, %v956, 0
    %963 = vmatprep.subr.bf16.mxu0 0
    %964 = vmatpush1.bf16.xpose.msra.mxu0 %v961
    %965 = vmatprep.subr.bf16.mxu0 0
    %966 = vmatpush1.bf16.xpose.msra.mxu0 0
    %967 = vmatprep.subr.bf16.mxu0 0
    %968 = vmatpush1.bf16.xpose.msra.mxu0 0
    %969 = vmatprep.subr.bf16.mxu0 0
    %970 = vmatpush1.bf16.xpose.msra.mxu0 0
    %971 = vmatprep.subr.bf16.mxu0 0
    %972 = vmatpush1.bf16.xpose.msra.mxu0 0
    %973 = vmatprep.subr.bf16.mxu0 0
    %974 = vmatpush1.bf16.xpose.msra.mxu0 0
    %975 = vmatprep.subr.bf16.mxu0 0
    %976 = vmatpush1.bf16.xpose.msra.mxu0 0
    %977 = vmatprep.subr.bf16.mxu0 0
    %978 = vmatpush1.bf16.xpose.msra.mxu0 0
    %979 = vmatprep.subr.bf16.mxu0 0
    %980 = vmatpush1.bf16.xpose.msra.mxu0 0
    %981 = vmatprep.subr.bf16.mxu0 0
    %982 = vmatpush1.bf16.xpose.msra.mxu0 0
    %983 = vmatprep.subr.bf16.mxu0 0
    %984 = vmatpush1.bf16.xpose.msra.mxu0 0
    %985 = vmatprep.subr.bf16.mxu0 0
    %986 = vmatpush1.bf16.xpose.msra.mxu0 0
    %987 = vmatprep.subr.bf16.mxu0 0
    %988 = vmatpush1.bf16.xpose.msra.mxu0 0
    %989 = vmatprep.subr.bf16.mxu0 0
    %990 = vmatpush1.bf16.xpose.msra.mxu0 0
    %991 = vmatprep.subr.bf16.mxu0 0
    %992 = vmatpush1.bf16.xpose.msra.mxu0 0
    %993 = vmatprep.subr.bf16.mxu0 0
    %994 = vmatpush1.bf16.xpose.msra.mxu0 0
    %995 = vmatprep.mubr.bf16.mxu0 0
    %996 = vmatmul.mubr.bf16.gmra.mrb[0].mxu0 %v958
    %v997 = vpop.f32.mrb[0].mxu0
    %v998 = vadd.f32 0.0, %v997
    %v999 = vpop.f32.mrb[0].mxu0
    %v1000 = vpop.f32.mrb[0].mxu0
    %v1001 = vpop.f32.mrb[0].mxu0
    %1002 = vdwg.mxu0
    %v1003 = vmul.f32 %v998, 0.35355338
    %v1004 = vadd.f32 %v1003, %v890
    %v1005 = vsel %vm196, %v1004, -inf
    %1006 = vmax.xlane.f32.xlu0 %v1005
    %v1007 = vpop.xlane.xlu0 %1006
    %v1008 = vsub.f32 %v1004, %v1007
    %v1009 = vmul.f32 %v1008, 1.442695
    %v1010 = vpow.pop %v1009
    %v1011 = vsel %vm196, %v1010, 0.0
    %1012 = vadd.xlane.f32.xlu0 %v1011
    %v1013 = vpop.xlane.xlu0 %1012
    %v1014 = vrcp.pop %v1013
    %v1015 = vmul.f32 %v1010, %v1014
    %v1016 = vpack.c.bf16 %v1015, %v1015
    %1017 = vrot.lane.b32.xlu0 %v836, 56
    %v1018 = vpop.permute.xlu0 %1017
    %v1020 = vsel %vm196, %v1016, 0
    %v1023 = vsel %vm266, %v1018, 0
    %1025 = vmatprep.subr.bf16.mxu0 0
    %1026 = vmatpush1.bf16.msra.mxu0 %v1023
    %1027 = vmatprep.subr.bf16.mxu0 0
    %1028 = vmatpush1.bf16.msra.mxu0 0
    %1029 = vmatprep.subr.bf16.mxu0 0
    %1030 = vmatpush1.bf16.msra.mxu0 0
    %1031 = vmatprep.subr.bf16.mxu0 0
    %1032 = vmatpush1.bf16.msra.mxu0 0
    %1033 = vmatprep.subr.bf16.mxu0 0
    %1034 = vmatpush1.bf16.msra.mxu0 0
    %1035 = vmatprep.subr.bf16.mxu0 0
    %1036 = vmatpush1.bf16.msra.mxu0 0
    %1037 = vmatprep.subr.bf16.mxu0 0
    %1038 = vmatpush1.bf16.msra.mxu0 0
    %1039 = vmatprep.subr.bf16.mxu0 0
    %1040 = vmatpush1.bf16.msra.mxu0 0
    %1041 = vmatprep.subr.bf16.mxu0 0
    %1042 = vmatpush1.bf16.msra.mxu0 0
    %1043 = vmatprep.subr.bf16.mxu0 0
    %1044 = vmatpush1.bf16.msra.mxu0 0
    %1045 = vmatprep.subr.bf16.mxu0 0
    %1046 = vmatpush1.bf16.msra.mxu0 0
    %1047 = vmatprep.subr.bf16.mxu0 0
    %1048 = vmatpush1.bf16.msra.mxu0 0
    %1049 = vmatprep.subr.bf16.mxu0 0
    %1050 = vmatpush1.bf16.msra.mxu0 0
    %1051 = vmatprep.subr.bf16.mxu0 0
    %1052 = vmatpush1.bf16.msra.mxu0 0
    %1053 = vmatprep.subr.bf16.mxu0 0
    %1054 = vmatpush1.bf16.msra.mxu0 0
    %1055 = vmatprep.subr.bf16.mxu0 0
    %1056 = vmatpush1.bf16.msra.mxu0 0
    %1057 = vmatprep.mubr.bf16.mxu0 0
    %1058 = vmatmul.mubr.bf16.gmra.mrb[0].mxu0 %v1020
    %v1059 = vpop.f32.mrb[0].mxu0
    %v1060 = vadd.f32 0.0, %v1059
    %v1061 = vpop.f32.mrb[0].mxu0
    %v1062 = vpop.f32.mrb[0].mxu0
    %v1063 = vpop.f32.mrb[0].mxu0
    %1064 = vdwg.mxu0
    %v1065 = vpack.c.bf16 %v1060, %v1060
    %v1067 = vsel %vm196, %v1065, 0
    %1069 = vmatprep.subr.bf16.mxu0 0
    %1070 = vmatpush1.bf16.msra.mxu0 %v428
    %1071 = vmatprep.subr.bf16.mxu0 0
    %1072 = vmatpush1.bf16.msra.mxu0 0
    %1073 = vmatprep.subr.bf16.mxu0 0
    %1074 = vmatpush1.bf16.msra.mxu0 0
    %1075 = vmatprep.subr.bf16.mxu0 0
    %1076 = vmatpush1.bf16.msra.mxu0 0
    %1077 = vmatprep.subr.bf16.mxu0 0
    %1078 = vmatpush1.bf16.msra.mxu0 0
    %1079 = vmatprep.subr.bf16.mxu0 0
    %1080 = vmatpush1.bf16.msra.mxu0 0
    %1081 = vmatprep.subr.bf16.mxu0 0
    %1082 = vmatpush1.bf16.msra.mxu0 0
    %1083 = vmatprep.subr.bf16.mxu0 0
    %1084 = vmatpush1.bf16.msra.mxu0 0
    %1085 = vmatprep.subr.bf16.mxu0 0
    %1086 = vmatpush1.bf16.msra.mxu0 0
    %1087 = vmatprep.subr.bf16.mxu0 0
    %1088 = vmatpush1.bf16.msra.mxu0 0
    %1089 = vmatprep.subr.bf16.mxu0 0
    %1090 = vmatpush1.bf16.msra.mxu0 0
    %1091 = vmatprep.subr.bf16.mxu0 0
    %1092 = vmatpush1.bf16.msra.mxu0 0
    %1093 = vmatprep.subr.bf16.mxu0 0
    %1094 = vmatpush1.bf16.msra.mxu0 0
    %1095 = vmatprep.subr.bf16.mxu0 0
    %1096 = vmatpush1.bf16.msra.mxu0 0
    %1097 = vmatprep.subr.bf16.mxu0 0
    %1098 = vmatpush1.bf16.msra.mxu0 0
    %1099 = vmatprep.subr.bf16.mxu0 0
    %1100 = vmatpush1.bf16.msra.mxu0 0
    %1101 = vmatprep.mubr.bf16.mxu0 0
    %1102 = vmatmul.mubr.bf16.gmra.mrb[0].mxu0 %v1067
    %v1103 = vpop.f32.mrb[0].mxu0
    %v1104 = vadd.f32 0.0, %v1103
    %v1105 = vpop.f32.mrb[0].mxu0
    %v1106 = vpop.f32.mrb[0].mxu0
    %v1107 = vpop.f32.mrb[0].mxu0
    %1108 = vdwg.mxu0
    %v1110 = vsel %vm196, %v952, 0
    %1112 = vmatprep.subr.bf16.mxu0 0
    %1113 = vmatpush1.bf16.msra.mxu0 %v474
    %1114 = vmatprep.subr.bf16.mxu0 0
    %1115 = vmatpush1.bf16.msra.mxu0 0
    %1116 = vmatprep.subr.bf16.mxu0 0
    %1117 = vmatpush1.bf16.msra.mxu0 0
    %1118 = vmatprep.subr.bf16.mxu0 0
    %1119 = vmatpush1.bf16.msra.mxu0 0
    %1120 = vmatprep.subr.bf16.mxu0 0
    %1121 = vmatpush1.bf16.msra.mxu0 0
    %1122 = vmatprep.subr.bf16.mxu0 0
    %1123 = vmatpush1.bf16.msra.mxu0 0
    %1124 = vmatprep.subr.bf16.mxu0 0
    %1125 = vmatpush1.bf16.msra.mxu0 0
    %1126 = vmatprep.subr.bf16.mxu0 0
    %1127 = vmatpush1.bf16.msra.mxu0 0
    %1128 = vmatprep.subr.bf16.mxu0 0
    %1129 = vmatpush1.bf16.msra.mxu0 0
    %1130 = vmatprep.subr.bf16.mxu0 0
    %1131 = vmatpush1.bf16.msra.mxu0 0
    %1132 = vmatprep.subr.bf16.mxu0 0
    %1133 = vmatpush1.bf16.msra.mxu0 0
    %1134 = vmatprep.subr.bf16.mxu0 0
    %1135 = vmatpush1.bf16.msra.mxu0 0
    %1136 = vmatprep.subr.bf16.mxu0 0
    %1137 = vmatpush1.bf16.msra.mxu0 0
    %1138 = vmatprep.subr.bf16.mxu0 0
    %1139 = vmatpush1.bf16.msra.mxu0 0
    %1140 = vmatprep.subr.bf16.mxu0 0
    %1141 = vmatpush1.bf16.msra.mxu0 0
    %1142 = vmatprep.subr.bf16.mxu0 0
    %1143 = vmatpush1.bf16.msra.mxu0 0
    %1144 = vmatprep.mubr.bf16.mxu0 0
    %1145 = vmatmul.mubr.bf16.gmra.mrb[0].mxu0 %v1110
    %v1146 = vpop.f32.mrb[0].mxu0
    %v1147 = vadd.f32 %v1104, %v1146
    %v1148 = vpop.f32.mrb[0].mxu0
    %v1149 = vpop.f32.mrb[0].mxu0
    %v1150 = vpop.f32.mrb[0].mxu0
    %1151 = vdwg.mxu0
    %1152 = vrot.lane.b32.xlu0 %v836, 112
    %v1153 = vpop.permute.xlu0 %1152
    %1154 = vrot.lane.b32.xlu0 %v836, 80
    %v1155 = vpop.permute.xlu0 %1154
    %v1157 = vsel %vm196, %v1153, 0
    %v1160 = vsel %vm196, %v1155, 0
    %1162 = vmatprep.subr.bf16.mxu0 0
    %1163 = vmatpush1.bf16.xpose.msra.mxu0 %v1160
    %1164 = vmatprep.subr.bf16.mxu0 0
    %1165 = vmatpush1.bf16.xpose.msra.mxu0 0
    %1166 = vmatprep.subr.bf16.mxu0 0
    %1167 = vmatpush1.bf16.xpose.msra.mxu0 0
    %1168 = vmatprep.subr.bf16.mxu0 0
    %1169 = vmatpush1.bf16.xpose.msra.mxu0 0
    %1170 = vmatprep.subr.bf16.mxu0 0
    %1171 = vmatpush1.bf16.xpose.msra.mxu0 0
    %1172 = vmatprep.subr.bf16.mxu0 0
    %1173 = vmatpush1.bf16.xpose.msra.mxu0 0
    %1174 = vmatprep.subr.bf16.mxu0 0
    %1175 = vmatpush1.bf16.xpose.msra.mxu0 0
    %1176 = vmatprep.subr.bf16.mxu0 0
    %1177 = vmatpush1.bf16.xpose.msra.mxu0 0
    %1178 = vmatprep.subr.bf16.mxu0 0
    %1179 = vmatpush1.bf16.xpose.msra.mxu0 0
    %1180 = vmatprep.subr.bf16.mxu0 0
    %1181 = vmatpush1.bf16.xpose.msra.mxu0 0
    %1182 = vmatprep.subr.bf16.mxu0 0
    %1183 = vmatpush1.bf16.xpose.msra.mxu0 0
    %1184 = vmatprep.subr.bf16.mxu0 0
    %1185 = vmatpush1.bf16.xpose.msra.mxu0 0
    %1186 = vmatprep.subr.bf16.mxu0 0
    %1187 = vmatpush1.bf16.xpose.msra.mxu0 0
    %1188 = vmatprep.subr.bf16.mxu0 0
    %1189 = vmatpush1.bf16.xpose.msra.mxu0 0
    %1190 = vmatprep.subr.bf16.mxu0 0
    %1191 = vmatpush1.bf16.xpose.msra.mxu0 0
    %1192 = vmatprep.subr.bf16.mxu0 0
    %1193 = vmatpush1.bf16.xpose.msra.mxu0 0
    %1194 = vmatprep.mubr.bf16.mxu0 0
    %1195 = vmatmul.mubr.bf16.gmra.mrb[0].mxu0 %v1157
    %v1196 = vpop.f32.mrb[0].mxu0
    %v1197 = vadd.f32 0.0, %v1196
    %v1198 = vpop.f32.mrb[0].mxu0
    %v1199 = vpop.f32.mrb[0].mxu0
    %v1200 = vpop.f32.mrb[0].mxu0
    %1201 = vdwg.mxu0
    %v1202 = vmul.f32 %v1197, 0.35355338
    %v1203 = vadd.f32 %v1202, %v890
    %v1204 = vsel %vm196, %v1203, -inf
    %1205 = vmax.xlane.f32.xlu0 %v1204
    %v1206 = vpop.xlane.xlu0 %1205
    %v1207 = vsub.f32 %v1203, %v1206
    %v1208 = vmul.f32 %v1207, 1.442695
    %v1209 = vpow.pop %v1208
    %v1210 = vsel %vm196, %v1209, 0.0
    %1211 = vadd.xlane.f32.xlu0 %v1210
    %v1212 = vpop.xlane.xlu0 %1211
    %v1213 = vrcp.pop %v1212
    %v1214 = vmul.f32 %v1209, %v1213
    %v1215 = vpack.c.bf16 %v1214, %v1214
    %1216 = vrot.lane.b32.xlu0 %v836, 48
    %v1217 = vpop.permute.xlu0 %1216
    %v1219 = vsel %vm196, %v1215, 0
    %v1222 = vsel %vm266, %v1217, 0
    %1224 = vmatprep.subr.bf16.mxu0 0
    %1225 = vmatpush1.bf16.msra.mxu0 %v1222
    %1226 = vmatprep.subr.bf16.mxu0 0
    %1227 = vmatpush1.bf16.msra.mxu0 0
    %1228 = vmatprep.subr.bf16.mxu0 0
    %1229 = vmatpush1.bf16.msra.mxu0 0
    %1230 = vmatprep.subr.bf16.mxu0 0
    %1231 = vmatpush1.bf16.msra.mxu0 0
    %1232 = vmatprep.subr.bf16.mxu0 0
    %1233 = vmatpush1.bf16.msra.mxu0 0
    %1234 = vmatprep.subr.bf16.mxu0 0
    %1235 = vmatpush1.bf16.msra.mxu0 0
    %1236 = vmatprep.subr.bf16.mxu0 0
    %1237 = vmatpush1.bf16.msra.mxu0 0
    %1238 = vmatprep.subr.bf16.mxu0 0
    %1239 = vmatpush1.bf16.msra.mxu0 0
    %1240 = vmatprep.subr.bf16.mxu0 0
    %1241 = vmatpush1.bf16.msra.mxu0 0
    %1242 = vmatprep.subr.bf16.mxu0 0
    %1243 = vmatpush1.bf16.msra.mxu0 0
    %1244 = vmatprep.subr.bf16.mxu0 0
    %1245 = vmatpush1.bf16.msra.mxu0 0
    %1246 = vmatprep.subr.bf16.mxu0 0
    %1247 = vmatpush1.bf16.msra.mxu0 0
    %1248 = vmatprep.subr.bf16.mxu0 0
    %1249 = vmatpush1.bf16.msra.mxu0 0
    %1250 = vmatprep.subr.bf16.mxu0 0
    %1251 = vmatpush1.bf16.msra.mxu0 0
    %1252 = vmatprep.subr.bf16.mxu0 0
    %1253 = vmatpush1.bf16.msra.mxu0 0
    %1254 = vmatprep.subr.bf16.mxu0 0
    %1255 = vmatpush1.bf16.msra.mxu0 0
    %1256 = vmatprep.mubr.bf16.mxu0 0
    %1257 = vmatmul.mubr.bf16.gmra.mrb[0].mxu0 %v1219
    %v1258 = vpop.f32.mrb[0].mxu0
    %v1259 = vadd.f32 0.0, %v1258
    %v1260 = vpop.f32.mrb[0].mxu0
    %v1261 = vpop.f32.mrb[0].mxu0
    %v1262 = vpop.f32.mrb[0].mxu0
    %1263 = vdwg.mxu0
    %v1264 = vpack.c.bf16 %v1259, %v1259
    %v1266 = vsel %vm196, %v1264, 0
    %1268 = vmatprep.subr.bf16.mxu0 0
    %1269 = vmatpush1.bf16.msra.mxu0 %v633
    %1270 = vmatprep.subr.bf16.mxu0 0
    %1271 = vmatpush1.bf16.msra.mxu0 0
    %1272 = vmatprep.subr.bf16.mxu0 0
    %1273 = vmatpush1.bf16.msra.mxu0 0
    %1274 = vmatprep.subr.bf16.mxu0 0
    %1275 = vmatpush1.bf16.msra.mxu0 0
    %1276 = vmatprep.subr.bf16.mxu0 0
    %1277 = vmatpush1.bf16.msra.mxu0 0
    %1278 = vmatprep.subr.bf16.mxu0 0
    %1279 = vmatpush1.bf16.msra.mxu0 0
    %1280 = vmatprep.subr.bf16.mxu0 0
    %1281 = vmatpush1.bf16.msra.mxu0 0
    %1282 = vmatprep.subr.bf16.mxu0 0
    %1283 = vmatpush1.bf16.msra.mxu0 0
    %1284 = vmatprep.subr.bf16.mxu0 0
    %1285 = vmatpush1.bf16.msra.mxu0 0
    %1286 = vmatprep.subr.bf16.mxu0 0
    %1287 = vmatpush1.bf16.msra.mxu0 0
    %1288 = vmatprep.subr.bf16.mxu0 0
    %1289 = vmatpush1.bf16.msra.mxu0 0
    %1290 = vmatprep.subr.bf16.mxu0 0
    %1291 = vmatpush1.bf16.msra.mxu0 0
    %1292 = vmatprep.subr.bf16.mxu0 0
    %1293 = vmatpush1.bf16.msra.mxu0 0
    %1294 = vmatprep.subr.bf16.mxu0 0
    %1295 = vmatpush1.bf16.msra.mxu0 0
    %1296 = vmatprep.subr.bf16.mxu0 0
    %1297 = vmatpush1.bf16.msra.mxu0 0
    %1298 = vmatprep.subr.bf16.mxu0 0
    %1299 = vmatpush1.bf16.msra.mxu0 0
    %1300 = vmatprep.mubr.bf16.mxu0 0
    %1301 = vmatmul.mubr.bf16.gmra.mrb[0].mxu0 %v1266
    %v1302 = vpop.f32.mrb[0].mxu0
    %v1303 = vadd.f32 0.0, %v1302
    %v1304 = vpop.f32.mrb[0].mxu0
    %v1305 = vpop.f32.mrb[0].mxu0
    %v1306 = vpop.f32.mrb[0].mxu0
    %1307 = vdwg.mxu0
    %v1308 = vadd.f32 %v1147, %v1303
    %1309 = vrot.lane.b32.xlu0 %v836, 104
    %v1310 = vpop.permute.xlu0 %1309
    %1311 = vrot.lane.b32.xlu0 %v836, 72
    %v1312 = vpop.permute.xlu0 %1311
    %v1314 = vsel %vm196, %v1310, 0
    %v1317 = vsel %vm196, %v1312, 0
    %1319 = vmatprep.subr.bf16.mxu0 0
    %1320 = vmatpush1.bf16.xpose.msra.mxu0 %v1317
    %1321 = vmatprep.subr.bf16.mxu0 0
    %1322 = vmatpush1.bf16.xpose.msra.mxu0 0
    %1323 = vmatprep.subr.bf16.mxu0 0
    %1324 = vmatpush1.bf16.xpose.msra.mxu0 0
    %1325 = vmatprep.subr.bf16.mxu0 0
    %1326 = vmatpush1.bf16.xpose.msra.mxu0 0
    %1327 = vmatprep.subr.bf16.mxu0 0
    %1328 = vmatpush1.bf16.xpose.msra.mxu0 0
    %1329 = vmatprep.subr.bf16.mxu0 0
    %1330 = vmatpush1.bf16.xpose.msra.mxu0 0
    %1331 = vmatprep.subr.bf16.mxu0 0
    %1332 = vmatpush1.bf16.xpose.msra.mxu0 0
    %1333 = vmatprep.subr.bf16.mxu0 0
    %1334 = vmatpush1.bf16.xpose.msra.mxu0 0
    %1335 = vmatprep.subr.bf16.mxu0 0
    %1336 = vmatpush1.bf16.xpose.msra.mxu0 0
    %1337 = vmatprep.subr.bf16.mxu0 0
    %1338 = vmatpush1.bf16.xpose.msra.mxu0 0
    %1339 = vmatprep.subr.bf16.mxu0 0
    %1340 = vmatpush1.bf16.xpose.msra.mxu0 0
    %1341 = vmatprep.subr.bf16.mxu0 0
    %1342 = vmatpush1.bf16.xpose.msra.mxu0 0
    %1343 = vmatprep.subr.bf16.mxu0 0
    %1344 = vmatpush1.bf16.xpose.msra.mxu0 0
    %1345 = vmatprep.subr.bf16.mxu0 0
    %1346 = vmatpush1.bf16.xpose.msra.mxu0 0
    %1347 = vmatprep.subr.bf16.mxu0 0
    %1348 = vmatpush1.bf16.xpose.msra.mxu0 0
    %1349 = vmatprep.subr.bf16.mxu0 0
    %1350 = vmatpush1.bf16.xpose.msra.mxu0 0
    %1351 = vmatprep.mubr.bf16.mxu0 0
    %1352 = vmatmul.mubr.bf16.gmra.mrb[0].mxu0 %v1314
    %v1353 = vpop.f32.mrb[0].mxu0
    %v1354 = vadd.f32 0.0, %v1353
    %v1355 = vpop.f32.mrb[0].mxu0
    %v1356 = vpop.f32.mrb[0].mxu0
    %v1357 = vpop.f32.mrb[0].mxu0
    %1358 = vdwg.mxu0
    %v1359 = vmul.f32 %v1354, 0.35355338
    %v1360 = vadd.f32 %v1359, %v890
    %v1361 = vsel %vm196, %v1360, -inf
    %1362 = vmax.xlane.f32.xlu0 %v1361
    %v1363 = vpop.xlane.xlu0 %1362
    %v1364 = vsub.f32 %v1360, %v1363
    %v1365 = vmul.f32 %v1364, 1.442695
    %v1366 = vpow.pop %v1365
    %v1367 = vsel %vm196, %v1366, 0.0
    %1368 = vadd.xlane.f32.xlu0 %v1367
    %v1369 = vpop.xlane.xlu0 %1368
    %v1370 = vrcp.pop %v1369
    %v1371 = vmul.f32 %v1366, %v1370
    %v1372 = vpack.c.bf16 %v1371, %v1371
    %1373 = vrot.lane.b32.xlu0 %v836, 40
    %v1374 = vpop.permute.xlu0 %1373
    %v1376 = vsel %vm196, %v1372, 0
    %v1379 = vsel %vm266, %v1374, 0
    %1381 = vmatprep.subr.bf16.mxu0 0
    %1382 = vmatpush1.bf16.msra.mxu0 %v1379
    %1383 = vmatprep.subr.bf16.mxu0 0
    %1384 = vmatpush1.bf16.msra.mxu0 0
    %1385 = vmatprep.subr.bf16.mxu0 0
    %1386 = vmatpush1.bf16.msra.mxu0 0
    %1387 = vmatprep.subr.bf16.mxu0 0
    %1388 = vmatpush1.bf16.msra.mxu0 0
    %1389 = vmatprep.subr.bf16.mxu0 0
    %1390 = vmatpush1.bf16.msra.mxu0 0
    %1391 = vmatprep.subr.bf16.mxu0 0
    %1392 = vmatpush1.bf16.msra.mxu0 0
    %1393 = vmatprep.subr.bf16.mxu0 0
    %1394 = vmatpush1.bf16.msra.mxu0 0
    %1395 = vmatprep.subr.bf16.mxu0 0
    %1396 = vmatpush1.bf16.msra.mxu0 0
    %1397 = vmatprep.subr.bf16.mxu0 0
    %1398 = vmatpush1.bf16.msra.mxu0 0
    %1399 = vmatprep.subr.bf16.mxu0 0
    %1400 = vmatpush1.bf16.msra.mxu0 0
    %1401 = vmatprep.subr.bf16.mxu0 0
    %1402 = vmatpush1.bf16.msra.mxu0 0
    %1403 = vmatprep.subr.bf16.mxu0 0
    %1404 = vmatpush1.bf16.msra.mxu0 0
    %1405 = vmatprep.subr.bf16.mxu0 0
    %1406 = vmatpush1.bf16.msra.mxu0 0
    %1407 = vmatprep.subr.bf16.mxu0 0
    %1408 = vmatpush1.bf16.msra.mxu0 0
    %1409 = vmatprep.subr.bf16.mxu0 0
    %1410 = vmatpush1.bf16.msra.mxu0 0
    %1411 = vmatprep.subr.bf16.mxu0 0
    %1412 = vmatpush1.bf16.msra.mxu0 0
    %1413 = vmatprep.mubr.bf16.mxu0 0
    %1414 = vmatmul.mubr.bf16.gmra.mrb[0].mxu0 %v1376
    %v1415 = vpop.f32.mrb[0].mxu0
    %v1416 = vadd.f32 0.0, %v1415
    %v1417 = vpop.f32.mrb[0].mxu0
    %v1418 = vpop.f32.mrb[0].mxu0
    %v1419 = vpop.f32.mrb[0].mxu0
    %1420 = vdwg.mxu0
    %v1421 = vpack.c.bf16 %v1416, %v1416
    %v1423 = vsel %vm196, %v1421, 0
    %1425 = vmatprep.subr.bf16.mxu0 0
    %1426 = vmatpush1.bf16.msra.mxu0 %v793
    %1427 = vmatprep.subr.bf16.mxu0 0
    %1428 = vmatpush1.bf16.msra.mxu0 0
    %1429 = vmatprep.subr.bf16.mxu0 0
    %1430 = vmatpush1.bf16.msra.mxu0 0
    %1431 = vmatprep.subr.bf16.mxu0 0
    %1432 = vmatpush1.bf16.msra.mxu0 0
    %1433 = vmatprep.subr.bf16.mxu0 0
    %1434 = vmatpush1.bf16.msra.mxu0 0
    %1435 = vmatprep.subr.bf16.mxu0 0
    %1436 = vmatpush1.bf16.msra.mxu0 0
    %1437 = vmatprep.subr.bf16.mxu0 0
    %1438 = vmatpush1.bf16.msra.mxu0 0
    %1439 = vmatprep.subr.bf16.mxu0 0
    %1440 = vmatpush1.bf16.msra.mxu0 0
    %1441 = vmatprep.subr.bf16.mxu0 0
    %1442 = vmatpush1.bf16.msra.mxu0 0
    %1443 = vmatprep.subr.bf16.mxu0 0
    %1444 = vmatpush1.bf16.msra.mxu0 0
    %1445 = vmatprep.subr.bf16.mxu0 0
    %1446 = vmatpush1.bf16.msra.mxu0 0
    %1447 = vmatprep.subr.bf16.mxu0 0
    %1448 = vmatpush1.bf16.msra.mxu0 0
    %1449 = vmatprep.subr.bf16.mxu0 0
    %1450 = vmatpush1.bf16.msra.mxu0 0
    %1451 = vmatprep.subr.bf16.mxu0 0
    %1452 = vmatpush1.bf16.msra.mxu0 0
    %1453 = vmatprep.subr.bf16.mxu0 0
    %1454 = vmatpush1.bf16.msra.mxu0 0
    %1455 = vmatprep.subr.bf16.mxu0 0
    %1456 = vmatpush1.bf16.msra.mxu0 0
    %1457 = vmatprep.mubr.bf16.mxu0 0
    %1458 = vmatmul.mubr.bf16.gmra.mrb[0].mxu0 %v1423
    %v1459 = vpop.f32.mrb[0].mxu0
    %v1460 = vadd.f32 0.0, %v1459
    %v1461 = vpop.f32.mrb[0].mxu0
    %v1462 = vpop.f32.mrb[0].mxu0
    %v1463 = vpop.f32.mrb[0].mxu0
    %1464 = vdwg.mxu0
    %v1465 = vadd.f32 %v1308, %v1460
    %v1466 = vld [vmem:[%s8] sm:$0x1]
    %v1468 = vlaneseq
    %v1469 = vshrl.u32 %v1468, 7
    %v1470 = vsub.s32 0, %v1469
    %v1471 = vrot.slane %v1466, %v1470
    %v1473 = vadd.f32 %v835, %v1471
    %v1474 = vadd.f32 %v1465, %v1471
    %v1475 = vadd.f32 %v1473, %v117
    %v1476 = vadd.f32 %v1474, %v118
    %v1477 = vld [vmem:[%s9] sm:$0x1]
    %v1478 = vld [vmem:[%s10] sm:$0x1]
    %v1479 = vsel %vm75, %v1475, 0.0
    %1480 = vadd.xlane.f32.xlu0 %v1479
    %v1481 = vpop.xlane.xlu0 %1480
    %v1482 = vsel %vm75, %v1476, 0.0
    %1483 = vadd.xlane.f32.xlu0 %v1482
    %v1484 = vpop.xlane.xlu0 %1483
    %v1485 = vmul.f32 %v1481, %v82
    %v1486 = vmul.f32 %v1484, %v82
    %v1487 = vsub.f32 %v1475, %v1485
    %v1488 = vsub.f32 %v1476, %v1486
    %v1489 = vmul.f32 %v1487, %v1487
    %v1490 = vmul.f32 %v1488, %v1488
    %v1491 = vsel %vm75, %v1489, 0.0
    %1492 = vadd.xlane.f32.xlu0 %v1491
    %v1493 = vpop.xlane.xlu0 %1492
    %v1494 = vsel %vm75, %v1490, 0.0
    %1495 = vadd.xlane.f32.xlu0 %v1494
    %v1496 = vpop.xlane.xlu0 %1495
    %v1497 = vmul.f32 %v1493, %v82
    %v1498 = vmul.f32 %v1496, %v82
    %v1499 = vadd.f32 %v1497, 1e-12
    %v1500 = vadd.f32 %v1498, 1e-12
    %v1501 = vrsqrt.pop %v1499
    %v1502 = vrsqrt.pop %v1500
    %v1503 = vmul.f32 %v1487, %v1501
    %v1504 = vmul.f32 %v1488, %v1502
    %v1506 = vlaneseq
    %v1507 = vshrl.u32 %v1506, 7
    %v1508 = vsub.s32 0, %v1507
    %v1509 = vrot.slane %v1477, %v1508
    %v1511 = vmul.f32 %v1503, %v1509
    %v1512 = vmul.f32 %v1504, %v1509
    %v1514 = vlaneseq
    %v1515 = vshrl.u32 %v1514, 7
    %v1516 = vsub.s32 0, %v1515
    %v1517 = vrot.slane %v1478, %v1516
    %v1519 = vadd.f32 %v1511, %v1517
    %v1520 = vadd.f32 %v1512, %v1517
    %v1521 = vld [vmem:[%s11] sm:$0xf]
    %v1522 = vld [vmem:[%s11 + $0x4] sm:$0xf]
    %v1523 = vld [vmem:[%s11 + $0x8] sm:$0xf]
    %v1524 = vld [vmem:[%s11 + $0xc] sm:$0xf]
    %v1525 = vpack.c.bf16 %v1520, %v1519
    %v1526 = vld [vmem:[%s12] sm:$0x1]
    %v1528 = vlaneseq
    %v1529 = vshrl.u32 %v1528, 7
    %v1530 = vsub.s32 0, %v1529
    %v1531 = vrot.slane %v1526, %v1530
    %v1537 = vunpack.c.l.b16 %v1521
    %v1538 = vunpack.c.l.b16 %v1522
    %v1539 = vunpack.c.l.b16 %v1523
    %v1540 = vunpack.c.l.b16 %v1524
    %v1541 = vpack.c.b16 %v1538, %v1537
    %v1542 = vpack.c.b16 %v1540, %v1539
    %v1546 = vsel %vm75, %v1525, 0
    %1548 = vmatprep.subr.bf16.mxu0 0
    %1549 = vmatpush1.bf16.msra.mxu0 %v1541
    %1550 = vmatprep.subr.bf16.mxu0 0
    %1551 = vmatpush1.bf16.msra.mxu0 %v1542
    %1552 = vmatprep.subr.bf16.mxu0 0
    %1553 = vmatpush1.bf16.msra.mxu0 0
    %1554 = vmatprep.subr.bf16.mxu0 0
    %1555 = vmatpush1.bf16.msra.mxu0 0
    %1556 = vmatprep.subr.bf16.mxu0 0
    %1557 = vmatpush1.bf16.msra.mxu0 0
    %1558 = vmatprep.subr.bf16.mxu0 0
    %1559 = vmatpush1.bf16.msra.mxu0 0
    %1560 = vmatprep.subr.bf16.mxu0 0
    %1561 = vmatpush1.bf16.msra.mxu0 0
    %1562 = vmatprep.subr.bf16.mxu0 0
    %1563 = vmatpush1.bf16.msra.mxu0 0
    %1564 = vmatprep.subr.bf16.mxu0 0
    %1565 = vmatpush1.bf16.msra.mxu0 0
    %1566 = vmatprep.subr.bf16.mxu0 0
    %1567 = vmatpush1.bf16.msra.mxu0 0
    %1568 = vmatprep.subr.bf16.mxu0 0
    %1569 = vmatpush1.bf16.msra.mxu0 0
    %1570 = vmatprep.subr.bf16.mxu0 0
    %1571 = vmatpush1.bf16.msra.mxu0 0
    %1572 = vmatprep.subr.bf16.mxu0 0
    %1573 = vmatpush1.bf16.msra.mxu0 0
    %1574 = vmatprep.subr.bf16.mxu0 0
    %1575 = vmatpush1.bf16.msra.mxu0 0
    %1576 = vmatprep.subr.bf16.mxu0 0
    %1577 = vmatpush1.bf16.msra.mxu0 0
    %1578 = vmatprep.subr.bf16.mxu0 0
    %1579 = vmatpush1.bf16.msra.mxu0 0
    %1580 = vmatprep.mubr.bf16.mxu0 0
    %1581 = vmatmul.mubr.bf16.gmra.mrb[0].mxu0 %v1546
    %v1582 = vpop.f32.mrb[0].mxu0
    %v1583 = vadd.f32 %v1531, %v1582
    %v1584 = vpop.f32.mrb[0].mxu0
    %v1585 = vpop.f32.mrb[0].mxu0
    %v1586 = vadd.f32 %v1531, %v1585
    %v1587 = vpop.f32.mrb[0].mxu0
    %1588 = vdwg.mxu0
    %v1589 = vmul.f32 %v1583, 0.5
    %v1590 = vmul.f32 %v1586, 0.5
    %v1591 = vmul.f32 %v1583, 0.044715
    %v1592 = vmul.f32 %v1586, 0.044715
    %v1593 = vmul.f32 %v1591, %v1583
    %v1594 = vmul.f32 %v1592, %v1586
    %v1595 = vmul.f32 %v1593, %v1583
    %v1596 = vmul.f32 %v1594, %v1586
    %v1597 = vadd.f32 %v1583, %v1595
    %v1598 = vadd.f32 %v1586, %v1596
    %v1599 = vmul.f32 %v1597, 0.7978846
    %v1600 = vmul.f32 %v1598, 0.7978846
    %v1601 = vtanh.pop %v1599
    %v1602 = vtanh.pop %v1600
    %v1603 = vadd.f32 %v1601, 1.0
    %v1604 = vadd.f32 %v1602, 1.0
    %v1605 = vmul.f32 %v1589, %v1603
    %v1606 = vmul.f32 %v1590, %v1604
    %v1607 = vld [vmem:[%s13] sm:$0xf]
    %v1608 = vld [vmem:[%s13 + $0x4] sm:$0xf]
    %v1609 = vld [vmem:[%s13 + $0x8] sm:$0xf]
    %v1610 = vld [vmem:[%s13 + $0xc] sm:$0xf]
    %v1611 = vld [vmem:[%s13 + $0x10] sm:$0xf]
    %v1612 = vld [vmem:[%s13 + $0x14] sm:$0xf]
    %v1613 = vld [vmem:[%s13 + $0x18] sm:$0xf]
    %v1614 = vld [vmem:[%s13 + $0x1c] sm:$0xf]
    %v1615 = vpack.c.bf16 %v1606, %v1605
    %v1616 = vld [vmem:[%s14] sm:$0x1]
    %v1618 = vlaneseq
    %v1619 = vshrl.u32 %v1618, 7
    %v1620 = vsub.s32 0, %v1619
    %v1621 = vrot.slane %v1616, %v1620
    %v1631 = vunpack.c.l.b16 %v1607
    %v1632 = vunpack.c.l.b16 %v1608
    %v1633 = vunpack.c.l.b16 %v1609
    %v1634 = vunpack.c.l.b16 %v1610
    %v1635 = vunpack.c.l.b16 %v1611
    %v1636 = vunpack.c.l.b16 %v1612
    %v1637 = vunpack.c.l.b16 %v1613
    %v1638 = vunpack.c.l.b16 %v1614
    %v1639 = vpack.c.b16 %v1632, %v1631
    %v1640 = vpack.c.b16 %v1634, %v1633
    %v1641 = vpack.c.b16 %v1636, %v1635
    %v1642 = vpack.c.b16 %v1638, %v1637
    %vm1647 = vcmask 523264
    %v1649 = vsel %vm1647, %v1615, 0
    %1651 = vmatprep.subr.bf16.mxu0 0
    %1652 = vmatpush1.bf16.msra.mxu0 %v1639
    %1653 = vmatprep.subr.bf16.mxu0 0
    %1654 = vmatpush1.bf16.msra.mxu0 %v1640
    %1655 = vmatprep.subr.bf16.mxu0 0
    %1656 = vmatpush1.bf16.msra.mxu0 %v1641
    %1657 = vmatprep.subr.bf16.mxu0 0
    %1658 = vmatpush1.bf16.msra.mxu0 %v1642
    %1659 = vmatprep.subr.bf16.mxu0 0
    %1660 = vmatpush1.bf16.msra.mxu0 0
    %1661 = vmatprep.subr.bf16.mxu0 0
    %1662 = vmatpush1.bf16.msra.mxu0 0
    %1663 = vmatprep.subr.bf16.mxu0 0
    %1664 = vmatpush1.bf16.msra.mxu0 0
    %1665 = vmatprep.subr.bf16.mxu0 0
    %1666 = vmatpush1.bf16.msra.mxu0 0
    %1667 = vmatprep.subr.bf16.mxu0 0
    %1668 = vmatpush1.bf16.msra.mxu0 0
    %1669 = vmatprep.subr.bf16.mxu0 0
    %1670 = vmatpush1.bf16.msra.mxu0 0
    %1671 = vmatprep.subr.bf16.mxu0 0
    %1672 = vmatpush1.bf16.msra.mxu0 0
    %1673 = vmatprep.subr.bf16.mxu0 0
    %1674 = vmatpush1.bf16.msra.mxu0 0
    %1675 = vmatprep.subr.bf16.mxu0 0
    %1676 = vmatpush1.bf16.msra.mxu0 0
    %1677 = vmatprep.subr.bf16.mxu0 0
    %1678 = vmatpush1.bf16.msra.mxu0 0
    %1679 = vmatprep.subr.bf16.mxu0 0
    %1680 = vmatpush1.bf16.msra.mxu0 0
    %1681 = vmatprep.subr.bf16.mxu0 0
    %1682 = vmatpush1.bf16.msra.mxu0 0
    %1683 = vmatprep.mubr.bf16.mxu0 0
    %1684 = vmatmul.mubr.bf16.gmra.mrb[0].mxu0 %v1649
    %v1685 = vpop.f32.mrb[0].mxu0
    %v1686 = vadd.f32 %v1621, %v1685
    %v1687 = vpop.f32.mrb[0].mxu0
    %v1688 = vpop.f32.mrb[0].mxu0
    %v1689 = vadd.f32 %v1621, %v1688
    %v1690 = vpop.f32.mrb[0].mxu0
    %1691 = vdwg.mxu0
    %v1692 = vadd.f32 %v1686, %v1519
    %v1693 = vadd.f32 %v1689, %v1520
    %v1694 = vld [vmem:[%s15] sm:$0x1]
    %v1695 = vld [vmem:[%s16] sm:$0x1]
    %v1696 = vsel %vm75, %v1692, 0.0
    %1697 = vadd.xlane.f32.xlu0 %v1696
    %v1698 = vpop.xlane.xlu0 %1697
    %v1699 = vsel %vm75, %v1693, 0.0
    %1700 = vadd.xlane.f32.xlu0 %v1699
    %v1701 = vpop.xlane.xlu0 %1700
    %v1702 = vmul.f32 %v1698, %v82
    %v1703 = vmul.f32 %v1701, %v82
    %v1704 = vsub.f32 %v1692, %v1702
    %v1705 = vsub.f32 %v1693, %v1703
    %v1706 = vmul.f32 %v1704, %v1704
    %v1707 = vmul.f32 %v1705, %v1705
    %v1708 = vsel %vm75, %v1706, 0.0
    %1709 = vadd.xlane.f32.xlu0 %v1708
    %v1710 = vpop.xlane.xlu0 %1709
    %v1711 = vsel %vm75, %v1707, 0.0
    %1712 = vadd.xlane.f32.xlu0 %v1711
    %v1713 = vpop.xlane.xlu0 %1712
    %v1714 = vmul.f32 %v1710, %v82
    %v1715 = vmul.f32 %v1713, %v82
    %v1716 = vadd.f32 %v1714, 1e-12
    %v1717 = vadd.f32 %v1715, 1e-12
    %v1718 = vrsqrt.pop %v1716
    %v1719 = vrsqrt.pop %v1717
    %v1720 = vmul.f32 %v1704, %v1718
    %v1721 = vmul.f32 %v1705, %v1719
    %v1723 = vlaneseq
    %v1724 = vshrl.u32 %v1723, 7
    %v1725 = vsub.s32 0, %v1724
    %v1726 = vrot.slane %v1694, %v1725
    %v1728 = vmul.f32 %v1720, %v1726
    %v1729 = vmul.f32 %v1721, %v1726
    %v1731 = vlaneseq
    %v1732 = vshrl.u32 %v1731, 7
    %v1733 = vsub.s32 0, %v1732
    %v1734 = vrot.slane %v1695, %v1733
    %v1736 = vadd.f32 %v1728, %v1734
    %v1737 = vadd.f32 %v1729, %v1734
    %s1738 = scalar_lea.vmem %s5, 16
    %v1739 = vld [vmem:[%s1738] sm:$0xf]
    %v1740 = vld [vmem:[%s1738 + $0x4] sm:$0xf]
    %v1741 = vld [vmem:[%s1738 + $0x8] sm:$0xf]
    %v1742 = vld [vmem:[%s1738 + $0xc] sm:$0xf]
    %v1743 = vpack.c.bf16 %v1737, %v1736
    %s1744 = scalar_lea.vmem %s6, 1
    %v1745 = vld [vmem:[%s1744] sm:$0x1]
    %v1747 = vlaneseq
    %v1748 = vshrl.u32 %v1747, 7
    %v1749 = vsub.s32 0, %v1748
    %v1750 = vrot.slane %v1745, %v1749
    %v1756 = vunpack.c.l.b16 %v1739
    %v1757 = vunpack.c.l.b16 %v1740
    %v1758 = vunpack.c.l.b16 %v1741
    %v1759 = vunpack.c.l.b16 %v1742
    %v1760 = vpack.c.b16 %v1757, %v1756
    %v1761 = vpack.c.b16 %v1759, %v1758
    %v1765 = vsel %vm75, %v1743, 0
    %1767 = vmatprep.subr.bf16.mxu0 0
    %1768 = vmatpush1.bf16.msra.mxu0 %v1760
    %1769 = vmatprep.subr.bf16.mxu0 0
    %1770 = vmatpush1.bf16.msra.mxu0 %v1761
    %1771 = vmatprep.subr.bf16.mxu0 0
    %1772 = vmatpush1.bf16.msra.mxu0 0
    %1773 = vmatprep.subr.bf16.mxu0 0
    %1774 = vmatpush1.bf16.msra.mxu0 0
    %1775 = vmatprep.subr.bf16.mxu0 0
    %1776 = vmatpush1.bf16.msra.mxu0 0
    %1777 = vmatprep.subr.bf16.mxu0 0
    %1778 = vmatpush1.bf16.msra.mxu0 0
    %1779 = vmatprep.subr.bf16.mxu0 0
    %1780 = vmatpush1.bf16.msra.mxu0 0
    %1781 = vmatprep.subr.bf16.mxu0 0
    %1782 = vmatpush1.bf16.msra.mxu0 0
    %1783 = vmatprep.subr.bf16.mxu0 0
    %1784 = vmatpush1.bf16.msra.mxu0 0
    %1785 = vmatprep.subr.bf16.mxu0 0
    %1786 = vmatpush1.bf16.msra.mxu0 0
    %1787 = vmatprep.subr.bf16.mxu0 0
    %1788 = vmatpush1.bf16.msra.mxu0 0
    %1789 = vmatprep.subr.bf16.mxu0 0
    %1790 = vmatpush1.bf16.msra.mxu0 0
    %1791 = vmatprep.subr.bf16.mxu0 0
    %1792 = vmatpush1.bf16.msra.mxu0 0
    %1793 = vmatprep.subr.bf16.mxu0 0
    %1794 = vmatpush1.bf16.msra.mxu0 0
    %1795 = vmatprep.subr.bf16.mxu0 0
    %1796 = vmatpush1.bf16.msra.mxu0 0
    %1797 = vmatprep.subr.bf16.mxu0 0
    %1798 = vmatpush1.bf16.msra.mxu0 0
    %1799 = vmatprep.mubr.bf16.mxu0 0
    %1800 = vmatmul.mubr.bf16.gmra.mrb[0].mxu0 %v1765
    %v1801 = vpop.f32.mrb[0].mxu0
    %v1802 = vadd.f32 %v1750, %v1801
    %v1803 = vpop.f32.mrb[0].mxu0
    %v1804 = vpop.f32.mrb[0].mxu0
    %v1805 = vadd.f32 %v1750, %v1804
    %v1806 = vpop.f32.mrb[0].mxu0
    %1807 = vdwg.mxu0
    %s1808 = scalar_lea.vmem %s7, 16
    %v1809 = vld [vmem:[%s1808] sm:$0xf]
    %v1810 = vld [vmem:[%s1808 + $0x4] sm:$0xf]
    %v1811 = vld [vmem:[%s1808 + $0x8] sm:$0xf]
    %v1812 = vld [vmem:[%s1808 + $0xc] sm:$0xf]
    %v1813 = vpack.c.bf16 %v1802, %v1802
    %1815 = vrot.lane.b32.xlu0 %v1813, 96
    %v1816 = vpop.permute.xlu0 %1815
    %v1818 = vsel %vm196, %v1813, 0
    %v1821 = vsel %vm196, %v1816, 0
    %1823 = vmatprep.subr.bf16.mxu0 0
    %1824 = vmatpush1.bf16.xpose.msra.mxu0 %v1821
    %1825 = vmatprep.subr.bf16.mxu0 0
    %1826 = vmatpush1.bf16.xpose.msra.mxu0 0
    %1827 = vmatprep.subr.bf16.mxu0 0
    %1828 = vmatpush1.bf16.xpose.msra.mxu0 0
    %1829 = vmatprep.subr.bf16.mxu0 0
    %1830 = vmatpush1.bf16.xpose.msra.mxu0 0
    %1831 = vmatprep.subr.bf16.mxu0 0
    %1832 = vmatpush1.bf16.xpose.msra.mxu0 0
    %1833 = vmatprep.subr.bf16.mxu0 0
    %1834 = vmatpush1.bf16.xpose.msra.mxu0 0
    %1835 = vmatprep.subr.bf16.mxu0 0
    %1836 = vmatpush1.bf16.xpose.msra.mxu0 0
    %1837 = vmatprep.subr.bf16.mxu0 0
    %1838 = vmatpush1.bf16.xpose.msra.mxu0 0
    %1839 = vmatprep.subr.bf16.mxu0 0
    %1840 = vmatpush1.bf16.xpose.msra.mxu0 0
    %1841 = vmatprep.subr.bf16.mxu0 0
    %1842 = vmatpush1.bf16.xpose.msra.mxu0 0
    %1843 = vmatprep.subr.bf16.mxu0 0
    %1844 = vmatpush1.bf16.xpose.msra.mxu0 0
    %1845 = vmatprep.subr.bf16.mxu0 0
    %1846 = vmatpush1.bf16.xpose.msra.mxu0 0
    %1847 = vmatprep.subr.bf16.mxu0 0
    %1848 = vmatpush1.bf16.xpose.msra.mxu0 0
    %1849 = vmatprep.subr.bf16.mxu0 0
    %1850 = vmatpush1.bf16.xpose.msra.mxu0 0
    %1851 = vmatprep.subr.bf16.mxu0 0
    %1852 = vmatpush1.bf16.xpose.msra.mxu0 0
    %1853 = vmatprep.subr.bf16.mxu0 0
    %1854 = vmatpush1.bf16.xpose.msra.mxu0 0
    %1855 = vmatprep.mubr.bf16.mxu0 0
    %1856 = vmatmul.mubr.bf16.gmra.mrb[0].mxu0 %v1818
    %v1857 = vpop.f32.mrb[0].mxu0
    %v1858 = vadd.f32 0.0, %v1857
    %v1859 = vpop.f32.mrb[0].mxu0
    %v1860 = vpop.f32.mrb[0].mxu0
    %v1861 = vpop.f32.mrb[0].mxu0
    %1862 = vdwg.mxu0
    %v1863 = vmul.f32 %v1858, 0.35355338
    %v1864 = vadd.f32 %v1863, %v247
    %v1865 = vsel %vm196, %v1864, -inf
    %1866 = vmax.xlane.f32.xlu0 %v1865
    %v1867 = vpop.xlane.xlu0 %1866
    %v1868 = vsub.f32 %v1864, %v1867
    %v1869 = vmul.f32 %v1868, 1.442695
    %v1870 = vpow.pop %v1869
    %v1871 = vsel %vm196, %v1870, 0.0
    %1872 = vadd.xlane.f32.xlu0 %v1871
    %v1873 = vpop.xlane.xlu0 %1872
    %v1874 = vrcp.pop %v1873
    %v1875 = vmul.f32 %v1870, %v1874
    %v1876 = vpack.c.bf16 %v1875, %v1875
    %1877 = vrot.lane.b32.xlu0 %v1813, 64
    %v1878 = vpop.permute.xlu0 %1877
    %v1880 = vsel %vm196, %v1876, 0
    %v1883 = vsel %vm266, %v1878, 0
    %1885 = vmatprep.subr.bf16.mxu0 0
    %1886 = vmatpush1.bf16.msra.mxu0 %v1883
    %1887 = vmatprep.subr.bf16.mxu0 0
    %1888 = vmatpush1.bf16.msra.mxu0 0
    %1889 = vmatprep.subr.bf16.mxu0 0
    %1890 = vmatpush1.bf16.msra.mxu0 0
    %1891 = vmatprep.subr.bf16.mxu0 0
    %1892 = vmatpush1.bf16.msra.mxu0 0
    %1893 = vmatprep.subr.bf16.mxu0 0
    %1894 = vmatpush1.bf16.msra.mxu0 0
    %1895 = vmatprep.subr.bf16.mxu0 0
    %1896 = vmatpush1.bf16.msra.mxu0 0
    %1897 = vmatprep.subr.bf16.mxu0 0
    %1898 = vmatpush1.bf16.msra.mxu0 0
    %1899 = vmatprep.subr.bf16.mxu0 0
    %1900 = vmatpush1.bf16.msra.mxu0 0
    %1901 = vmatprep.subr.bf16.mxu0 0
    %1902 = vmatpush1.bf16.msra.mxu0 0
    %1903 = vmatprep.subr.bf16.mxu0 0
    %1904 = vmatpush1.bf16.msra.mxu0 0
    %1905 = vmatprep.subr.bf16.mxu0 0
    %1906 = vmatpush1.bf16.msra.mxu0 0
    %1907 = vmatprep.subr.bf16.mxu0 0
    %1908 = vmatpush1.bf16.msra.mxu0 0
    %1909 = vmatprep.subr.bf16.mxu0 0
    %1910 = vmatpush1.bf16.msra.mxu0 0
    %1911 = vmatprep.subr.bf16.mxu0 0
    %1912 = vmatpush1.bf16.msra.mxu0 0
    %1913 = vmatprep.subr.bf16.mxu0 0
    %1914 = vmatpush1.bf16.msra.mxu0 0
    %1915 = vmatprep.subr.bf16.mxu0 0
    %1916 = vmatpush1.bf16.msra.mxu0 0
    %1917 = vmatprep.mubr.bf16.mxu0 0
    %1918 = vmatmul.mubr.bf16.gmra.mrb[0].mxu0 %v1880
    %v1919 = vpop.f32.mrb[0].mxu0
    %v1920 = vadd.f32 0.0, %v1919
    %v1921 = vpop.f32.mrb[0].mxu0
    %v1922 = vpop.f32.mrb[0].mxu0
    %v1923 = vpop.f32.mrb[0].mxu0
    %1924 = vdwg.mxu0
    %v1925 = vpack.c.bf16 %v1920, %v1920
    %1926 = vrot.lane.b32.xlu0 %v1813, 120
    %v1927 = vpop.permute.xlu0 %1926
    %1928 = vrot.lane.b32.xlu0 %v1813, 88
    %v1929 = vpop.permute.xlu0 %1928
    %v1931 = vsel %vm196, %v1927, 0
    %v1934 = vsel %vm196, %v1929, 0
    %1936 = vmatprep.subr.bf16.mxu0 0
    %1937 = vmatpush1.bf16.xpose.msra.mxu0 %v1934
    %1938 = vmatprep.subr.bf16.mxu0 0
    %1939 = vmatpush1.bf16.xpose.msra.mxu0 0
    %1940 = vmatprep.subr.bf16.mxu0 0
    %1941 = vmatpush1.bf16.xpose.msra.mxu0 0
    %1942 = vmatprep.subr.bf16.mxu0 0
    %1943 = vmatpush1.bf16.xpose.msra.mxu0 0
    %1944 = vmatprep.subr.bf16.mxu0 0
    %1945 = vmatpush1.bf16.xpose.msra.mxu0 0
    %1946 = vmatprep.subr.bf16.mxu0 0
    %1947 = vmatpush1.bf16.xpose.msra.mxu0 0
    %1948 = vmatprep.subr.bf16.mxu0 0
    %1949 = vmatpush1.bf16.xpose.msra.mxu0 0
    %1950 = vmatprep.subr.bf16.mxu0 0
    %1951 = vmatpush1.bf16.xpose.msra.mxu0 0
    %1952 = vmatprep.subr.bf16.mxu0 0
    %1953 = vmatpush1.bf16.xpose.msra.mxu0 0
    %1954 = vmatprep.subr.bf16.mxu0 0
    %1955 = vmatpush1.bf16.xpose.msra.mxu0 0
    %1956 = vmatprep.subr.bf16.mxu0 0
    %1957 = vmatpush1.bf16.xpose.msra.mxu0 0
    %1958 = vmatprep.subr.bf16.mxu0 0
    %1959 = vmatpush1.bf16.xpose.msra.mxu0 0
    %1960 = vmatprep.subr.bf16.mxu0 0
    %1961 = vmatpush1.bf16.xpose.msra.mxu0 0
    %1962 = vmatprep.subr.bf16.mxu0 0
    %1963 = vmatpush1.bf16.xpose.msra.mxu0 0
    %1964 = vmatprep.subr.bf16.mxu0 0
    %1965 = vmatpush1.bf16.xpose.msra.mxu0 0
    %1966 = vmatprep.subr.bf16.mxu0 0
    %1967 = vmatpush1.bf16.xpose.msra.mxu0 0
    %1968 = vmatprep.mubr.bf16.mxu0 0
    %1969 = vmatmul.mubr.bf16.gmra.mrb[0].mxu0 %v1931
    %v1970 = vpop.f32.mrb[0].mxu0
    %v1971 = vadd.f32 0.0, %v1970
    %v1972 = vpop.f32.mrb[0].mxu0
    %v1973 = vpop.f32.mrb[0].mxu0
    %v1974 = vpop.f32.mrb[0].mxu0
    %1975 = vdwg.mxu0
    %v1976 = vmul.f32 %v1971, 0.35355338
    %v1977 = vadd.f32 %v1976, %v247
    %v1978 = vsel %vm196, %v1977, -inf
    %1979 = vmax.xlane.f32.xlu0 %v1978
    %v1980 = vpop.xlane.xlu0 %1979
    %v1981 = vsub.f32 %v1977, %v1980
    %v1982 = vmul.f32 %v1981, 1.442695
    %v1983 = vpow.pop %v1982
    %v1984 = vsel %vm196, %v1983, 0.0
    %1985 = vadd.xlane.f32.xlu0 %v1984
    %v1986 = vpop.xlane.xlu0 %1985
    %v1987 = vrcp.pop %v1986
    %v1988 = vmul.f32 %v1983, %v1987
    %v1989 = vpack.c.bf16 %v1988, %v1988
    %1990 = vrot.lane.b32.xlu0 %v1813, 56
    %v1991 = vpop.permute.xlu0 %1990
    %v1993 = vsel %vm196, %v1989, 0
    %v1996 = vsel %vm266, %v1991, 0
    %1998 = vmatprep.subr.bf16.mxu0 0
    %1999 = vmatpush1.bf16.msra.mxu0 %v1996
    %2000 = vmatprep.subr.bf16.mxu0 0
    %2001 = vmatpush1.bf16.msra.mxu0 0
    %2002 = vmatprep.subr.bf16.mxu0 0
    %2003 = vmatpush1.bf16.msra.mxu0 0
    %2004 = vmatprep.subr.bf16.mxu0 0
    %2005 = vmatpush1.bf16.msra.mxu0 0
    %2006 = vmatprep.subr.bf16.mxu0 0
    %2007 = vmatpush1.bf16.msra.mxu0 0
    %2008 = vmatprep.subr.bf16.mxu0 0
    %2009 = vmatpush1.bf16.msra.mxu0 0
    %2010 = vmatprep.subr.bf16.mxu0 0
    %2011 = vmatpush1.bf16.msra.mxu0 0
    %2012 = vmatprep.subr.bf16.mxu0 0
    %2013 = vmatpush1.bf16.msra.mxu0 0
    %2014 = vmatprep.subr.bf16.mxu0 0
    %2015 = vmatpush1.bf16.msra.mxu0 0
    %2016 = vmatprep.subr.bf16.mxu0 0
    %2017 = vmatpush1.bf16.msra.mxu0 0
    %2018 = vmatprep.subr.bf16.mxu0 0
    %2019 = vmatpush1.bf16.msra.mxu0 0
    %2020 = vmatprep.subr.bf16.mxu0 0
    %2021 = vmatpush1.bf16.msra.mxu0 0
    %2022 = vmatprep.subr.bf16.mxu0 0
    %2023 = vmatpush1.bf16.msra.mxu0 0
    %2024 = vmatprep.subr.bf16.mxu0 0
    %2025 = vmatpush1.bf16.msra.mxu0 0
    %2026 = vmatprep.subr.bf16.mxu0 0
    %2027 = vmatpush1.bf16.msra.mxu0 0
    %2028 = vmatprep.subr.bf16.mxu0 0
    %2029 = vmatpush1.bf16.msra.mxu0 0
    %2030 = vmatprep.mubr.bf16.mxu0 0
    %2031 = vmatmul.mubr.bf16.gmra.mrb[0].mxu0 %v1993
    %v2032 = vpop.f32.mrb[0].mxu0
    %v2033 = vadd.f32 0.0, %v2032
    %v2034 = vpop.f32.mrb[0].mxu0
    %v2035 = vpop.f32.mrb[0].mxu0
    %v2036 = vpop.f32.mrb[0].mxu0
    %2037 = vdwg.mxu0
    %v2038 = vpack.c.bf16 %v2033, %v2033
    %v2040 = vsel %vm196, %v2038, 0
    %v2043 = vsel %vm266, %v1810, 0
    %2045 = vmatprep.subr.bf16.mxu0 0
    %2046 = vmatpush1.bf16.msra.mxu0 %v2043
    %2047 = vmatprep.subr.bf16.mxu0 0
    %2048 = vmatpush1.bf16.msra.mxu0 0
    %2049 = vmatprep.subr.bf16.mxu0 0
    %2050 = vmatpush1.bf16.msra.mxu0 0
    %2051 = vmatprep.subr.bf16.mxu0 0
    %2052 = vmatpush1.bf16.msra.mxu0 0
    %2053 = vmatprep.subr.bf16.mxu0 0
    %2054 = vmatpush1.bf16.msra.mxu0 0
    %2055 = vmatprep.subr.bf16.mxu0 0
    %2056 = vmatpush1.bf16.msra.mxu0 0
    %2057 = vmatprep.subr.bf16.mxu0 0
    %2058 = vmatpush1.bf16.msra.mxu0 0
    %2059 = vmatprep.subr.bf16.mxu0 0
    %2060 = vmatpush1.bf16.msra.mxu0 0
    %2061 = vmatprep.subr.bf16.mxu0 0
    %2062 = vmatpush1.bf16.msra.mxu0 0
    %2063 = vmatprep.subr.bf16.mxu0 0
    %2064 = vmatpush1.bf16.msra.mxu0 0
    %2065 = vmatprep.subr.bf16.mxu0 0
    %2066 = vmatpush1.bf16.msra.mxu0 0
    %2067 = vmatprep.subr.bf16.mxu0 0
    %2068 = vmatpush1.bf16.msra.mxu0 0
    %2069 = vmatprep.subr.bf16.mxu0 0
    %2070 = vmatpush1.bf16.msra.mxu0 0
    %2071 = vmatprep.subr.bf16.mxu0 0
    %2072 = vmatpush1.bf16.msra.mxu0 0
    %2073 = vmatprep.subr.bf16.mxu0 0
    %2074 = vmatpush1.bf16.msra.mxu0 0
    %2075 = vmatprep.subr.bf16.mxu0 0
    %2076 = vmatpush1.bf16.msra.mxu0 0
    %2077 = vmatprep.mubr.bf16.mxu0 0
    %2078 = vmatmul.mubr.bf16.gmra.mrb[0].mxu0 %v2040
    %v2079 = vpop.f32.mrb[0].mxu0
    %v2080 = vadd.f32 0.0, %v2079
    %v2081 = vpop.f32.mrb[0].mxu0
    %v2082 = vpop.f32.mrb[0].mxu0
    %v2083 = vpop.f32.mrb[0].mxu0
    %2084 = vdwg.mxu0
    %v2086 = vsel %vm196, %v1925, 0
    %v2089 = vsel %vm266, %v1809, 0
    %2091 = vmatprep.subr.bf16.mxu0 0
    %2092 = vmatpush1.bf16.msra.mxu0 %v2089
    %2093 = vmatprep.subr.bf16.mxu0 0
    %2094 = vmatpush1.bf16.msra.mxu0 0
    %2095 = vmatprep.subr.bf16.mxu0 0
    %2096 = vmatpush1.bf16.msra.mxu0 0
    %2097 = vmatprep.subr.bf16.mxu0 0
    %2098 = vmatpush1.bf16.msra.mxu0 0
    %2099 = vmatprep.subr.bf16.mxu0 0
    %2100 = vmatpush1.bf16.msra.mxu0 0
    %2101 = vmatprep.subr.bf16.mxu0 0
    %2102 = vmatpush1.bf16.msra.mxu0 0
    %2103 = vmatprep.subr.bf16.mxu0 0
    %2104 = vmatpush1.bf16.msra.mxu0 0
    %2105 = vmatprep.subr.bf16.mxu0 0
    %2106 = vmatpush1.bf16.msra.mxu0 0
    %2107 = vmatprep.subr.bf16.mxu0 0
    %2108 = vmatpush1.bf16.msra.mxu0 0
    %2109 = vmatprep.subr.bf16.mxu0 0
    %2110 = vmatpush1.bf16.msra.mxu0 0
    %2111 = vmatprep.subr.bf16.mxu0 0
    %2112 = vmatpush1.bf16.msra.mxu0 0
    %2113 = vmatprep.subr.bf16.mxu0 0
    %2114 = vmatpush1.bf16.msra.mxu0 0
    %2115 = vmatprep.subr.bf16.mxu0 0
    %2116 = vmatpush1.bf16.msra.mxu0 0
    %2117 = vmatprep.subr.bf16.mxu0 0
    %2118 = vmatpush1.bf16.msra.mxu0 0
    %2119 = vmatprep.subr.bf16.mxu0 0
    %2120 = vmatpush1.bf16.msra.mxu0 0
    %2121 = vmatprep.subr.bf16.mxu0 0
    %2122 = vmatpush1.bf16.msra.mxu0 0
    %2123 = vmatprep.mubr.bf16.mxu0 0
    %2124 = vmatmul.mubr.bf16.gmra.mrb[0].mxu0 %v2086
    %v2125 = vpop.f32.mrb[0].mxu0
    %v2126 = vadd.f32 %v2080, %v2125
    %v2127 = vpop.f32.mrb[0].mxu0
    %v2128 = vpop.f32.mrb[0].mxu0
    %v2129 = vpop.f32.mrb[0].mxu0
    %2130 = vdwg.mxu0
    %2131 = vrot.lane.b32.xlu0 %v1813, 112
    %v2132 = vpop.permute.xlu0 %2131
    %2133 = vrot.lane.b32.xlu0 %v1813, 80
    %v2134 = vpop.permute.xlu0 %2133
    %v2136 = vsel %vm196, %v2132, 0
    %v2139 = vsel %vm196, %v2134, 0
    %2141 = vmatprep.subr.bf16.mxu0 0
    %2142 = vmatpush1.bf16.xpose.msra.mxu0 %v2139
    %2143 = vmatprep.subr.bf16.mxu0 0
    %2144 = vmatpush1.bf16.xpose.msra.mxu0 0
    %2145 = vmatprep.subr.bf16.mxu0 0
    %2146 = vmatpush1.bf16.xpose.msra.mxu0 0
    %2147 = vmatprep.subr.bf16.mxu0 0
    %2148 = vmatpush1.bf16.xpose.msra.mxu0 0
    %2149 = vmatprep.subr.bf16.mxu0 0
    %2150 = vmatpush1.bf16.xpose.msra.mxu0 0
    %2151 = vmatprep.subr.bf16.mxu0 0
    %2152 = vmatpush1.bf16.xpose.msra.mxu0 0
    %2153 = vmatprep.subr.bf16.mxu0 0
    %2154 = vmatpush1.bf16.xpose.msra.mxu0 0
    %2155 = vmatprep.subr.bf16.mxu0 0
    %2156 = vmatpush1.bf16.xpose.msra.mxu0 0
    %2157 = vmatprep.subr.bf16.mxu0 0
    %2158 = vmatpush1.bf16.xpose.msra.mxu0 0
    %2159 = vmatprep.subr.bf16.mxu0 0
    %2160 = vmatpush1.bf16.xpose.msra.mxu0 0
    %2161 = vmatprep.subr.bf16.mxu0 0
    %2162 = vmatpush1.bf16.xpose.msra.mxu0 0
    %2163 = vmatprep.subr.bf16.mxu0 0
    %2164 = vmatpush1.bf16.xpose.msra.mxu0 0
    %2165 = vmatprep.subr.bf16.mxu0 0
    %2166 = vmatpush1.bf16.xpose.msra.mxu0 0
    %2167 = vmatprep.subr.bf16.mxu0 0
    %2168 = vmatpush1.bf16.xpose.msra.mxu0 0
    %2169 = vmatprep.subr.bf16.mxu0 0
    %2170 = vmatpush1.bf16.xpose.msra.mxu0 0
    %2171 = vmatprep.subr.bf16.mxu0 0
    %2172 = vmatpush1.bf16.xpose.msra.mxu0 0
    %2173 = vmatprep.mubr.bf16.mxu0 0
    %2174 = vmatmul.mubr.bf16.gmra.mrb[0].mxu0 %v2136
    %v2175 = vpop.f32.mrb[0].mxu0
    %v2176 = vadd.f32 0.0, %v2175
    %v2177 = vpop.f32.mrb[0].mxu0
    %v2178 = vpop.f32.mrb[0].mxu0
    %v2179 = vpop.f32.mrb[0].mxu0
    %2180 = vdwg.mxu0
    %v2181 = vmul.f32 %v2176, 0.35355338
    %v2182 = vadd.f32 %v2181, %v247
    %v2183 = vsel %vm196, %v2182, -inf
    %2184 = vmax.xlane.f32.xlu0 %v2183
    %v2185 = vpop.xlane.xlu0 %2184
    %v2186 = vsub.f32 %v2182, %v2185
    %v2187 = vmul.f32 %v2186, 1.442695
    %v2188 = vpow.pop %v2187
    %v2189 = vsel %vm196, %v2188, 0.0
    %2190 = vadd.xlane.f32.xlu0 %v2189
    %v2191 = vpop.xlane.xlu0 %2190
    %v2192 = vrcp.pop %v2191
    %v2193 = vmul.f32 %v2188, %v2192
    %v2194 = vpack.c.bf16 %v2193, %v2193
    %2195 = vrot.lane.b32.xlu0 %v1813, 48
    %v2196 = vpop.permute.xlu0 %2195
    %v2198 = vsel %vm196, %v2194, 0
    %v2201 = vsel %vm266, %v2196, 0
    %2203 = vmatprep.subr.bf16.mxu0 0
    %2204 = vmatpush1.bf16.msra.mxu0 %v2201
    %2205 = vmatprep.subr.bf16.mxu0 0
    %2206 = vmatpush1.bf16.msra.mxu0 0
    %2207 = vmatprep.subr.bf16.mxu0 0
    %2208 = vmatpush1.bf16.msra.mxu0 0
    %2209 = vmatprep.subr.bf16.mxu0 0
    %2210 = vmatpush1.bf16.msra.mxu0 0
    %2211 = vmatprep.subr.bf16.mxu0 0
    %2212 = vmatpush1.bf16.msra.mxu0 0
    %2213 = vmatprep.subr.bf16.mxu0 0
    %2214 = vmatpush1.bf16.msra.mxu0 0
    %2215 = vmatprep.subr.bf16.mxu0 0
    %2216 = vmatpush1.bf16.msra.mxu0 0
    %2217 = vmatprep.subr.bf16.mxu0 0
    %2218 = vmatpush1.bf16.msra.mxu0 0
    %2219 = vmatprep.subr.bf16.mxu0 0
    %2220 = vmatpush1.bf16.msra.mxu0 0
    %2221 = vmatprep.subr.bf16.mxu0 0
    %2222 = vmatpush1.bf16.msra.mxu0 0
    %2223 = vmatprep.subr.bf16.mxu0 0
    %2224 = vmatpush1.bf16.msra.mxu0 0
    %2225 = vmatprep.subr.bf16.mxu0 0
    %2226 = vmatpush1.bf16.msra.mxu0 0
    %2227 = vmatprep.subr.bf16.mxu0 0
    %2228 = vmatpush1.bf16.msra.mxu0 0
    %2229 = vmatprep.subr.bf16.mxu0 0
    %2230 = vmatpush1.bf16.msra.mxu0 0
    %2231 = vmatprep.subr.bf16.mxu0 0
    %2232 = vmatpush1.bf16.msra.mxu0 0
    %2233 = vmatprep.subr.bf16.mxu0 0
    %2234 = vmatpush1.bf16.msra.mxu0 0
    %2235 = vmatprep.mubr.bf16.mxu0 0
    %2236 = vmatmul.mubr.bf16.gmra.mrb[0].mxu0 %v2198
    %v2237 = vpop.f32.mrb[0].mxu0
    %v2238 = vadd.f32 0.0, %v2237
    %v2239 = vpop.f32.mrb[0].mxu0
    %v2240 = vpop.f32.mrb[0].mxu0
    %v2241 = vpop.f32.mrb[0].mxu0
    %2242 = vdwg.mxu0
    %v2243 = vpack.c.bf16 %v2238, %v2238
    %v2245 = vsel %vm196, %v2243, 0
    %v2248 = vsel %vm266, %v1811, 0
    %2250 = vmatprep.subr.bf16.mxu0 0
    %2251 = vmatpush1.bf16.msra.mxu0 %v2248
    %2252 = vmatprep.subr.bf16.mxu0 0
    %2253 = vmatpush1.bf16.msra.mxu0 0
    %2254 = vmatprep.subr.bf16.mxu0 0
    %2255 = vmatpush1.bf16.msra.mxu0 0
    %2256 = vmatprep.subr.bf16.mxu0 0
    %2257 = vmatpush1.bf16.msra.mxu0 0
    %2258 = vmatprep.subr.bf16.mxu0 0
    %2259 = vmatpush1.bf16.msra.mxu0 0
    %2260 = vmatprep.subr.bf16.mxu0 0
    %2261 = vmatpush1.bf16.msra.mxu0 0
    %2262 = vmatprep.subr.bf16.mxu0 0
    %2263 = vmatpush1.bf16.msra.mxu0 0
    %2264 = vmatprep.subr.bf16.mxu0 0
    %2265 = vmatpush1.bf16.msra.mxu0 0
    %2266 = vmatprep.subr.bf16.mxu0 0
    %2267 = vmatpush1.bf16.msra.mxu0 0
    %2268 = vmatprep.subr.bf16.mxu0 0
    %2269 = vmatpush1.bf16.msra.mxu0 0
    %2270 = vmatprep.subr.bf16.mxu0 0
    %2271 = vmatpush1.bf16.msra.mxu0 0
    %2272 = vmatprep.subr.bf16.mxu0 0
    %2273 = vmatpush1.bf16.msra.mxu0 0
    %2274 = vmatprep.subr.bf16.mxu0 0
    %2275 = vmatpush1.bf16.msra.mxu0 0
    %2276 = vmatprep.subr.bf16.mxu0 0
    %2277 = vmatpush1.bf16.msra.mxu0 0
    %2278 = vmatprep.subr.bf16.mxu0 0
    %2279 = vmatpush1.bf16.msra.mxu0 0
    %2280 = vmatprep.subr.bf16.mxu0 0
    %2281 = vmatpush1.bf16.msra.mxu0 0
    %2282 = vmatprep.mubr.bf16.mxu0 0
    %2283 = vmatmul.mubr.bf16.gmra.mrb[0].mxu0 %v2245
    %v2284 = vpop.f32.mrb[0].mxu0
    %v2285 = vadd.f32 0.0, %v2284
    %v2286 = vpop.f32.mrb[0].mxu0
    %v2287 = vpop.f32.mrb[0].mxu0
    %v2288 = vpop.f32.mrb[0].mxu0
    %2289 = vdwg.mxu0
    %v2290 = vadd.f32 %v2126, %v2285
    %2291 = vrot.lane.b32.xlu0 %v1813, 104
    %v2292 = vpop.permute.xlu0 %2291
    %2293 = vrot.lane.b32.xlu0 %v1813, 72
    %v2294 = vpop.permute.xlu0 %2293
    %v2296 = vsel %vm196, %v2292, 0
    %v2299 = vsel %vm196, %v2294, 0
    %2301 = vmatprep.subr.bf16.mxu0 0
    %2302 = vmatpush1.bf16.xpose.msra.mxu0 %v2299
    %2303 = vmatprep.subr.bf16.mxu0 0
    %2304 = vmatpush1.bf16.xpose.msra.mxu0 0
    %2305 = vmatprep.subr.bf16.mxu0 0
    %2306 = vmatpush1.bf16.xpose.msra.mxu0 0
    %2307 = vmatprep.subr.bf16.mxu0 0
    %2308 = vmatpush1.bf16.xpose.msra.mxu0 0
    %2309 = vmatprep.subr.bf16.mxu0 0
    %2310 = vmatpush1.bf16.xpose.msra.mxu0 0
    %2311 = vmatprep.subr.bf16.mxu0 0
    %2312 = vmatpush1.bf16.xpose.msra.mxu0 0
    %2313 = vmatprep.subr.bf16.mxu0 0
    %2314 = vmatpush1.bf16.xpose.msra.mxu0 0
    %2315 = vmatprep.subr.bf16.mxu0 0
    %2316 = vmatpush1.bf16.xpose.msra.mxu0 0
    %2317 = vmatprep.subr.bf16.mxu0 0
    %2318 = vmatpush1.bf16.xpose.msra.mxu0 0
    %2319 = vmatprep.subr.bf16.mxu0 0
    %2320 = vmatpush1.bf16.xpose.msra.mxu0 0
    %2321 = vmatprep.subr.bf16.mxu0 0
    %2322 = vmatpush1.bf16.xpose.msra.mxu0 0
    %2323 = vmatprep.subr.bf16.mxu0 0
    %2324 = vmatpush1.bf16.xpose.msra.mxu0 0
    %2325 = vmatprep.subr.bf16.mxu0 0
    %2326 = vmatpush1.bf16.xpose.msra.mxu0 0
    %2327 = vmatprep.subr.bf16.mxu0 0
    %2328 = vmatpush1.bf16.xpose.msra.mxu0 0
    %2329 = vmatprep.subr.bf16.mxu0 0
    %2330 = vmatpush1.bf16.xpose.msra.mxu0 0
    %2331 = vmatprep.subr.bf16.mxu0 0
    %2332 = vmatpush1.bf16.xpose.msra.mxu0 0
    %2333 = vmatprep.mubr.bf16.mxu0 0
    %2334 = vmatmul.mubr.bf16.gmra.mrb[0].mxu0 %v2296
    %v2335 = vpop.f32.mrb[0].mxu0
    %v2336 = vadd.f32 0.0, %v2335
    %v2337 = vpop.f32.mrb[0].mxu0
    %v2338 = vpop.f32.mrb[0].mxu0
    %v2339 = vpop.f32.mrb[0].mxu0
    %2340 = vdwg.mxu0
    %v2341 = vmul.f32 %v2336, 0.35355338
    %v2342 = vadd.f32 %v2341, %v247
    %v2343 = vsel %vm196, %v2342, -inf
    %2344 = vmax.xlane.f32.xlu0 %v2343
    %v2345 = vpop.xlane.xlu0 %2344
    %v2346 = vsub.f32 %v2342, %v2345
    %v2347 = vmul.f32 %v2346, 1.442695
    %v2348 = vpow.pop %v2347
    %v2349 = vsel %vm196, %v2348, 0.0
    %2350 = vadd.xlane.f32.xlu0 %v2349
    %v2351 = vpop.xlane.xlu0 %2350
    %v2352 = vrcp.pop %v2351
    %v2353 = vmul.f32 %v2348, %v2352
    %v2354 = vpack.c.bf16 %v2353, %v2353
    %2355 = vrot.lane.b32.xlu0 %v1813, 40
    %v2356 = vpop.permute.xlu0 %2355
    %v2358 = vsel %vm196, %v2354, 0
    %v2361 = vsel %vm266, %v2356, 0
    %2363 = vmatprep.subr.bf16.mxu0 0
    %2364 = vmatpush1.bf16.msra.mxu0 %v2361
    %2365 = vmatprep.subr.bf16.mxu0 0
    %2366 = vmatpush1.bf16.msra.mxu0 0
    %2367 = vmatprep.subr.bf16.mxu0 0
    %2368 = vmatpush1.bf16.msra.mxu0 0
    %2369 = vmatprep.subr.bf16.mxu0 0
    %2370 = vmatpush1.bf16.msra.mxu0 0
    %2371 = vmatprep.subr.bf16.mxu0 0
    %2372 = vmatpush1.bf16.msra.mxu0 0
    %2373 = vmatprep.subr.bf16.mxu0 0
    %2374 = vmatpush1.bf16.msra.mxu0 0
    %2375 = vmatprep.subr.bf16.mxu0 0
    %2376 = vmatpush1.bf16.msra.mxu0 0
    %2377 = vmatprep.subr.bf16.mxu0 0
    %2378 = vmatpush1.bf16.msra.mxu0 0
    %2379 = vmatprep.subr.bf16.mxu0 0
    %2380 = vmatpush1.bf16.msra.mxu0 0
    %2381 = vmatprep.subr.bf16.mxu0 0
    %2382 = vmatpush1.bf16.msra.mxu0 0
    %2383 = vmatprep.subr.bf16.mxu0 0
    %2384 = vmatpush1.bf16.msra.mxu0 0
    %2385 = vmatprep.subr.bf16.mxu0 0
    %2386 = vmatpush1.bf16.msra.mxu0 0
    %2387 = vmatprep.subr.bf16.mxu0 0
    %2388 = vmatpush1.bf16.msra.mxu0 0
    %2389 = vmatprep.subr.bf16.mxu0 0
    %2390 = vmatpush1.bf16.msra.mxu0 0
    %2391 = vmatprep.subr.bf16.mxu0 0
    %2392 = vmatpush1.bf16.msra.mxu0 0
    %2393 = vmatprep.subr.bf16.mxu0 0
    %2394 = vmatpush1.bf16.msra.mxu0 0
    %2395 = vmatprep.mubr.bf16.mxu0 0
    %2396 = vmatmul.mubr.bf16.gmra.mrb[0].mxu0 %v2358
    %v2397 = vpop.f32.mrb[0].mxu0
    %v2398 = vadd.f32 0.0, %v2397
    %v2399 = vpop.f32.mrb[0].mxu0
    %v2400 = vpop.f32.mrb[0].mxu0
    %v2401 = vpop.f32.mrb[0].mxu0
    %2402 = vdwg.mxu0
    %v2403 = vpack.c.bf16 %v2398, %v2398
    %v2405 = vsel %vm196, %v2403, 0
    %v2408 = vsel %vm266, %v1812, 0
    %2410 = vmatprep.subr.bf16.mxu0 0
    %2411 = vmatpush1.bf16.msra.mxu0 %v2408
    %2412 = vmatprep.subr.bf16.mxu0 0
    %2413 = vmatpush1.bf16.msra.mxu0 0
    %2414 = vmatprep.subr.bf16.mxu0 0
    %2415 = vmatpush1.bf16.msra.mxu0 0
    %2416 = vmatprep.subr.bf16.mxu0 0
    %2417 = vmatpush1.bf16.msra.mxu0 0
    %2418 = vmatprep.subr.bf16.mxu0 0
    %2419 = vmatpush1.bf16.msra.mxu0 0
    %2420 = vmatprep.subr.bf16.mxu0 0
    %2421 = vmatpush1.bf16.msra.mxu0 0
    %2422 = vmatprep.subr.bf16.mxu0 0
    %2423 = vmatpush1.bf16.msra.mxu0 0
    %2424 = vmatprep.subr.bf16.mxu0 0
    %2425 = vmatpush1.bf16.msra.mxu0 0
    %2426 = vmatprep.subr.bf16.mxu0 0
    %2427 = vmatpush1.bf16.msra.mxu0 0
    %2428 = vmatprep.subr.bf16.mxu0 0
    %2429 = vmatpush1.bf16.msra.mxu0 0
    %2430 = vmatprep.subr.bf16.mxu0 0
    %2431 = vmatpush1.bf16.msra.mxu0 0
    %2432 = vmatprep.subr.bf16.mxu0 0
    %2433 = vmatpush1.bf16.msra.mxu0 0
    %2434 = vmatprep.subr.bf16.mxu0 0
    %2435 = vmatpush1.bf16.msra.mxu0 0
    %2436 = vmatprep.subr.bf16.mxu0 0
    %2437 = vmatpush1.bf16.msra.mxu0 0
    %2438 = vmatprep.subr.bf16.mxu0 0
    %2439 = vmatpush1.bf16.msra.mxu0 0
    %2440 = vmatprep.subr.bf16.mxu0 0
    %2441 = vmatpush1.bf16.msra.mxu0 0
    %2442 = vmatprep.mubr.bf16.mxu0 0
    %2443 = vmatmul.mubr.bf16.gmra.mrb[0].mxu0 %v2405
    %v2444 = vpop.f32.mrb[0].mxu0
    %v2445 = vadd.f32 0.0, %v2444
    %v2446 = vpop.f32.mrb[0].mxu0
    %v2447 = vpop.f32.mrb[0].mxu0
    %v2448 = vpop.f32.mrb[0].mxu0
    %2449 = vdwg.mxu0
    %v2450 = vadd.f32 %v2290, %v2445
    %v2451 = vpack.c.bf16 %v1805, %v1805
    %2453 = vrot.lane.b32.xlu0 %v2451, 96
    %v2454 = vpop.permute.xlu0 %2453
    %v2456 = vsel %vm196, %v2451, 0
    %v2459 = vsel %vm196, %v2454, 0
    %2461 = vmatprep.subr.bf16.mxu0 0
    %2462 = vmatpush1.bf16.xpose.msra.mxu0 %v2459
    %2463 = vmatprep.subr.bf16.mxu0 0
    %2464 = vmatpush1.bf16.xpose.msra.mxu0 0
    %2465 = vmatprep.subr.bf16.mxu0 0
    %2466 = vmatpush1.bf16.xpose.msra.mxu0 0
    %2467 = vmatprep.subr.bf16.mxu0 0
    %2468 = vmatpush1.bf16.xpose.msra.mxu0 0
    %2469 = vmatprep.subr.bf16.mxu0 0
    %2470 = vmatpush1.bf16.xpose.msra.mxu0 0
    %2471 = vmatprep.subr.bf16.mxu0 0
    %2472 = vmatpush1.bf16.xpose.msra.mxu0 0
    %2473 = vmatprep.subr.bf16.mxu0 0
    %2474 = vmatpush1.bf16.xpose.msra.mxu0 0
    %2475 = vmatprep.subr.bf16.mxu0 0
    %2476 = vmatpush1.bf16.xpose.msra.mxu0 0
    %2477 = vmatprep.subr.bf16.mxu0 0
    %2478 = vmatpush1.bf16.xpose.msra.mxu0 0
    %2479 = vmatprep.subr.bf16.mxu0 0
    %2480 = vmatpush1.bf16.xpose.msra.mxu0 0
    %2481 = vmatprep.subr.bf16.mxu0 0
    %2482 = vmatpush1.bf16.xpose.msra.mxu0 0
    %2483 = vmatprep.subr.bf16.mxu0 0
    %2484 = vmatpush1.bf16.xpose.msra.mxu0 0
    %2485 = vmatprep.subr.bf16.mxu0 0
    %2486 = vmatpush1.bf16.xpose.msra.mxu0 0
    %2487 = vmatprep.subr.bf16.mxu0 0
    %2488 = vmatpush1.bf16.xpose.msra.mxu0 0
    %2489 = vmatprep.subr.bf16.mxu0 0
    %2490 = vmatpush1.bf16.xpose.msra.mxu0 0
    %2491 = vmatprep.subr.bf16.mxu0 0
    %2492 = vmatpush1.bf16.xpose.msra.mxu0 0
    %2493 = vmatprep.mubr.bf16.mxu0 0
    %2494 = vmatmul.mubr.bf16.gmra.mrb[0].mxu0 %v2456
    %v2495 = vpop.f32.mrb[0].mxu0
    %v2496 = vadd.f32 0.0, %v2495
    %v2497 = vpop.f32.mrb[0].mxu0
    %v2498 = vpop.f32.mrb[0].mxu0
    %v2499 = vpop.f32.mrb[0].mxu0
    %2500 = vdwg.mxu0
    %v2501 = vmul.f32 %v2496, 0.35355338
    %v2502 = vadd.f32 %v2501, %v890
    %v2503 = vsel %vm196, %v2502, -inf
    %2504 = vmax.xlane.f32.xlu0 %v2503
    %v2505 = vpop.xlane.xlu0 %2504
    %v2506 = vsub.f32 %v2502, %v2505
    %v2507 = vmul.f32 %v2506, 1.442695
    %v2508 = vpow.pop %v2507
    %v2509 = vsel %vm196, %v2508, 0.0
    %2510 = vadd.xlane.f32.xlu0 %v2509
    %v2511 = vpop.xlane.xlu0 %2510
    %v2512 = vrcp.pop %v2511
    %v2513 = vmul.f32 %v2508, %v2512
    %v2514 = vpack.c.bf16 %v2513, %v2513
    %2515 = vrot.lane.b32.xlu0 %v2451, 64
    %v2516 = vpop.permute.xlu0 %2515
    %v2518 = vsel %vm196, %v2514, 0
    %v2521 = vsel %vm266, %v2516, 0
    %2523 = vmatprep.subr.bf16.mxu0 0
    %2524 = vmatpush1.bf16.msra.mxu0 %v2521
    %2525 = vmatprep.subr.bf16.mxu0 0
    %2526 = vmatpush1.bf16.msra.mxu0 0
    %2527 = vmatprep.subr.bf16.mxu0 0
    %2528 = vmatpush1.bf16.msra.mxu0 0
    %2529 = vmatprep.subr.bf16.mxu0 0
    %2530 = vmatpush1.bf16.msra.mxu0 0
    %2531 = vmatprep.subr.bf16.mxu0 0
    %2532 = vmatpush1.bf16.msra.mxu0 0
    %2533 = vmatprep.subr.bf16.mxu0 0
    %2534 = vmatpush1.bf16.msra.mxu0 0
    %2535 = vmatprep.subr.bf16.mxu0 0
    %2536 = vmatpush1.bf16.msra.mxu0 0
    %2537 = vmatprep.subr.bf16.mxu0 0
    %2538 = vmatpush1.bf16.msra.mxu0 0
    %2539 = vmatprep.subr.bf16.mxu0 0
    %2540 = vmatpush1.bf16.msra.mxu0 0
    %2541 = vmatprep.subr.bf16.mxu0 0
    %2542 = vmatpush1.bf16.msra.mxu0 0
    %2543 = vmatprep.subr.bf16.mxu0 0
    %2544 = vmatpush1.bf16.msra.mxu0 0
    %2545 = vmatprep.subr.bf16.mxu0 0
    %2546 = vmatpush1.bf16.msra.mxu0 0
    %2547 = vmatprep.subr.bf16.mxu0 0
    %2548 = vmatpush1.bf16.msra.mxu0 0
    %2549 = vmatprep.subr.bf16.mxu0 0
    %2550 = vmatpush1.bf16.msra.mxu0 0
    %2551 = vmatprep.subr.bf16.mxu0 0
    %2552 = vmatpush1.bf16.msra.mxu0 0
    %2553 = vmatprep.subr.bf16.mxu0 0
    %2554 = vmatpush1.bf16.msra.mxu0 0
    %2555 = vmatprep.mubr.bf16.mxu0 0
    %2556 = vmatmul.mubr.bf16.gmra.mrb[0].mxu0 %v2518
    %v2557 = vpop.f32.mrb[0].mxu0
    %v2558 = vadd.f32 0.0, %v2557
    %v2559 = vpop.f32.mrb[0].mxu0
    %v2560 = vpop.f32.mrb[0].mxu0
    %v2561 = vpop.f32.mrb[0].mxu0
    %2562 = vdwg.mxu0
    %v2563 = vpack.c.bf16 %v2558, %v2558
    %2564 = vrot.lane.b32.xlu0 %v2451, 120
    %v2565 = vpop.permute.xlu0 %2564
    %2566 = vrot.lane.b32.xlu0 %v2451, 88
    %v2567 = vpop.permute.xlu0 %2566
    %v2569 = vsel %vm196, %v2565, 0
    %v2572 = vsel %vm196, %v2567, 0
    %2574 = vmatprep.subr.bf16.mxu0 0
    %2575 = vmatpush1.bf16.xpose.msra.mxu0 %v2572
    %2576 = vmatprep.subr.bf16.mxu0 0
    %2577 = vmatpush1.bf16.xpose.msra.mxu0 0
    %2578 = vmatprep.subr.bf16.mxu0 0
    %2579 = vmatpush1.bf16.xpose.msra.mxu0 0
    %2580 = vmatprep.subr.bf16.mxu0 0
    %2581 = vmatpush1.bf16.xpose.msra.mxu0 0
    %2582 = vmatprep.subr.bf16.mxu0 0
    %2583 = vmatpush1.bf16.xpose.msra.mxu0 0
    %2584 = vmatprep.subr.bf16.mxu0 0
    %2585 = vmatpush1.bf16.xpose.msra.mxu0 0
    %2586 = vmatprep.subr.bf16.mxu0 0
    %2587 = vmatpush1.bf16.xpose.msra.mxu0 0
    %2588 = vmatprep.subr.bf16.mxu0 0
    %2589 = vmatpush1.bf16.xpose.msra.mxu0 0
    %2590 = vmatprep.subr.bf16.mxu0 0
    %2591 = vmatpush1.bf16.xpose.msra.mxu0 0
    %2592 = vmatprep.subr.bf16.mxu0 0
    %2593 = vmatpush1.bf16.xpose.msra.mxu0 0
    %2594 = vmatprep.subr.bf16.mxu0 0
    %2595 = vmatpush1.bf16.xpose.msra.mxu0 0
    %2596 = vmatprep.subr.bf16.mxu0 0
    %2597 = vmatpush1.bf16.xpose.msra.mxu0 0
    %2598 = vmatprep.subr.bf16.mxu0 0
    %2599 = vmatpush1.bf16.xpose.msra.mxu0 0
    %2600 = vmatprep.subr.bf16.mxu0 0
    %2601 = vmatpush1.bf16.xpose.msra.mxu0 0
    %2602 = vmatprep.subr.bf16.mxu0 0
    %2603 = vmatpush1.bf16.xpose.msra.mxu0 0
    %2604 = vmatprep.subr.bf16.mxu0 0
    %2605 = vmatpush1.bf16.xpose.msra.mxu0 0
    %2606 = vmatprep.mubr.bf16.mxu0 0
    %2607 = vmatmul.mubr.bf16.gmra.mrb[0].mxu0 %v2569
    %v2608 = vpop.f32.mrb[0].mxu0
    %v2609 = vadd.f32 0.0, %v2608
    %v2610 = vpop.f32.mrb[0].mxu0
    %v2611 = vpop.f32.mrb[0].mxu0
    %v2612 = vpop.f32.mrb[0].mxu0
    %2613 = vdwg.mxu0
    %v2614 = vmul.f32 %v2609, 0.35355338
    %v2615 = vadd.f32 %v2614, %v890
    %v2616 = vsel %vm196, %v2615, -inf
    %2617 = vmax.xlane.f32.xlu0 %v2616
    %v2618 = vpop.xlane.xlu0 %2617
    %v2619 = vsub.f32 %v2615, %v2618
    %v2620 = vmul.f32 %v2619, 1.442695
    %v2621 = vpow.pop %v2620
    %v2622 = vsel %vm196, %v2621, 0.0
    %2623 = vadd.xlane.f32.xlu0 %v2622
    %v2624 = vpop.xlane.xlu0 %2623
    %v2625 = vrcp.pop %v2624
    %v2626 = vmul.f32 %v2621, %v2625
    %v2627 = vpack.c.bf16 %v2626, %v2626
    %2628 = vrot.lane.b32.xlu0 %v2451, 56
    %v2629 = vpop.permute.xlu0 %2628
    %v2631 = vsel %vm196, %v2627, 0
    %v2634 = vsel %vm266, %v2629, 0
    %2636 = vmatprep.subr.bf16.mxu0 0
    %2637 = vmatpush1.bf16.msra.mxu0 %v2634
    %2638 = vmatprep.subr.bf16.mxu0 0
    %2639 = vmatpush1.bf16.msra.mxu0 0
    %2640 = vmatprep.subr.bf16.mxu0 0
    %2641 = vmatpush1.bf16.msra.mxu0 0
    %2642 = vmatprep.subr.bf16.mxu0 0
    %2643 = vmatpush1.bf16.msra.mxu0 0
    %2644 = vmatprep.subr.bf16.mxu0 0
    %2645 = vmatpush1.bf16.msra.mxu0 0
    %2646 = vmatprep.subr.bf16.mxu0 0
    %2647 = vmatpush1.bf16.msra.mxu0 0
    %2648 = vmatprep.subr.bf16.mxu0 0
    %2649 = vmatpush1.bf16.msra.mxu0 0
    %2650 = vmatprep.subr.bf16.mxu0 0
    %2651 = vmatpush1.bf16.msra.mxu0 0
    %2652 = vmatprep.subr.bf16.mxu0 0
    %2653 = vmatpush1.bf16.msra.mxu0 0
    %2654 = vmatprep.subr.bf16.mxu0 0
    %2655 = vmatpush1.bf16.msra.mxu0 0
    %2656 = vmatprep.subr.bf16.mxu0 0
    %2657 = vmatpush1.bf16.msra.mxu0 0
    %2658 = vmatprep.subr.bf16.mxu0 0
    %2659 = vmatpush1.bf16.msra.mxu0 0
    %2660 = vmatprep.subr.bf16.mxu0 0
    %2661 = vmatpush1.bf16.msra.mxu0 0
    %2662 = vmatprep.subr.bf16.mxu0 0
    %2663 = vmatpush1.bf16.msra.mxu0 0
    %2664 = vmatprep.subr.bf16.mxu0 0
    %2665 = vmatpush1.bf16.msra.mxu0 0
    %2666 = vmatprep.subr.bf16.mxu0 0
    %2667 = vmatpush1.bf16.msra.mxu0 0
    %2668 = vmatprep.mubr.bf16.mxu0 0
    %2669 = vmatmul.mubr.bf16.gmra.mrb[0].mxu0 %v2631
    %v2670 = vpop.f32.mrb[0].mxu0
    %v2671 = vadd.f32 0.0, %v2670
    %v2672 = vpop.f32.mrb[0].mxu0
    %v2673 = vpop.f32.mrb[0].mxu0
    %v2674 = vpop.f32.mrb[0].mxu0
    %2675 = vdwg.mxu0
    %v2676 = vpack.c.bf16 %v2671, %v2671
    %v2678 = vsel %vm196, %v2676, 0
    %2680 = vmatprep.subr.bf16.mxu0 0
    %2681 = vmatpush1.bf16.msra.mxu0 %v2043
    %2682 = vmatprep.subr.bf16.mxu0 0
    %2683 = vmatpush1.bf16.msra.mxu0 0
    %2684 = vmatprep.subr.bf16.mxu0 0
    %2685 = vmatpush1.bf16.msra.mxu0 0
    %2686 = vmatprep.subr.bf16.mxu0 0
    %2687 = vmatpush1.bf16.msra.mxu0 0
    %2688 = vmatprep.subr.bf16.mxu0 0
    %2689 = vmatpush1.bf16.msra.mxu0 0
    %2690 = vmatprep.subr.bf16.mxu0 0
    %2691 = vmatpush1.bf16.msra.mxu0 0
    %2692 = vmatprep.subr.bf16.mxu0 0
    %2693 = vmatpush1.bf16.msra.mxu0 0
    %2694 = vmatprep.subr.bf16.mxu0 0
    %2695 = vmatpush1.bf16.msra.mxu0 0
    %2696 = vmatprep.subr.bf16.mxu0 0
    %2697 = vmatpush1.bf16.msra.mxu0 0
    %2698 = vmatprep.subr.bf16.mxu0 0
    %2699 = vmatpush1.bf16.msra.mxu0 0
    %2700 = vmatprep.subr.bf16.mxu0 0
    %2701 = vmatpush1.bf16.msra.mxu0 0
    %2702 = vmatprep.subr.bf16.mxu0 0
    %2703 = vmatpush1.bf16.msra.mxu0 0
    %2704 = vmatprep.subr.bf16.mxu0 0
    %2705 = vmatpush1.bf16.msra.mxu0 0
    %2706 = vmatprep.subr.bf16.mxu0 0
    %2707 = vmatpush1.bf16.msra.mxu0 0
    %2708 = vmatprep.subr.bf16.mxu0 0
    %2709 = vmatpush1.bf16.msra.mxu0 0
    %2710 = vmatprep.subr.bf16.mxu0 0
    %2711 = vmatpush1.bf16.msra.mxu0 0
    %2712 = vmatprep.mubr.bf16.mxu0 0
    %2713 = vmatmul.mubr.bf16.gmra.mrb[0].mxu0 %v2678
    %v2714 = vpop.f32.mrb[0].mxu0
    %v2715 = vadd.f32 0.0, %v2714
    %v2716 = vpop.f32.mrb[0].mxu0
    %v2717 = vpop.f32.mrb[0].mxu0
    %v2718 = vpop.f32.mrb[0].mxu0
    %2719 = vdwg.mxu0
    %v2721 = vsel %vm196, %v2563, 0
    %2723 = vmatprep.subr.bf16.mxu0 0
    %2724 = vmatpush1.bf16.msra.mxu0 %v2089
    %2725 = vmatprep.subr.bf16.mxu0 0
    %2726 = vmatpush1.bf16.msra.mxu0 0
    %2727 = vmatprep.subr.bf16.mxu0 0
    %2728 = vmatpush1.bf16.msra.mxu0 0
    %2729 = vmatprep.subr.bf16.mxu0 0
    %2730 = vmatpush1.bf16.msra.mxu0 0
    %2731 = vmatprep.subr.bf16.mxu0 0
    %2732 = vmatpush1.bf16.msra.mxu0 0
    %2733 = vmatprep.subr.bf16.mxu0 0
    %2734 = vmatpush1.bf16.msra.mxu0 0
    %2735 = vmatprep.subr.bf16.mxu0 0
    %2736 = vmatpush1.bf16.msra.mxu0 0
    %2737 = vmatprep.subr.bf16.mxu0 0
    %2738 = vmatpush1.bf16.msra.mxu0 0
    %2739 = vmatprep.subr.bf16.mxu0 0
    %2740 = vmatpush1.bf16.msra.mxu0 0
    %2741 = vmatprep.subr.bf16.mxu0 0
    %2742 = vmatpush1.bf16.msra.mxu0 0
    %2743 = vmatprep.subr.bf16.mxu0 0
    %2744 = vmatpush1.bf16.msra.mxu0 0
    %2745 = vmatprep.subr.bf16.mxu0 0
    %2746 = vmatpush1.bf16.msra.mxu0 0
    %2747 = vmatprep.subr.bf16.mxu0 0
    %2748 = vmatpush1.bf16.msra.mxu0 0
    %2749 = vmatprep.subr.bf16.mxu0 0
    %2750 = vmatpush1.bf16.msra.mxu0 0
    %2751 = vmatprep.subr.bf16.mxu0 0
    %2752 = vmatpush1.bf16.msra.mxu0 0
    %2753 = vmatprep.subr.bf16.mxu0 0
    %2754 = vmatpush1.bf16.msra.mxu0 0
    %2755 = vmatprep.mubr.bf16.mxu0 0
    %2756 = vmatmul.mubr.bf16.gmra.mrb[0].mxu0 %v2721
    %v2757 = vpop.f32.mrb[0].mxu0
    %v2758 = vadd.f32 %v2715, %v2757
    %v2759 = vpop.f32.mrb[0].mxu0
    %v2760 = vpop.f32.mrb[0].mxu0
    %v2761 = vpop.f32.mrb[0].mxu0
    %2762 = vdwg.mxu0
    %2763 = vrot.lane.b32.xlu0 %v2451, 112
    %v2764 = vpop.permute.xlu0 %2763
    %2765 = vrot.lane.b32.xlu0 %v2451, 80
    %v2766 = vpop.permute.xlu0 %2765
    %v2768 = vsel %vm196, %v2764, 0
    %v2771 = vsel %vm196, %v2766, 0
    %2773 = vmatprep.subr.bf16.mxu0 0
    %2774 = vmatpush1.bf16.xpose.msra.mxu0 %v2771
    %2775 = vmatprep.subr.bf16.mxu0 0
    %2776 = vmatpush1.bf16.xpose.msra.mxu0 0
    %2777 = vmatprep.subr.bf16.mxu0 0
    %2778 = vmatpush1.bf16.xpose.msra.mxu0 0
    %2779 = vmatprep.subr.bf16.mxu0 0
    %2780 = vmatpush1.bf16.xpose.msra.mxu0 0
    %2781 = vmatprep.subr.bf16.mxu0 0
    %2782 = vmatpush1.bf16.xpose.msra.mxu0 0
    %2783 = vmatprep.subr.bf16.mxu0 0
    %2784 = vmatpush1.bf16.xpose.msra.mxu0 0
    %2785 = vmatprep.subr.bf16.mxu0 0
    %2786 = vmatpush1.bf16.xpose.msra.mxu0 0
    %2787 = vmatprep.subr.bf16.mxu0 0
    %2788 = vmatpush1.bf16.xpose.msra.mxu0 0
    %2789 = vmatprep.subr.bf16.mxu0 0
    %2790 = vmatpush1.bf16.xpose.msra.mxu0 0
    %2791 = vmatprep.subr.bf16.mxu0 0
    %2792 = vmatpush1.bf16.xpose.msra.mxu0 0
    %2793 = vmatprep.subr.bf16.mxu0 0
    %2794 = vmatpush1.bf16.xpose.msra.mxu0 0
    %2795 = vmatprep.subr.bf16.mxu0 0
    %2796 = vmatpush1.bf16.xpose.msra.mxu0 0
    %2797 = vmatprep.subr.bf16.mxu0 0
    %2798 = vmatpush1.bf16.xpose.msra.mxu0 0
    %2799 = vmatprep.subr.bf16.mxu0 0
    %2800 = vmatpush1.bf16.xpose.msra.mxu0 0
    %2801 = vmatprep.subr.bf16.mxu0 0
    %2802 = vmatpush1.bf16.xpose.msra.mxu0 0
    %2803 = vmatprep.subr.bf16.mxu0 0
    %2804 = vmatpush1.bf16.xpose.msra.mxu0 0
    %2805 = vmatprep.mubr.bf16.mxu0 0
    %2806 = vmatmul.mubr.bf16.gmra.mrb[0].mxu0 %v2768
    %v2807 = vpop.f32.mrb[0].mxu0
    %v2808 = vadd.f32 0.0, %v2807
    %v2809 = vpop.f32.mrb[0].mxu0
    %v2810 = vpop.f32.mrb[0].mxu0
    %v2811 = vpop.f32.mrb[0].mxu0
    %2812 = vdwg.mxu0
    %v2813 = vmul.f32 %v2808, 0.35355338
    %v2814 = vadd.f32 %v2813, %v890
    %v2815 = vsel %vm196, %v2814, -inf
    %2816 = vmax.xlane.f32.xlu0 %v2815
    %v2817 = vpop.xlane.xlu0 %2816
    %v2818 = vsub.f32 %v2814, %v2817
    %v2819 = vmul.f32 %v2818, 1.442695
    %v2820 = vpow.pop %v2819
    %v2821 = vsel %vm196, %v2820, 0.0
    %2822 = vadd.xlane.f32.xlu0 %v2821
    %v2823 = vpop.xlane.xlu0 %2822
    %v2824 = vrcp.pop %v2823
    %v2825 = vmul.f32 %v2820, %v2824
    %v2826 = vpack.c.bf16 %v2825, %v2825
    %2827 = vrot.lane.b32.xlu0 %v2451, 48
    %v2828 = vpop.permute.xlu0 %2827
    %v2830 = vsel %vm196, %v2826, 0
    %v2833 = vsel %vm266, %v2828, 0
    %2835 = vmatprep.subr.bf16.mxu0 0
    %2836 = vmatpush1.bf16.msra.mxu0 %v2833
    %2837 = vmatprep.subr.bf16.mxu0 0
    %2838 = vmatpush1.bf16.msra.mxu0 0
    %2839 = vmatprep.subr.bf16.mxu0 0
    %2840 = vmatpush1.bf16.msra.mxu0 0
    %2841 = vmatprep.subr.bf16.mxu0 0
    %2842 = vmatpush1.bf16.msra.mxu0 0
    %2843 = vmatprep.subr.bf16.mxu0 0
    %2844 = vmatpush1.bf16.msra.mxu0 0
    %2845 = vmatprep.subr.bf16.mxu0 0
    %2846 = vmatpush1.bf16.msra.mxu0 0
    %2847 = vmatprep.subr.bf16.mxu0 0
    %2848 = vmatpush1.bf16.msra.mxu0 0
    %2849 = vmatprep.subr.bf16.mxu0 0
    %2850 = vmatpush1.bf16.msra.mxu0 0
    %2851 = vmatprep.subr.bf16.mxu0 0
    %2852 = vmatpush1.bf16.msra.mxu0 0
    %2853 = vmatprep.subr.bf16.mxu0 0
    %2854 = vmatpush1.bf16.msra.mxu0 0
    %2855 = vmatprep.subr.bf16.mxu0 0
    %2856 = vmatpush1.bf16.msra.mxu0 0
    %2857 = vmatprep.subr.bf16.mxu0 0
    %2858 = vmatpush1.bf16.msra.mxu0 0
    %2859 = vmatprep.subr.bf16.mxu0 0
    %2860 = vmatpush1.bf16.msra.mxu0 0
    %2861 = vmatprep.subr.bf16.mxu0 0
    %2862 = vmatpush1.bf16.msra.mxu0 0
    %2863 = vmatprep.subr.bf16.mxu0 0
    %2864 = vmatpush1.bf16.msra.mxu0 0
    %2865 = vmatprep.subr.bf16.mxu0 0
    %2866 = vmatpush1.bf16.msra.mxu0 0
    %2867 = vmatprep.mubr.bf16.mxu0 0
    %2868 = vmatmul.mubr.bf16.gmra.mrb[0].mxu0 %v2830
    %v2869 = vpop.f32.mrb[0].mxu0
    %v2870 = vadd.f32 0.0, %v2869
    %v2871 = vpop.f32.mrb[0].mxu0
    %v2872 = vpop.f32.mrb[0].mxu0
    %v2873 = vpop.f32.mrb[0].mxu0
    %2874 = vdwg.mxu0
    %v2875 = vpack.c.bf16 %v2870, %v2870
    %v2877 = vsel %vm196, %v2875, 0
    %2879 = vmatprep.subr.bf16.mxu0 0
    %2880 = vmatpush1.bf16.msra.mxu0 %v2248
    %2881 = vmatprep.subr.bf16.mxu0 0
    %2882 = vmatpush1.bf16.msra.mxu0 0
    %2883 = vmatprep.subr.bf16.mxu0 0
    %2884 = vmatpush1.bf16.msra.mxu0 0
    %2885 = vmatprep.subr.bf16.mxu0 0
    %2886 = vmatpush1.bf16.msra.mxu0 0
    %2887 = vmatprep.subr.bf16.mxu0 0
    %2888 = vmatpush1.bf16.msra.mxu0 0
    %2889 = vmatprep.subr.bf16.mxu0 0
    %2890 = vmatpush1.bf16.msra.mxu0 0
    %2891 = vmatprep.subr.bf16.mxu0 0
    %2892 = vmatpush1.bf16.msra.mxu0 0
    %2893 = vmatprep.subr.bf16.mxu0 0
    %2894 = vmatpush1.bf16.msra.mxu0 0
    %2895 = vmatprep.subr.bf16.mxu0 0
    %2896 = vmatpush1.bf16.msra.mxu0 0
    %2897 = vmatprep.subr.bf16.mxu0 0
    %2898 = vmatpush1.bf16.msra.mxu0 0
    %2899 = vmatprep.subr.bf16.mxu0 0
    %2900 = vmatpush1.bf16.msra.mxu0 0
    %2901 = vmatprep.subr.bf16.mxu0 0
    %2902 = vmatpush1.bf16.msra.mxu0 0
    %2903 = vmatprep.subr.bf16.mxu0 0
    %2904 = vmatpush1.bf16.msra.mxu0 0
    %2905 = vmatprep.subr.bf16.mxu0 0
    %2906 = vmatpush1.bf16.msra.mxu0 0
    %2907 = vmatprep.subr.bf16.mxu0 0
    %2908 = vmatpush1.bf16.msra.mxu0 0
    %2909 = vmatprep.subr.bf16.mxu0 0
    %2910 = vmatpush1.bf16.msra.mxu0 0
    %2911 = vmatprep.mubr.bf16.mxu0 0
    %2912 = vmatmul.mubr.bf16.gmra.mrb[0].mxu0 %v2877
    %v2913 = vpop.f32.mrb[0].mxu0
    %v2914 = vadd.f32 0.0, %v2913
    %v2915 = vpop.f32.mrb[0].mxu0
    %v2916 = vpop.f32.mrb[0].mxu0
    %v2917 = vpop.f32.mrb[0].mxu0
    %2918 = vdwg.mxu0
    %v2919 = vadd.f32 %v2758, %v2914
    %2920 = vrot.lane.b32.xlu0 %v2451, 104
    %v2921 = vpop.permute.xlu0 %2920
    %2922 = vrot.lane.b32.xlu0 %v2451, 72
    %v2923 = vpop.permute.xlu0 %2922
    %v2925 = vsel %vm196, %v2921, 0
    %v2928 = vsel %vm196, %v2923, 0
    %2930 = vmatprep.subr.bf16.mxu0 0
    %2931 = vmatpush1.bf16.xpose.msra.mxu0 %v2928
    %2932 = vmatprep.subr.bf16.mxu0 0
    %2933 = vmatpush1.bf16.xpose.msra.mxu0 0
    %2934 = vmatprep.subr.bf16.mxu0 0
    %2935 = vmatpush1.bf16.xpose.msra.mxu0 0
    %2936 = vmatprep.subr.bf16.mxu0 0
    %2937 = vmatpush1.bf16.xpose.msra.mxu0 0
    %2938 = vmatprep.subr.bf16.mxu0 0
    %2939 = vmatpush1.bf16.xpose.msra.mxu0 0
    %2940 = vmatprep.subr.bf16.mxu0 0
    %2941 = vmatpush1.bf16.xpose.msra.mxu0 0
    %2942 = vmatprep.subr.bf16.mxu0 0
    %2943 = vmatpush1.bf16.xpose.msra.mxu0 0
    %2944 = vmatprep.subr.bf16.mxu0 0
    %2945 = vmatpush1.bf16.xpose.msra.mxu0 0
    %2946 = vmatprep.subr.bf16.mxu0 0
    %2947 = vmatpush1.bf16.xpose.msra.mxu0 0
    %2948 = vmatprep.subr.bf16.mxu0 0
    %2949 = vmatpush1.bf16.xpose.msra.mxu0 0
    %2950 = vmatprep.subr.bf16.mxu0 0
    %2951 = vmatpush1.bf16.xpose.msra.mxu0 0
    %2952 = vmatprep.subr.bf16.mxu0 0
    %2953 = vmatpush1.bf16.xpose.msra.mxu0 0
    %2954 = vmatprep.subr.bf16.mxu0 0
    %2955 = vmatpush1.bf16.xpose.msra.mxu0 0
    %2956 = vmatprep.subr.bf16.mxu0 0
    %2957 = vmatpush1.bf16.xpose.msra.mxu0 0
    %2958 = vmatprep.subr.bf16.mxu0 0
    %2959 = vmatpush1.bf16.xpose.msra.mxu0 0
    %2960 = vmatprep.subr.bf16.mxu0 0
    %2961 = vmatpush1.bf16.xpose.msra.mxu0 0
    %2962 = vmatprep.mubr.bf16.mxu0 0
    %2963 = vmatmul.mubr.bf16.gmra.mrb[0].mxu0 %v2925
    %v2964 = vpop.f32.mrb[0].mxu0
    %v2965 = vadd.f32 0.0, %v2964
    %v2966 = vpop.f32.mrb[0].mxu0
    %v2967 = vpop.f32.mrb[0].mxu0
    %v2968 = vpop.f32.mrb[0].mxu0
    %2969 = vdwg.mxu0
    %v2970 = vmul.f32 %v2965, 0.35355338
    %v2971 = vadd.f32 %v2970, %v890
    %v2972 = vsel %vm196, %v2971, -inf
    %2973 = vmax.xlane.f32.xlu0 %v2972
    %v2974 = vpop.xlane.xlu0 %2973
    %v2975 = vsub.f32 %v2971, %v2974
    %v2976 = vmul.f32 %v2975, 1.442695
    %v2977 = vpow.pop %v2976
    %v2978 = vsel %vm196, %v2977, 0.0
    %2979 = vadd.xlane.f32.xlu0 %v2978
    %v2980 = vpop.xlane.xlu0 %2979
    %v2981 = vrcp.pop %v2980
    %v2982 = vmul.f32 %v2977, %v2981
    %v2983 = vpack.c.bf16 %v2982, %v2982
    %2984 = vrot.lane.b32.xlu0 %v2451, 40
    %v2985 = vpop.permute.xlu0 %2984
    %v2987 = vsel %vm196, %v2983, 0
    %v2990 = vsel %vm266, %v2985, 0
    %2992 = vmatprep.subr.bf16.mxu0 0
    %2993 = vmatpush1.bf16.msra.mxu0 %v2990
    %2994 = vmatprep.subr.bf16.mxu0 0
    %2995 = vmatpush1.bf16.msra.mxu0 0
    %2996 = vmatprep.subr.bf16.mxu0 0
    %2997 = vmatpush1.bf16.msra.mxu0 0
    %2998 = vmatprep.subr.bf16.mxu0 0
    %2999 = vmatpush1.bf16.msra.mxu0 0
    %3000 = vmatprep.subr.bf16.mxu0 0
    %3001 = vmatpush1.bf16.msra.mxu0 0
    %3002 = vmatprep.subr.bf16.mxu0 0
    %3003 = vmatpush1.bf16.msra.mxu0 0
    %3004 = vmatprep.subr.bf16.mxu0 0
    %3005 = vmatpush1.bf16.msra.mxu0 0
    %3006 = vmatprep.subr.bf16.mxu0 0
    %3007 = vmatpush1.bf16.msra.mxu0 0
    %3008 = vmatprep.subr.bf16.mxu0 0
    %3009 = vmatpush1.bf16.msra.mxu0 0
    %3010 = vmatprep.subr.bf16.mxu0 0
    %3011 = vmatpush1.bf16.msra.mxu0 0
    %3012 = vmatprep.subr.bf16.mxu0 0
    %3013 = vmatpush1.bf16.msra.mxu0 0
    %3014 = vmatprep.subr.bf16.mxu0 0
    %3015 = vmatpush1.bf16.msra.mxu0 0
    %3016 = vmatprep.subr.bf16.mxu0 0
    %3017 = vmatpush1.bf16.msra.mxu0 0
    %3018 = vmatprep.subr.bf16.mxu0 0
    %3019 = vmatpush1.bf16.msra.mxu0 0
    %3020 = vmatprep.subr.bf16.mxu0 0
    %3021 = vmatpush1.bf16.msra.mxu0 0
    %3022 = vmatprep.subr.bf16.mxu0 0
    %3023 = vmatpush1.bf16.msra.mxu0 0
    %3024 = vmatprep.mubr.bf16.mxu0 0
    %3025 = vmatmul.mubr.bf16.gmra.mrb[0].mxu0 %v2987
    %v3026 = vpop.f32.mrb[0].mxu0
    %v3027 = vadd.f32 0.0, %v3026
    %v3028 = vpop.f32.mrb[0].mxu0
    %v3029 = vpop.f32.mrb[0].mxu0
    %v3030 = vpop.f32.mrb[0].mxu0
    %3031 = vdwg.mxu0
    %v3032 = vpack.c.bf16 %v3027, %v3027
    %v3034 = vsel %vm196, %v3032, 0
    %3036 = vmatprep.subr.bf16.mxu0 0
    %3037 = vmatpush1.bf16.msra.mxu0 %v2408
    %3038 = vmatprep.subr.bf16.mxu0 0
    %3039 = vmatpush1.bf16.msra.mxu0 0
    %3040 = vmatprep.subr.bf16.mxu0 0
    %3041 = vmatpush1.bf16.msra.mxu0 0
    %3042 = vmatprep.subr.bf16.mxu0 0
    %3043 = vmatpush1.bf16.msra.mxu0 0
    %3044 = vmatprep.subr.bf16.mxu0 0
    %3045 = vmatpush1.bf16.msra.mxu0 0
    %3046 = vmatprep.subr.bf16.mxu0 0
    %3047 = vmatpush1.bf16.msra.mxu0 0
    %3048 = vmatprep.subr.bf16.mxu0 0
    %3049 = vmatpush1.bf16.msra.mxu0 0
    %3050 = vmatprep.subr.bf16.mxu0 0
    %3051 = vmatpush1.bf16.msra.mxu0 0
    %3052 = vmatprep.subr.bf16.mxu0 0
    %3053 = vmatpush1.bf16.msra.mxu0 0
    %3054 = vmatprep.subr.bf16.mxu0 0
    %3055 = vmatpush1.bf16.msra.mxu0 0
    %3056 = vmatprep.subr.bf16.mxu0 0
    %3057 = vmatpush1.bf16.msra.mxu0 0
    %3058 = vmatprep.subr.bf16.mxu0 0
    %3059 = vmatpush1.bf16.msra.mxu0 0
    %3060 = vmatprep.subr.bf16.mxu0 0
    %3061 = vmatpush1.bf16.msra.mxu0 0
    %3062 = vmatprep.subr.bf16.mxu0 0
    %3063 = vmatpush1.bf16.msra.mxu0 0
    %3064 = vmatprep.subr.bf16.mxu0 0
    %3065 = vmatpush1.bf16.msra.mxu0 0
    %3066 = vmatprep.subr.bf16.mxu0 0
    %3067 = vmatpush1.bf16.msra.mxu0 0
    %3068 = vmatprep.mubr.bf16.mxu0 0
    %3069 = vmatmul.mubr.bf16.gmra.mrb[0].mxu0 %v3034
    %v3070 = vpop.f32.mrb[0].mxu0
    %v3071 = vadd.f32 0.0, %v3070
    %v3072 = vpop.f32.mrb[0].mxu0
    %v3073 = vpop.f32.mrb[0].mxu0
    %v3074 = vpop.f32.mrb[0].mxu0
    %3075 = vdwg.mxu0
    %v3076 = vadd.f32 %v2919, %v3071
    %s3077 = scalar_lea.vmem %s8, 1
    %v3078 = vld [vmem:[%s3077] sm:$0x1]
    %v3080 = vlaneseq
    %v3081 = vshrl.u32 %v3080, 7
    %v3082 = vsub.s32 0, %v3081
    %v3083 = vrot.slane %v3078, %v3082
    %v3085 = vadd.f32 %v2450, %v3083
    %v3086 = vadd.f32 %v3076, %v3083
    %v3087 = vadd.f32 %v3085, %v1736
    %v3088 = vadd.f32 %v3086, %v1737
    %s3089 = scalar_lea.vmem %s9, 1
    %v3090 = vld [vmem:[%s3089] sm:$0x1]
    %s3091 = scalar_lea.vmem %s10, 1
    %v3092 = vld [vmem:[%s3091] sm:$0x1]
    %v3093 = vsel %vm75, %v3087, 0.0
    %3094 = vadd.xlane.f32.xlu0 %v3093
    %v3095 = vpop.xlane.xlu0 %3094
    %v3096 = vsel %vm75, %v3088, 0.0
    %3097 = vadd.xlane.f32.xlu0 %v3096
    %v3098 = vpop.xlane.xlu0 %3097
    %v3099 = vmul.f32 %v3095, %v82
    %v3100 = vmul.f32 %v3098, %v82
    %v3101 = vsub.f32 %v3087, %v3099
    %v3102 = vsub.f32 %v3088, %v3100
    %v3103 = vmul.f32 %v3101, %v3101
    %v3104 = vmul.f32 %v3102, %v3102
    %v3105 = vsel %vm75, %v3103, 0.0
    %3106 = vadd.xlane.f32.xlu0 %v3105
    %v3107 = vpop.xlane.xlu0 %3106
    %v3108 = vsel %vm75, %v3104, 0.0
    %3109 = vadd.xlane.f32.xlu0 %v3108
    %v3110 = vpop.xlane.xlu0 %3109
    %v3111 = vmul.f32 %v3107, %v82
    %v3112 = vmul.f32 %v3110, %v82
    %v3113 = vadd.f32 %v3111, 1e-12
    %v3114 = vadd.f32 %v3112, 1e-12
    %v3115 = vrsqrt.pop %v3113
    %v3116 = vrsqrt.pop %v3114
    %v3117 = vmul.f32 %v3101, %v3115
    %v3118 = vmul.f32 %v3102, %v3116
    %v3120 = vlaneseq
    %v3121 = vshrl.u32 %v3120, 7
    %v3122 = vsub.s32 0, %v3121
    %v3123 = vrot.slane %v3090, %v3122
    %v3125 = vmul.f32 %v3117, %v3123
    %v3126 = vmul.f32 %v3118, %v3123
    %v3128 = vlaneseq
    %v3129 = vshrl.u32 %v3128, 7
    %v3130 = vsub.s32 0, %v3129
    %v3131 = vrot.slane %v3092, %v3130
    %v3133 = vadd.f32 %v3125, %v3131
    %v3134 = vadd.f32 %v3126, %v3131
    %s3135 = scalar_lea.vmem %s11, 16
    %v3136 = vld [vmem:[%s3135] sm:$0xf]
    %v3137 = vld [vmem:[%s3135 + $0x4] sm:$0xf]
    %v3138 = vld [vmem:[%s3135 + $0x8] sm:$0xf]
    %v3139 = vld [vmem:[%s3135 + $0xc] sm:$0xf]
    %v3140 = vpack.c.bf16 %v3134, %v3133
    %s3141 = scalar_lea.vmem %s12, 1
    %v3142 = vld [vmem:[%s3141] sm:$0x1]
    %v3144 = vlaneseq
    %v3145 = vshrl.u32 %v3144, 7
    %v3146 = vsub.s32 0, %v3145
    %v3147 = vrot.slane %v3142, %v3146
    %v3153 = vunpack.c.l.b16 %v3136
    %v3154 = vunpack.c.l.b16 %v3137
    %v3155 = vunpack.c.l.b16 %v3138
    %v3156 = vunpack.c.l.b16 %v3139
    %v3157 = vpack.c.b16 %v3154, %v3153
    %v3158 = vpack.c.b16 %v3156, %v3155
    %v3162 = vsel %vm75, %v3140, 0
    %3164 = vmatprep.subr.bf16.mxu0 0
    %3165 = vmatpush1.bf16.msra.mxu0 %v3157
    %3166 = vmatprep.subr.bf16.mxu0 0
    %3167 = vmatpush1.bf16.msra.mxu0 %v3158
    %3168 = vmatprep.subr.bf16.mxu0 0
    %3169 = vmatpush1.bf16.msra.mxu0 0
    %3170 = vmatprep.subr.bf16.mxu0 0
    %3171 = vmatpush1.bf16.msra.mxu0 0
    %3172 = vmatprep.subr.bf16.mxu0 0
    %3173 = vmatpush1.bf16.msra.mxu0 0
    %3174 = vmatprep.subr.bf16.mxu0 0
    %3175 = vmatpush1.bf16.msra.mxu0 0
    %3176 = vmatprep.subr.bf16.mxu0 0
    %3177 = vmatpush1.bf16.msra.mxu0 0
    %3178 = vmatprep.subr.bf16.mxu0 0
    %3179 = vmatpush1.bf16.msra.mxu0 0
    %3180 = vmatprep.subr.bf16.mxu0 0
    %3181 = vmatpush1.bf16.msra.mxu0 0
    %3182 = vmatprep.subr.bf16.mxu0 0
    %3183 = vmatpush1.bf16.msra.mxu0 0
    %3184 = vmatprep.subr.bf16.mxu0 0
    %3185 = vmatpush1.bf16.msra.mxu0 0
    %3186 = vmatprep.subr.bf16.mxu0 0
    %3187 = vmatpush1.bf16.msra.mxu0 0
    %3188 = vmatprep.subr.bf16.mxu0 0
    %3189 = vmatpush1.bf16.msra.mxu0 0
    %3190 = vmatprep.subr.bf16.mxu0 0
    %3191 = vmatpush1.bf16.msra.mxu0 0
    %3192 = vmatprep.subr.bf16.mxu0 0
    %3193 = vmatpush1.bf16.msra.mxu0 0
    %3194 = vmatprep.subr.bf16.mxu0 0
    %3195 = vmatpush1.bf16.msra.mxu0 0
    %3196 = vmatprep.mubr.bf16.mxu0 0
    %3197 = vmatmul.mubr.bf16.gmra.mrb[0].mxu0 %v3162
    %v3198 = vpop.f32.mrb[0].mxu0
    %v3199 = vadd.f32 %v3147, %v3198
    %v3200 = vpop.f32.mrb[0].mxu0
    %v3201 = vpop.f32.mrb[0].mxu0
    %v3202 = vadd.f32 %v3147, %v3201
    %v3203 = vpop.f32.mrb[0].mxu0
    %3204 = vdwg.mxu0
    %v3205 = vmul.f32 %v3199, 0.5
    %v3206 = vmul.f32 %v3202, 0.5
    %v3207 = vmul.f32 %v3199, 0.044715
    %v3208 = vmul.f32 %v3202, 0.044715
    %v3209 = vmul.f32 %v3207, %v3199
    %v3210 = vmul.f32 %v3208, %v3202
    %v3211 = vmul.f32 %v3209, %v3199
    %v3212 = vmul.f32 %v3210, %v3202
    %v3213 = vadd.f32 %v3199, %v3211
    %v3214 = vadd.f32 %v3202, %v3212
    %v3215 = vmul.f32 %v3213, 0.7978846
    %v3216 = vmul.f32 %v3214, 0.7978846
    %v3217 = vtanh.pop %v3215
    %v3218 = vtanh.pop %v3216
    %v3219 = vadd.f32 %v3217, 1.0
    %v3220 = vadd.f32 %v3218, 1.0
    %v3221 = vmul.f32 %v3205, %v3219
    %v3222 = vmul.f32 %v3206, %v3220
    %s3223 = scalar_lea.vmem %s13, 32
    %v3224 = vld [vmem:[%s3223] sm:$0xf]
    %v3225 = vld [vmem:[%s3223 + $0x4] sm:$0xf]
    %v3226 = vld [vmem:[%s3223 + $0x8] sm:$0xf]
    %v3227 = vld [vmem:[%s3223 + $0xc] sm:$0xf]
    %v3228 = vld [vmem:[%s3223 + $0x10] sm:$0xf]
    %v3229 = vld [vmem:[%s3223 + $0x14] sm:$0xf]
    %v3230 = vld [vmem:[%s3223 + $0x18] sm:$0xf]
    %v3231 = vld [vmem:[%s3223 + $0x1c] sm:$0xf]
    %v3232 = vpack.c.bf16 %v3222, %v3221
    %s3233 = scalar_lea.vmem %s14, 1
    %v3234 = vld [vmem:[%s3233] sm:$0x1]
    %v3236 = vlaneseq
    %v3237 = vshrl.u32 %v3236, 7
    %v3238 = vsub.s32 0, %v3237
    %v3239 = vrot.slane %v3234, %v3238
    %v3249 = vunpack.c.l.b16 %v3224
    %v3250 = vunpack.c.l.b16 %v3225
    %v3251 = vunpack.c.l.b16 %v3226
    %v3252 = vunpack.c.l.b16 %v3227
    %v3253 = vunpack.c.l.b16 %v3228
    %v3254 = vunpack.c.l.b16 %v3229
    %v3255 = vunpack.c.l.b16 %v3230
    %v3256 = vunpack.c.l.b16 %v3231
    %v3257 = vpack.c.b16 %v3250, %v3249
    %v3258 = vpack.c.b16 %v3252, %v3251
    %v3259 = vpack.c.b16 %v3254, %v3253
    %v3260 = vpack.c.b16 %v3256, %v3255
    %v3266 = vsel %vm1647, %v3232, 0
    %3268 = vmatprep.subr.bf16.mxu0 0
    %3269 = vmatpush1.bf16.msra.mxu0 %v3257
    %3270 = vmatprep.subr.bf16.mxu0 0
    %3271 = vmatpush1.bf16.msra.mxu0 %v3258
    %3272 = vmatprep.subr.bf16.mxu0 0
    %3273 = vmatpush1.bf16.msra.mxu0 %v3259
    %3274 = vmatprep.subr.bf16.mxu0 0
    %3275 = vmatpush1.bf16.msra.mxu0 %v3260
    %3276 = vmatprep.subr.bf16.mxu0 0
    %3277 = vmatpush1.bf16.msra.mxu0 0
    %3278 = vmatprep.subr.bf16.mxu0 0
    %3279 = vmatpush1.bf16.msra.mxu0 0
    %3280 = vmatprep.subr.bf16.mxu0 0
    %3281 = vmatpush1.bf16.msra.mxu0 0
    %3282 = vmatprep.subr.bf16.mxu0 0
    %3283 = vmatpush1.bf16.msra.mxu0 0
    %3284 = vmatprep.subr.bf16.mxu0 0
    %3285 = vmatpush1.bf16.msra.mxu0 0
    %3286 = vmatprep.subr.bf16.mxu0 0
    %3287 = vmatpush1.bf16.msra.mxu0 0
    %3288 = vmatprep.subr.bf16.mxu0 0
    %3289 = vmatpush1.bf16.msra.mxu0 0
    %3290 = vmatprep.subr.bf16.mxu0 0
    %3291 = vmatpush1.bf16.msra.mxu0 0
    %3292 = vmatprep.subr.bf16.mxu0 0
    %3293 = vmatpush1.bf16.msra.mxu0 0
    %3294 = vmatprep.subr.bf16.mxu0 0
    %3295 = vmatpush1.bf16.msra.mxu0 0
    %3296 = vmatprep.subr.bf16.mxu0 0
    %3297 = vmatpush1.bf16.msra.mxu0 0
    %3298 = vmatprep.subr.bf16.mxu0 0
    %3299 = vmatpush1.bf16.msra.mxu0 0
    %3300 = vmatprep.mubr.bf16.mxu0 0
    %3301 = vmatmul.mubr.bf16.gmra.mrb[0].mxu0 %v3266
    %v3302 = vpop.f32.mrb[0].mxu0
    %v3303 = vadd.f32 %v3239, %v3302
    %v3304 = vpop.f32.mrb[0].mxu0
    %v3305 = vpop.f32.mrb[0].mxu0
    %v3306 = vadd.f32 %v3239, %v3305
    %v3307 = vpop.f32.mrb[0].mxu0
    %3308 = vdwg.mxu0
    %v3309 = vadd.f32 %v3303, %v3133
    %v3310 = vadd.f32 %v3306, %v3134
    %s3311 = scalar_lea.vmem %s15, 1
    %v3312 = vld [vmem:[%s3311] sm:$0x1]
    %s3313 = scalar_lea.vmem %s16, 1
    %v3314 = vld [vmem:[%s3313] sm:$0x1]
    %v3315 = vsel %vm75, %v3309, 0.0
    %3316 = vadd.xlane.f32.xlu0 %v3315
    %v3317 = vpop.xlane.xlu0 %3316
    %v3318 = vsel %vm75, %v3310, 0.0
    %3319 = vadd.xlane.f32.xlu0 %v3318
    %v3320 = vpop.xlane.xlu0 %3319
    %v3321 = vmul.f32 %v3317, %v82
    %v3322 = vmul.f32 %v3320, %v82
    %v3323 = vsub.f32 %v3309, %v3321
    %v3324 = vsub.f32 %v3310, %v3322
    %v3325 = vmul.f32 %v3323, %v3323
    %v3326 = vmul.f32 %v3324, %v3324
    %v3327 = vsel %vm75, %v3325, 0.0
    %3328 = vadd.xlane.f32.xlu0 %v3327
    %v3329 = vpop.xlane.xlu0 %3328
    %v3330 = vsel %vm75, %v3326, 0.0
    %3331 = vadd.xlane.f32.xlu0 %v3330
    %v3332 = vpop.xlane.xlu0 %3331
    %v3333 = vmul.f32 %v3329, %v82
    %v3334 = vmul.f32 %v3332, %v82
    %v3335 = vadd.f32 %v3333, 1e-12
    %v3336 = vadd.f32 %v3334, 1e-12
    %v3337 = vrsqrt.pop %v3335
    %v3338 = vrsqrt.pop %v3336
    %v3339 = vmul.f32 %v3323, %v3337
    %v3340 = vmul.f32 %v3324, %v3338
    %v3342 = vlaneseq
    %v3343 = vshrl.u32 %v3342, 7
    %v3344 = vsub.s32 0, %v3343
    %v3345 = vrot.slane %v3312, %v3344
    %v3347 = vmul.f32 %v3339, %v3345
    %v3348 = vmul.f32 %v3340, %v3345
    %v3350 = vlaneseq
    %v3351 = vshrl.u32 %v3350, 7
    %v3352 = vsub.s32 0, %v3351
    %v3353 = vrot.slane %v3314, %v3352
    %v3355 = vadd.f32 %v3347, %v3353
    %v3356 = vadd.f32 %v3348, %v3353
    %v3358 = vrot.slane %v3356, 7
    %vm3360 = vcmask 1040384
    %v3361 = vsel %vm3360, %v3355, %v3358
    %s3362 = sld [smem:[#allocation2]]
    %p3363 = scmp.eq.s32.totalorder %s3362, 0
    %s3364 = scalar_select %p3363, 1, 0
    %s3365 = scvt.s32.f32 %s3364
    %v3366 = vld [vmem:[%s17] sm:$0xf]
    %v3367 = vld [vmem:[%s17 + $0x4] sm:$0xf]
    %v3368 = vld [vmem:[%s17 + $0x8] sm:$0xf]
    %v3369 = vld [vmem:[%s17 + $0xc] sm:$0xf]
    %v3370 = vunpack.c.l.bf16 %v3366
    %v3371 = vunpack.c.l.bf16 %v3367
    %v3372 = vunpack.c.l.bf16 %v3368
    %v3373 = vunpack.c.l.bf16 %v3369
    %v3374 = vstv %s3365
    %v3375 = vmul.f32 %v3374, %v3370
    %v3376 = vmul.f32 %v3374, %v3371
    %v3377 = vmul.f32 %v3374, %v3372
    %v3378 = vmul.f32 %v3374, %v3373
    %s3379 = ssub.f32 1.0, %s3365
    %s3380 = scalar_lea.vmem %s17, 16
    %v3381 = vld [vmem:[%s3380] sm:$0xf]
    %v3382 = vld [vmem:[%s3380 + $0x4] sm:$0xf]
    %v3383 = vld [vmem:[%s3380 + $0x8] sm:$0xf]
    %v3384 = vld [vmem:[%s3380 + $0xc] sm:$0xf]
    %v3385 = vunpack.c.l.bf16 %v3381
    %v3386 = vunpack.c.l.bf16 %v3382
    %v3387 = vunpack.c.l.bf16 %v3383
    %v3388 = vunpack.c.l.bf16 %v3384
    %v3389 = vstv %s3379
    %v3390 = vmul.f32 %v3389, %v3385
    %v3391 = vmul.f32 %v3389, %v3386
    %v3392 = vmul.f32 %v3389, %v3387
    %v3393 = vmul.f32 %v3389, %v3388
    %v3394 = vadd.f32 %v3375, %v3390
    %v3395 = vadd.f32 %v3376, %v3391
    %v3396 = vadd.f32 %v3377, %v3392
    %v3397 = vadd.f32 %v3378, %v3393
    %v3398 = vld [vmem:[%s18] sm:$0x1]
    %v3399 = vmul.f32 %v3374, %v3398
    %s3400 = scalar_lea.vmem %s18, 1
    %v3401 = vld [vmem:[%s3400] sm:$0x1]
    %v3402 = vmul.f32 %v3389, %v3401
    %v3403 = vadd.f32 %v3399, %v3402
    %v3404 = vld [vmem:[%s19] sm:$0xf]
    %v3405 = vld [vmem:[%s19 + $0x4] sm:$0xf]
    %v3406 = vld [vmem:[%s19 + $0x8] sm:$0xf]
    %v3407 = vld [vmem:[%s19 + $0xc] sm:$0xf]
    %v3408 = vunpack.c.l.bf16 %v3404
    %v3409 = vunpack.c.l.bf16 %v3405
    %v3410 = vunpack.c.l.bf16 %v3406
    %v3411 = vunpack.c.l.bf16 %v3407
    %v3412 = vmul.f32 %v3374, %v3408
    %v3413 = vmul.f32 %v3374, %v3409
    %v3414 = vmul.f32 %v3374, %v3410
    %v3415 = vmul.f32 %v3374, %v3411
    %s3416 = scalar_lea.vmem %s19, 16
    %v3417 = vld [vmem:[%s3416] sm:$0xf]
    %v3418 = vld [vmem:[%s3416 + $0x4] sm:$0xf]
    %v3419 = vld [vmem:[%s3416 + $0x8] sm:$0xf]
    %v3420 = vld [vmem:[%s3416 + $0xc] sm:$0xf]
    %v3421 = vunpack.c.l.bf16 %v3417
    %v3422 = vunpack.c.l.bf16 %v3418
    %v3423 = vunpack.c.l.bf16 %v3419
    %v3424 = vunpack.c.l.bf16 %v3420
    %v3425 = vmul.f32 %v3389, %v3421
    %v3426 = vmul.f32 %v3389, %v3422
    %v3427 = vmul.f32 %v3389, %v3423
    %v3428 = vmul.f32 %v3389, %v3424
    %v3429 = vadd.f32 %v3412, %v3425
    %v3430 = vadd.f32 %v3413, %v3426
    %v3431 = vadd.f32 %v3414, %v3427
    %v3432 = vadd.f32 %v3415, %v3428
    %v3433 = vld [vmem:[%s20] sm:$0x1]
    %v3434 = vmul.f32 %v3374, %v3433
    %s3435 = scalar_lea.vmem %s20, 1
    %v3436 = vld [vmem:[%s3435] sm:$0x1]
    %v3437 = vmul.f32 %v3389, %v3436
    %v3438 = vadd.f32 %v3434, %v3437
    %v3439 = vpack.c.bf16 %v3361, %v3361
    %v3440 = vpack.c.bf16 %v3395, %v3394
    %v3441 = vpack.c.bf16 %v3397, %v3396
    %v3443 = vlaneseq
    %v3444 = vshrl.u32 %v3443, 7
    %v3445 = vsub.s32 0, %v3444
    %v3446 = vrot.slane %v3403, %v3445
    %v3449 = vsel %vm75, %v3439, 0
    %3451 = vmatprep.subr.bf16.mxu0 0
    %3452 = vmatpush1.bf16.msra.mxu0 %v3440
    %3453 = vmatprep.subr.bf16.mxu0 0
    %3454 = vmatpush1.bf16.msra.mxu0 %v3441
    %3455 = vmatprep.subr.bf16.mxu0 0
    %3456 = vmatpush1.bf16.msra.mxu0 0
    %3457 = vmatprep.subr.bf16.mxu0 0
    %3458 = vmatpush1.bf16.msra.mxu0 0
    %3459 = vmatprep.subr.bf16.mxu0 0
    %3460 = vmatpush1.bf16.msra.mxu0 0
    %3461 = vmatprep.subr.bf16.mxu0 0
    %3462 = vmatpush1.bf16.msra.mxu0 0
    %3463 = vmatprep.subr.bf16.mxu0 0
    %3464 = vmatpush1.bf16.msra.mxu0 0
    %3465 = vmatprep.subr.bf16.mxu0 0
    %3466 = vmatpush1.bf16.msra.mxu0 0
    %3467 = vmatprep.subr.bf16.mxu0 0
    %3468 = vmatpush1.bf16.msra.mxu0 0
    %3469 = vmatprep.subr.bf16.mxu0 0
    %3470 = vmatpush1.bf16.msra.mxu0 0
    %3471 = vmatprep.subr.bf16.mxu0 0
    %3472 = vmatpush1.bf16.msra.mxu0 0
    %3473 = vmatprep.subr.bf16.mxu0 0
    %3474 = vmatpush1.bf16.msra.mxu0 0
    %3475 = vmatprep.subr.bf16.mxu0 0
    %3476 = vmatpush1.bf16.msra.mxu0 0
    %3477 = vmatprep.subr.bf16.mxu0 0
    %3478 = vmatpush1.bf16.msra.mxu0 0
    %3479 = vmatprep.subr.bf16.mxu0 0
    %3480 = vmatpush1.bf16.msra.mxu0 0
    %3481 = vmatprep.subr.bf16.mxu0 0
    %3482 = vmatpush1.bf16.msra.mxu0 0
    %3483 = vmatprep.mubr.bf16.mxu0 0
    %3484 = vmatmul.mubr.bf16.gmra.mrb[0].mxu0 %v3449
    %v3485 = vpop.f32.mrb[0].mxu0
    %v3486 = vadd.f32 %v3446, %v3485
    %v3487 = vpop.f32.mrb[0].mxu0
    %v3488 = vpop.f32.mrb[0].mxu0
    %v3489 = vpop.f32.mrb[0].mxu0
    %3490 = vdwg.mxu0
    %v3491 = vmax.f32 %v3486, 0.0
    %v3492 = vpack.c.bf16 %v3491, %v3491
    %v3493 = vpack.c.bf16 %v3430, %v3429
    %v3494 = vpack.c.bf16 %v3432, %v3431
    %v3496 = vlaneseq
    %v3497 = vshrl.u32 %v3496, 7
    %v3498 = vsub.s32 0, %v3497
    %v3499 = vrot.slane %v3438, %v3498
    %v3502 = vsel %vm75, %v3492, 0
    %3504 = vmatprep.subr.bf16.mxu0 0
    %3505 = vmatpush1.bf16.msra.mxu0 %v3493
    %3506 = vmatprep.subr.bf16.mxu0 0
    %3507 = vmatpush1.bf16.msra.mxu0 %v3494
    %3508 = vmatprep.subr.bf16.mxu0 0
    %3509 = vmatpush1.bf16.msra.mxu0 0
    %3510 = vmatprep.subr.bf16.mxu0 0
    %3511 = vmatpush1.bf16.msra.mxu0 0
    %3512 = vmatprep.subr.bf16.mxu0 0
    %3513 = vmatpush1.bf16.msra.mxu0 0
    %3514 = vmatprep.subr.bf16.mxu0 0
    %3515 = vmatpush1.bf16.msra.mxu0 0
    %3516 = vmatprep.subr.bf16.mxu0 0
    %3517 = vmatpush1.bf16.msra.mxu0 0
    %3518 = vmatprep.subr.bf16.mxu0 0
    %3519 = vmatpush1.bf16.msra.mxu0 0
    %3520 = vmatprep.subr.bf16.mxu0 0
    %3521 = vmatpush1.bf16.msra.mxu0 0
    %3522 = vmatprep.subr.bf16.mxu0 0
    %3523 = vmatpush1.bf16.msra.mxu0 0
    %3524 = vmatprep.subr.bf16.mxu0 0
    %3525 = vmatpush1.bf16.msra.mxu0 0
    %3526 = vmatprep.subr.bf16.mxu0 0
    %3527 = vmatpush1.bf16.msra.mxu0 0
    %3528 = vmatprep.subr.bf16.mxu0 0
    %3529 = vmatpush1.bf16.msra.mxu0 0
    %3530 = vmatprep.subr.bf16.mxu0 0
    %3531 = vmatpush1.bf16.msra.mxu0 0
    %3532 = vmatprep.subr.bf16.mxu0 0
    %3533 = vmatpush1.bf16.msra.mxu0 0
    %3534 = vmatprep.subr.bf16.mxu0 0
    %3535 = vmatpush1.bf16.msra.mxu0 0
    %3536 = vmatprep.mubr.bf16.mxu0 0
    %3537 = vmatmul.mubr.bf16.gmra.mrb[0].mxu0 %v3502
    %v3538 = vpop.f32.mrb[0].mxu0
    %v3539 = vadd.f32 %v3499, %v3538
    %v3540 = vpop.f32.mrb[0].mxu0
    %v3541 = vpop.f32.mrb[0].mxu0
    %v3542 = vpop.f32.mrb[0].mxu0
    %3543 = vdwg.mxu0
    %3544 = vst [vmem:[#allocation3] sm:$0x3] %v3539
    // Predicated region
    $region86: #{bert_classifier_forward.1} parent=1 // pred_check
      _
    $region87: #{bert_classifier_forward.1} parent=1 // pred_check_branch
      %3546 = sbr.rel (0) target = $region89
    $region88: #{bert_classifier_forward.1} parent=1 // pred_region
      %s3548 = ssub.s32 32, 32
      %3549 = vsyncadd [#allocation4], %s3548
      %s3551 = sshll.u32 [#allocation3], 4
      %s3552 = int_to_ptr.vmem [resolvable:$true] %s3551
      %3554 = dma.vmem_to_hbm [thread:$0]  %s3552, 32, %s21, [#allocation4]
    $region89: #{bert_classifier_forward.1} parent=1 // pred_fallthru
      _
    // Predicated region
    $region90: #{bert_classifier_forward.1} parent=1 // pred_check
      _
    $region91: #{bert_classifier_forward.1} parent=1 // pred_check_branch
      %3556 = sbr.rel (0) target = $region93
    $region92: #{bert_classifier_forward.1} parent=1 // pred_region
      %3557 = dma.done [#allocation4], 32
    $region93: #{bert_classifier_forward.1} parent=1 // pred_fallthru
      _
    %3558 = vsyncpa [#allocation4], 1

</llo_original>
